<compile_context>
chip_gen: v5e
topology: v5e:2x2
jax: 0.10.0
libtpu: 0.0.40
codegen_flags: <defaults>
</compile_context>

<pallas_src>
import functools

import jax
import jax.numpy as jnp
from jax.experimental import pallas as pl
from jax.experimental.pallas import tpu as pltpu

_EPS = 1e-5
_VMEM_LIMIT = 32 * 1024 * 1024


# ----------------------------------------------------------------------------
# Small helpers
# ----------------------------------------------------------------------------
def _round_up(x, m):
    return ((x + m - 1) // m) * m


def _row_tile(mp, c, itemsize, budget=4 * 1024 * 1024):
    """Largest row tile (multiple of 8, dividing mp) within a VMEM budget."""
    cap = max(8, budget // max(1, c * itemsize))
    for t in (2048, 1024, 512, 256, 128, 64, 32, 16, 8):
        if t <= cap and mp % t == 0:
            return t
    return 8


def _mm_tiles(m, k, np_):
    """Tile sizes for the fused matmul; safe on v5e/v6e/v7x VMEM budgets."""
    tn = 256 if np_ % 256 == 0 else 128
    kp = _round_up(k, 128)
    if kp <= 2048:
        tk = kp
    else:
        tk = 512
        kp = _round_up(kp, 512)
    mr = _round_up(m, 8)
    tm = mr if mr <= 512 else 512
    mp = _round_up(m, tm)
    return tm, tk, tn, mp, kp


# ----------------------------------------------------------------------------
# Pallas kernels
# ----------------------------------------------------------------------------
def _mm_kernel(asc_ref, ash_ref, a_ref, b_ref, bias_ref, o_ref, acc_ref,
               *, in_act, tanh_out):
    """acc += act(A) @ B ; finalize: (+bias [, 0.5*tanh+0.5]) -> out."""
    k = pl.program_id(2)

    @pl.when(k == 0)
    def _init():
        acc_ref[...] = jnp.zeros_like(acc_ref)

    a = a_ref[...]
    if in_act:
        # Previous layer's BatchNorm affine + ReLU, folded into the A load.
        a = jnp.maximum(a.astype(jnp.float32) * asc_ref[...] + ash_ref[...], 0.0)
        a = a.astype(jnp.bfloat16)
    acc_ref[...] += jnp.dot(a, b_ref[...], preferred_element_type=jnp.float32)

    @pl.when(k == pl.num_programs(2) - 1)
    def _done():
        r = acc_ref[...] + bias_ref[...]
        if tanh_out:
            r = 0.5 * jnp.tanh(r) + 0.5
        o_ref[...] = r.astype(o_ref.dtype)


def _bn_stats_kernel(x_ref, s1_ref, s2_ref, a1_ref, a2_ref):
    """One-pass per-channel sum and sum-of-squares (f32 accumulation)."""
    i = pl.program_id(0)

    @pl.when(i == 0)
    def _init():
        a1_ref[...] = jnp.zeros_like(a1_ref)
        a2_ref[...] = jnp.zeros_like(a2_ref)

    x = x_ref[...].astype(jnp.float32)
    a1_ref[...] += jnp.sum(x, axis=0, keepdims=True)
    a2_ref[...] += jnp.sum(x * x, axis=0, keepdims=True)

    @pl.when(i == pl.num_programs(0) - 1)
    def _done():
        s1_ref[...] = a1_ref[...]
        s2_ref[...] = a2_ref[...]


def _affine_relu_kernel(x_ref, sc_ref, sh_ref, o_ref):
    x = x_ref[...].astype(jnp.float32)
    o_ref[...] = jnp.maximum(x * sc_ref[...] + sh_ref[...], 0.0).astype(o_ref.dtype)


# ----------------------------------------------------------------------------
# Pallas wrappers
# ----------------------------------------------------------------------------
def mm_fused(a, b, *, bias=None, scale_k=None, shift_k=None,
             tanh_out=False, out_dtype=jnp.bfloat16):
    """out = epilogue( relu(a*scale_k+shift_k) @ b + bias ), bf16 MXU / f32 acc.

    Returns the padded (Mp, Np) result; the caller slices the real region.
    Padded A rows/cols and B rows/cols are zero (=> zero contribution).
    """
    m, k = a.shape
    k2, nr = b.shape
    assert k == k2
    np_ = _round_up(nr, 128)
    tm, tk, tn, mp, kp = _mm_tiles(m, k, np_)

    a_p = jnp.pad(a.astype(jnp.bfloat16), ((0, mp - m), (0, kp - k)))
    b_p = jnp.pad(b.astype(jnp.bfloat16), ((0, kp - k), (0, np_ - nr)))
    if bias is None:
        bias_p = jnp.zeros((1, np_), jnp.float32)
    else:
        bias_p = jnp.pad(bias.astype(jnp.float32), (0, np_ - nr)).reshape(1, np_)
    in_act = scale_k is not None
    if in_act:
        sc_p = jnp.pad(scale_k.astype(jnp.float32), (0, kp - k),
                       constant_values=1.0).reshape(1, kp)
        sh_p = jnp.pad(shift_k.astype(jnp.float32), (0, kp - k)).reshape(1, kp)
    else:
        sc_p = jnp.ones((1, kp), jnp.float32)
        sh_p = jnp.zeros((1, kp), jnp.float32)

    kernel = functools.partial(_mm_kernel, in_act=in_act, tanh_out=tanh_out)
    return pl.pallas_call(
        kernel,
        out_shape=jax.ShapeDtypeStruct((mp, np_), out_dtype),
        grid_spec=pltpu.PrefetchScalarGridSpec(
            num_scalar_prefetch=0,
            grid=(mp // tm, np_ // tn, kp // tk),
            in_specs=[
                pl.BlockSpec((1, tk), lambda i, j, kk: (0, kk)),    # scale_k
                pl.BlockSpec((1, tk), lambda i, j, kk: (0, kk)),    # shift_k
                pl.BlockSpec((tm, tk), lambda i, j, kk: (i, kk)),   # A
                pl.BlockSpec((tk, tn), lambda i, j, kk: (kk, j)),   # B
                pl.BlockSpec((1, tn), lambda i, j, kk: (0, j)),     # bias
            ],
            out_specs=pl.BlockSpec((tm, tn), lambda i, j, kk: (i, j)),
            scratch_shapes=[pltpu.VMEM((tm, tn), jnp.float32)]),
        compiler_params=pltpu.CompilerParams(
            dimension_semantics=("parallel", "parallel", "arbitrary"),
            vmem_limit_bytes=_VMEM_LIMIT),
    )(sc_p, sh_p, a_p, b_p, bias_p)


def bn_batch_stats(x2d):
    """One-pass per-channel (sum, sum_sq) over rows.  Rows are zero-padded to a
    multiple of 8 (zeros do not change the sums); caller divides by real count."""
    m, c = x2d.shape
    mp = _round_up(m, 8)
    if mp != m:
        x2d = jnp.pad(x2d, ((0, mp - m), (0, 0)))
    tm = _row_tile(mp, c, x2d.dtype.itemsize)
    s1, s2 = pl.pallas_call(
        _bn_stats_kernel,
        out_shape=(jax.ShapeDtypeStruct((1, c), jnp.float32),
                   jax.ShapeDtypeStruct((1, c), jnp.float32)),
        grid_spec=pltpu.PrefetchScalarGridSpec(
            num_scalar_prefetch=0,
            grid=(mp // tm,),
            in_specs=[pl.BlockSpec((tm, c), lambda i: (i, 0))],
            out_specs=[pl.BlockSpec((1, c), lambda i: (0, 0)),
                       pl.BlockSpec((1, c), lambda i: (0, 0))],
            scratch_shapes=[pltpu.VMEM((1, c), jnp.float32),
                            pltpu.VMEM((1, c), jnp.float32)]),
        compiler_params=pltpu.CompilerParams(
            dimension_semantics=("arbitrary",),
            vmem_limit_bytes=_VMEM_LIMIT),
    )(x2d)
    return s1[0], s2[0]


def affine_relu(x_pad, scale, shift):
    """relu(x * scale + shift) per channel, tiled elementwise kernel (bf16 out)."""
    mp, cp = x_pad.shape
    c = scale.shape[0]
    sc = jnp.pad(scale.astype(jnp.float32), (0, cp - c),
                 constant_values=1.0).reshape(1, cp)
    sh = jnp.pad(shift.astype(jnp.float32), (0, cp - c)).reshape(1, cp)
    tc = 128
    for t in (4096, 2048, 1024, 512, 256, 128):
        if cp % t == 0:
            tc = t
            break
    tm = _row_tile(mp, tc, 2)
    return pl.pallas_call(
        _affine_relu_kernel,
        out_shape=jax.ShapeDtypeStruct((mp, cp), jnp.bfloat16),
        grid_spec=pltpu.PrefetchScalarGridSpec(
            num_scalar_prefetch=0,
            grid=(mp // tm, cp // tc),
            in_specs=[pl.BlockSpec((tm, tc), lambda i, j: (i, j)),
                      pl.BlockSpec((1, tc), lambda i, j: (0, j)),
                      pl.BlockSpec((1, tc), lambda i, j: (0, j))],
            out_specs=pl.BlockSpec((tm, tc), lambda i, j: (i, j))),
        compiler_params=pltpu.CompilerParams(
            dimension_semantics=("parallel", "parallel"),
            vmem_limit_bytes=_VMEM_LIMIT),
    )(x_pad, sc, sh)


# ----------------------------------------------------------------------------
# JAX glue: BN finalize, ConvTranspose lowering (scatter/col2im), pixel-shuffle
# ----------------------------------------------------------------------------
def _bn_scale_shift(s1, s2, count, gamma, beta):
    c = gamma.shape[0]
    mean = s1[:c] / count
    var = jnp.maximum(s2[:c] / count - mean * mean, 0.0)
    scale = gamma / jnp.sqrt(var + _EPS)
    shift = beta - mean * scale
    return scale, shift


def _shift2d(s, sy, sx):
    """t[:, i, j] = s[:, i+sy, j+sx], zero outside (s is NHWC)."""
    n, h, w, c = s.shape
    s = jnp.pad(s, ((0, 0), (max(0, -sy), max(0, sy)),
                    (max(0, -sx), max(0, sx)), (0, 0)))
    return s[:, max(0, sy):max(0, sy) + h, max(0, sx):max(0, sx) + w, :]


def _convt_s2_scatter(x, w, act_scale, act_shift):
    """ConvTranspose2d(cin->cout, k=4, stride=2, pad=1), scatter/col2im form.

    x: (N, H, W, cin) raw (pre-BN) bf16 activation; the previous layer's BN
    affine + ReLU (act_scale/act_shift, or identity when None) is folded into
    the matmul's A load.  Returns the raw bias-free NHWC output (N, 2H, 2W, cout).
    """
    n, h, w_sp, cin = x.shape
    cout = w.shape[1]
    m = n * h * w_sp
    # B[ci, (ky*4+kx)*cout + co] = w[ci, co, ky, kx]
    bmat = jnp.transpose(w, (0, 2, 3, 1)).reshape(cin, 16 * cout)
    y = mm_fused(x.reshape(m, cin), bmat, scale_k=act_scale, shift_k=act_shift)
    t = y[:m, :16 * cout].reshape(n, h, w_sp, 4, 4, cout)
    # Overlap-add: each tap product lands in exactly one output pixel.
    phases = []
    for r in (0, 1):
        for c in (0, 1):
            acc = None
            for dy in (0, 1):
                for dx in (0, 1):
                    ky, kx = 3 - 2 * dy - r, 3 - 2 * dx - c
                    term = _shift2d(t[:, :, :, ky, kx, :].astype(jnp.float32),
                                    dy + r - 1, dx + c - 1)
                    acc = term if acc is None else acc + term
            phases.append(acc)
    out = (jnp.stack(phases, axis=0).reshape(2, 2, n, h, w_sp, cout)
           .transpose(2, 3, 0, 4, 1, 5).reshape(n, 2 * h, 2 * w_sp, cout))
    return out.astype(jnp.bfloat16)


def _patches_3x3(x):
    """im2col for the final stride-1 3x3 layer (9 taps): (N*H*W, 9*cin)."""
    n, h, w, cin = x.shape
    xp = jnp.pad(x, ((0, 0), (1, 1), (1, 1), (0, 0)))
    taps = [xp[:, ky:ky + h, kx:kx + w, :] for ky in range(3) for kx in range(3)]
    return jnp.concatenate(taps, axis=-1).reshape(n * h * w, 9 * cin)


def _convt_3x3_weight(w):
    """ConvT(k=3,s=1,p=1) == regular 3x3 conv with flipped kernel: (9*cin, nc)."""
    wf = jnp.flip(w, axis=(2, 3)).transpose(2, 3, 0, 1)  # (3, 3, cin, nc)
    return jnp.concatenate([wf[ky, kx] for ky in range(3) for kx in range(3)],
                           axis=0)


# ----------------------------------------------------------------------------
# Parameters (deterministic init matching the PyTorch reset_parameters)
# ----------------------------------------------------------------------------
def init_params(key, image_size, ngf, nz):
    s_h, s_w, nc = image_size
    s_hb, s_wb = s_h // 8, s_w // 8
    c0 = ngf * 8 * s_hb * s_wb
    ks = jax.random.split(key, 5)

    def nrm(k, shape):
        return 0.02 * jax.random.normal(k, shape, jnp.float32)

    return {
        "lin_w": nrm(ks[0], (c0, nz)),                 # PyTorch Linear (out, in)
        "lin_b": jnp.zeros((c0,), jnp.float32),        # cancelled by norm_init BN
        "bn0_g": jnp.ones((c0,), jnp.float32),
        "bn0_b": jnp.zeros((c0,), jnp.float32),
        "ct1_w": nrm(ks[1], (ngf * 8, ngf * 4, 4, 4)),
        "ct1_b": jnp.zeros((ngf * 4,), jnp.float32),   # cancelled by BN1
        "bn1_g": jnp.ones((ngf * 4,), jnp.float32),
        "bn1_b": jnp.zeros((ngf * 4,), jnp.float32),
        "ct2_w": nrm(ks[2], (ngf * 4, ngf * 2, 4, 4)),
        "ct2_b": jnp.zeros((ngf * 2,), jnp.float32),   # cancelled by BN2
        "bn2_g": jnp.ones((ngf * 2,), jnp.float32),
        "bn2_b": jnp.zeros((ngf * 2,), jnp.float32),
        "ct3_w": nrm(ks[3], (ngf * 2, ngf, 4, 4)),
        "ct3_b": jnp.zeros((ngf,), jnp.float32),       # cancelled by BN3
        "bn3_g": jnp.ones((ngf,), jnp.float32),
        "bn3_b": jnp.zeros((ngf,), jnp.float32),
        "ct4_w": nrm(ks[4], (ngf, nc, 3, 3)),
        "ct4_b": jnp.zeros((nc,), jnp.float32),
    }


# ----------------------------------------------------------------------------
# Forward pass
# ----------------------------------------------------------------------------
@functools.partial(jax.jit, static_argnums=(2, 3))
def g_sndcgan_forward(params, z, image_size, ngf):
    s_h, s_w, nc = image_size
    s_hb, s_wb = s_h // 8, s_w // 8
    n = z.shape[0]
    c0 = ngf * 8 * s_hb * s_wb

    # Linear (nz -> ngf*8*s_hb*s_wb).  Bias omitted: it cancels exactly inside
    # the training-mode BatchNorm that follows (and is zero-initialised).
    y0 = mm_fused(z, jnp.transpose(params["lin_w"]))          # (Mp, C0p) bf16
    s1, s2 = bn_batch_stats(y0)                               # padded rows are 0
    sc0, sh0 = _bn_scale_shift(s1, s2, n, params["bn0_g"], params["bn0_b"])

    # norm_init (BatchNorm2d over the batch, per flattened channel) + ReLU.
    h = affine_relu(y0, sc0, sh0)[:n, :c0]                    # (n, c0) bf16
    x = h.reshape(n, ngf * 8, s_hb, s_wb).transpose(0, 2, 3, 1)  # NHWC

    # Blocks 1..3: ConvT(4, 2, 1) + BatchNorm + ReLU.  The BN affine + ReLU of
    # block i is folded into block i+1's matmul A-load (conv biases cancel).
    act_scale = None     # None => x is already activated (block 1 input)
    act_shift = None
    for wname, bnname in (("ct1", "bn1"), ("ct2", "bn2"), ("ct3", "bn3")):
        x = _convt_s2_scatter(x, params[wname + "_w"], act_scale, act_shift)
        cout = x.shape[-1]
        s1, s2 = bn_batch_stats(x.reshape(-1, cout))
        act_scale, act_shift = _bn_scale_shift(
            s1, s2, x.shape[0] * x.shape[1] * x.shape[2],
            params[bnname + "_g"], params[bnname + "_b"])

    # Block 4: ConvT(ngf -> nc, 3, 1, 1); BN3/ReLU folded into the A load,
    # bias + 0.5*tanh(.)+0.5 fused into the matmul finalize.
    nb, hh, ww, _ = x.shape
    m = nb * hh * ww
    a = _patches_3x3(x)
    bmat = _convt_3x3_weight(params["ct4_w"])
    y = mm_fused(a, bmat, bias=params["ct4_b"],
                 scale_k=jnp.tile(act_scale, 9), shift_k=jnp.tile(act_shift, 9),
                 tanh_out=True, out_dtype=jnp.float32)
    out = y[:m, :nc].reshape(nb, hh, ww, nc).transpose(0, 3, 1, 2)  # -> NCHW
    return out


# ----------------------------------------------------------------------------
if __name__ == "__main__":
    image_size = (16, 16, 3)   # (s_h, s_w, nc)
    ngf = 8
    nz = 16
    batch = 2

    key = jax.random.PRNGKey(0)
    k_params, k_z = jax.random.split(key)
    params = init_params(k_params, image_size, ngf, nz)
    z = jax.random.normal(k_z, (batch, nz), jnp.float32)

    out = g_sndcgan_forward(params, z, image_size, ngf)
    out = jax.block_until_ready(out)

    assert out.shape == (batch, image_size[2], image_size[0], image_size[1]), out.shape
    assert bool(jnp.all(jnp.isfinite(out)))
    print("KERNEL_OK")
</pallas_src>

<mosaic_0001>
module attributes {stable_mosaic.version = 11 : i64} {
  func.func @_mm_kernel(%arg0: i32, %arg1: i32, %arg2: i32, %arg3: memref<1x128xf32, #tpu.memory_space<vmem>>, %arg4: memref<1x128xf32, #tpu.memory_space<vmem>>, %arg5: memref<8x128xbf16, #tpu.memory_space<vmem>>, %arg6: memref<128x256xbf16, #tpu.memory_space<vmem>>, %arg7: memref<1x256xf32, #tpu.memory_space<vmem>>, %arg8: memref<8x256xbf16, #tpu.memory_space<vmem>>, %arg9: memref<8x256xf32, #tpu.memory_space<vmem>>) attributes {dimension_semantics = [#tpu.dimension_semantics<parallel>, #tpu.dimension_semantics<parallel>, #tpu.dimension_semantics<arbitrary>], iteration_bounds = array<i64: 1, 1, 1>, scalar_prefetch = 0 : i64, scratch_operands = 1 : i64, tpu.core_type = #tpu.core_type<tc>, window_params = [{transform_indices = @transform_0, window_bounds = array<i64: 1, 128>}, {transform_indices = @transform_1, window_bounds = array<i64: 1, 128>}, {transform_indices = @transform_2, window_bounds = array<i64: 8, 128>}, {transform_indices = @transform_3, window_bounds = array<i64: 128, 256>}, {transform_indices = @transform_4, window_bounds = array<i64: 1, 256>}, {transform_indices = @transform_5, window_bounds = array<i64: 8, 256>}]} {
    %c0_i32 = arith.constant 0 : i32
    %0 = arith.cmpi eq, %arg2, %c0_i32 : i32
    %1 = arith.extui %0 : i1 to i32
    %c0_i32_0 = arith.constant 0 : i32
    %2 = arith.cmpi ne, %1, %c0_i32_0 : i32
    scf.if %2 {
      %cst_10 = arith.constant 0.000000e+00 : f32
      %12 = vector.broadcast %cst_10 : f32 to vector<8x256xf32>
      %c0_11 = arith.constant 0 : index
      %c0_12 = arith.constant 0 : index
      %13 = vector.load %arg9[%c0_11, %c0_12] : memref<8x256xf32, #tpu.memory_space<vmem>>, vector<8x256xf32>
      tpu.vector_store %arg9[%c0_11, %c0_12], %12 {strides = array<i32>} : memref<8x256xf32, #tpu.memory_space<vmem>>, vector<8x256xf32>,
    } else {
    }
    %c0 = arith.constant 0 : index
    %c0_1 = arith.constant 0 : index
    %3 = vector.load %arg5[%c0, %c0_1] : memref<8x128xbf16, #tpu.memory_space<vmem>>, vector<8x128xbf16>
    %c0_2 = arith.constant 0 : index
    %c0_3 = arith.constant 0 : index
    %4 = vector.load %arg9[%c0_2, %c0_3] : memref<8x256xf32, #tpu.memory_space<vmem>>, vector<8x256xf32>
    %c0_4 = arith.constant 0 : index
    %c0_5 = arith.constant 0 : index
    %5 = vector.load %arg6[%c0_4, %c0_5] : memref<128x256xbf16, #tpu.memory_space<vmem>>, vector<128x256xbf16>
    %cst = arith.constant dense<0.000000e+00> : vector<8x256xf32>
    %6 = tpu.matmul %3, %5, %cst {dimension_numbers = #tpu.dot_dimension_numbers<[1], [0], [0], [1], [0, 0, 1, 1], [], []>} : vector<8x128xbf16>, vector<128x256xbf16>, vector<8x256xf32> -> vector<8x256xf32>
    %7 = arith.addf %4, %6 : vector<8x256xf32>
    %c0_6 = arith.constant 0 : index
    %c0_7 = arith.constant 0 : index
    %8 = vector.load %arg9[%c0_6, %c0_7] : memref<8x256xf32, #tpu.memory_space<vmem>>, vector<8x256xf32>
    tpu.vector_store %arg9[%c0_6, %c0_7], %7 {strides = array<i32>} : memref<8x256xf32, #tpu.memory_space<vmem>>, vector<8x256xf32>,
    %c0_i32_8 = arith.constant 0 : i32
    %9 = arith.cmpi eq, %arg2, %c0_i32_8 : i32
    %10 = arith.extui %9 : i1 to i32
    %c0_i32_9 = arith.constant 0 : i32
    %11 = arith.cmpi ne, %10, %c0_i32_9 : i32
    scf.if %11 {
      %c0_10 = arith.constant 0 : index
      %c0_11 = arith.constant 0 : index
      %12 = vector.load %arg9[%c0_10, %c0_11] : memref<8x256xf32, #tpu.memory_space<vmem>>, vector<8x256xf32>
      %c0_12 = arith.constant 0 : index
      %c0_13 = arith.constant 0 : index
      %13 = vector.load %arg7[%c0_12, %c0_13] : memref<1x256xf32, #tpu.memory_space<vmem>>, vector<1x256xf32>
      %14 = vector.broadcast %13 : vector<1x256xf32> to vector<8x256xf32>
      %15 = arith.addf %12, %14 : vector<8x256xf32>
      %16 = arith.truncf %15 : vector<8x256xf32> to vector<8x256xbf16>
      %c0_14 = arith.constant 0 : index
      %c0_15 = arith.constant 0 : index
      %17 = vector.load %arg8[%c0_14, %c0_15] : memref<8x256xbf16, #tpu.memory_space<vmem>>, vector<8x256xbf16>
      tpu.vector_store %arg8[%c0_14, %c0_15], %16 {strides = array<i32>} : memref<8x256xbf16, #tpu.memory_space<vmem>>, vector<8x256xbf16>,
    } else {
    }
    return
  }
  func.func @transform_0(%arg0: i32, %arg1: i32, %arg2: i32) -> (i32, i32) {
    %c0_i32 = arith.constant 0 : i32
    %c0_i32_0 = arith.constant 0 : i32
    return %c0_i32, %arg2 : i32, i32
  }
  func.func @transform_1(%arg0: i32, %arg1: i32, %arg2: i32) -> (i32, i32) {
    %c0_i32 = arith.constant 0 : i32
    %c0_i32_0 = arith.constant 0 : i32
    return %c0_i32, %arg2 : i32, i32
  }
  func.func @transform_2(%arg0: i32, %arg1: i32, %arg2: i32) -> (i32, i32) {
    %c0_i32 = arith.constant 0 : i32
    return %arg0, %arg2 : i32, i32
  }
  func.func @transform_3(%arg0: i32, %arg1: i32, %arg2: i32) -> (i32, i32) {
    %c0_i32 = arith.constant 0 : i32
    return %arg2, %arg1 : i32, i32
  }
  func.func @transform_4(%arg0: i32, %arg1: i32, %arg2: i32) -> (i32, i32) {
    %c0_i32 = arith.constant 0 : i32
    %c0_i32_0 = arith.constant 0 : i32
    return %c0_i32, %arg1 : i32, i32
  }
  func.func @transform_5(%arg0: i32, %arg1: i32, %arg2: i32) -> (i32, i32) {
    %c0_i32 = arith.constant 0 : i32
    return %arg0, %arg1 : i32, i32
  }
}

module attributes {stable_mosaic.version = 11 : i64} {
  func.func @_bn_stats_kernel(%arg0: i32, %arg1: memref<8x256xbf16, #tpu.memory_space<vmem>>, %arg2: memref<1x256xf32, #tpu.memory_space<vmem>>, %arg3: memref<1x256xf32, #tpu.memory_space<vmem>>, %arg4: memref<1x256xf32, #tpu.memory_space<vmem>>, %arg5: memref<1x256xf32, #tpu.memory_space<vmem>>) attributes {dimension_semantics = [#tpu.dimension_semantics<arbitrary>], iteration_bounds = array<i64: 1>, scalar_prefetch = 0 : i64, scratch_operands = 2 : i64, tpu.core_type = #tpu.core_type<tc>, window_params = [{transform_indices = @transform_0, window_bounds = array<i64: 8, 256>}, {pipeline_mode = #tpu.pipeline_mode<synchronous>, transform_indices = @transform_1, window_bounds = array<i64: 1, 256>}, {pipeline_mode = #tpu.pipeline_mode<synchronous>, transform_indices = @transform_2, window_bounds = array<i64: 1, 256>}]} {
    %c0_i32 = arith.constant 0 : i32
    %0 = arith.cmpi eq, %arg0, %c0_i32 : i32
    %1 = arith.extui %0 : i1 to i32
    %c0_i32_0 = arith.constant 0 : i32
    %2 = arith.cmpi ne, %1, %c0_i32_0 : i32
    scf.if %2 {
      %cst_13 = arith.constant 0.000000e+00 : f32
      %19 = vector.broadcast %cst_13 : f32 to vector<1x256xf32>
      %c0_14 = arith.constant 0 : index
      %c0_15 = arith.constant 0 : index
      %20 = vector.load %arg4[%c0_14, %c0_15] : memref<1x256xf32, #tpu.memory_space<vmem>>, vector<1x256xf32>
      tpu.vector_store %arg4[%c0_14, %c0_15], %19 {strides = array<i32>} : memref<1x256xf32, #tpu.memory_space<vmem>>, vector<1x256xf32>,
      %cst_16 = arith.constant 0.000000e+00 : f32
      %21 = vector.broadcast %cst_16 : f32 to vector<1x256xf32>
      %c0_17 = arith.constant 0 : index
      %c0_18 = arith.constant 0 : index
      %22 = vector.load %arg5[%c0_17, %c0_18] : memref<1x256xf32, #tpu.memory_space<vmem>>, vector<1x256xf32>
      tpu.vector_store %arg5[%c0_17, %c0_18], %21 {strides = array<i32>} : memref<1x256xf32, #tpu.memory_space<vmem>>, vector<1x256xf32>,
    } else {
    }
    %c0 = arith.constant 0 : index
    %c0_1 = arith.constant 0 : index
    %3 = vector.load %arg1[%c0, %c0_1] : memref<8x256xbf16, #tpu.memory_space<vmem>>, vector<8x256xbf16>
    %4 = arith.extf %3 : vector<8x256xbf16> to vector<8x256xf32>
    %c0_2 = arith.constant 0 : index
    %c0_3 = arith.constant 0 : index
    %5 = vector.load %arg4[%c0_2, %c0_3] : memref<1x256xf32, #tpu.memory_space<vmem>>, vector<1x256xf32>
    %cst = arith.constant dense<0.000000e+00> : vector<256xf32>
    %6 = vector.multi_reduction <add>, %4, %cst [0] : vector<8x256xf32> to vector<256xf32>
    %7 = vector.shape_cast %6 : vector<256xf32> to vector<1x256xf32>
    %8 = arith.addf %5, %7 : vector<1x256xf32>
    %c0_4 = arith.constant 0 : index
    %c0_5 = arith.constant 0 : index
    %9 = vector.load %arg4[%c0_4, %c0_5] : memref<1x256xf32, #tpu.memory_space<vmem>>, vector<1x256xf32>
    tpu.vector_store %arg4[%c0_4, %c0_5], %8 {strides = array<i32>} : memref<1x256xf32, #tpu.memory_space<vmem>>, vector<1x256xf32>,
    %c0_6 = arith.constant 0 : index
    %c0_7 = arith.constant 0 : index
    %10 = vector.load %arg5[%c0_6, %c0_7] : memref<1x256xf32, #tpu.memory_space<vmem>>, vector<1x256xf32>
    %11 = arith.mulf %4, %4 : vector<8x256xf32>
    %cst_8 = arith.constant dense<0.000000e+00> : vector<256xf32>
    %12 = vector.multi_reduction <add>, %11, %cst_8 [0] : vector<8x256xf32> to vector<256xf32>
    %13 = vector.shape_cast %12 : vector<256xf32> to vector<1x256xf32>
    %14 = arith.addf %10, %13 : vector<1x256xf32>
    %c0_9 = arith.constant 0 : index
    %c0_10 = arith.constant 0 : index
    %15 = vector.load %arg5[%c0_9, %c0_10] : memref<1x256xf32, #tpu.memory_space<vmem>>, vector<1x256xf32>
    tpu.vector_store %arg5[%c0_9, %c0_10], %14 {strides = array<i32>} : memref<1x256xf32, #tpu.memory_space<vmem>>, vector<1x256xf32>,
    %c0_i32_11 = arith.constant 0 : i32
    %16 = arith.cmpi eq, %arg0, %c0_i32_11 : i32
    %17 = arith.extui %16 : i1 to i32
    %c0_i32_12 = arith.constant 0 : i32
    %18 = arith.cmpi ne, %17, %c0_i32_12 : i32
    scf.if %18 {
      %c0_13 = arith.constant 0 : index
      %c0_14 = arith.constant 0 : index
      %19 = vector.load %arg4[%c0_13, %c0_14] : memref<1x256xf32, #tpu.memory_space<vmem>>, vector<1x256xf32>
      %c0_15 = arith.constant 0 : index
      %c0_16 = arith.constant 0 : index
      %20 = vector.load %arg2[%c0_15, %c0_16] : memref<1x256xf32, #tpu.memory_space<vmem>>, vector<1x256xf32>
      tpu.vector_store %arg2[%c0_15, %c0_16], %19 {strides = array<i32>} : memref<1x256xf32, #tpu.memory_space<vmem>>, vector<1x256xf32>,
      %c0_17 = arith.constant 0 : index
      %c0_18 = arith.constant 0 : index
      %21 = vector.load %arg5[%c0_17, %c0_18] : memref<1x256xf32, #tpu.memory_space<vmem>>, vector<1x256xf32>
      %c0_19 = arith.constant 0 : index
      %c0_20 = arith.constant 0 : index
      %22 = vector.load %arg3[%c0_19, %c0_20] : memref<1x256xf32, #tpu.memory_space<vmem>>, vector<1x256xf32>
      tpu.vector_store %arg3[%c0_19, %c0_20], %21 {strides = array<i32>} : memref<1x256xf32, #tpu.memory_space<vmem>>, vector<1x256xf32>,
    } else {
    }
    return
  }
  func.func @transform_0(%arg0: i32) -> (i32, i32) {
    %c0_i32 = arith.constant 0 : i32
    %c0_i32_0 = arith.constant 0 : i32
    return %arg0, %c0_i32 : i32, i32
  }
  func.func @transform_1(%arg0: i32) -> (i32, i32) {
    %c0_i32 = arith.constant 0 : i32
    %c0_i32_0 = arith.constant 0 : i32
    %c0_i32_1 = arith.constant 0 : i32
    return %c0_i32, %c0_i32_0 : i32, i32
  }
  func.func @transform_2(%arg0: i32) -> (i32, i32) {
    %c0_i32 = arith.constant 0 : i32
    %c0_i32_0 = arith.constant 0 : i32
    %c0_i32_1 = arith.constant 0 : i32
    return %c0_i32, %c0_i32_0 : i32, i32
  }
}

module attributes {stable_mosaic.version = 11 : i64} {
  func.func @_affine_relu_kernel(%arg0: i32, %arg1: i32, %arg2: memref<8x256xbf16, #tpu.memory_space<vmem>>, %arg3: memref<1x256xf32, #tpu.memory_space<vmem>>, %arg4: memref<1x256xf32, #tpu.memory_space<vmem>>, %arg5: memref<8x256xbf16, #tpu.memory_space<vmem>>) attributes {dimension_semantics = [#tpu.dimension_semantics<parallel>, #tpu.dimension_semantics<parallel>], iteration_bounds = array<i64: 1, 1>, scalar_prefetch = 0 : i64, scratch_operands = 0 : i64, tpu.core_type = #tpu.core_type<tc>, window_params = [{transform_indices = @transform_0, window_bounds = array<i64: 8, 256>}, {transform_indices = @transform_1, window_bounds = array<i64: 1, 256>}, {transform_indices = @transform_2, window_bounds = array<i64: 1, 256>}, {transform_indices = @transform_3, window_bounds = array<i64: 8, 256>}]} {
    %c0 = arith.constant 0 : index
    %c0_0 = arith.constant 0 : index
    %0 = vector.load %arg2[%c0, %c0_0] : memref<8x256xbf16, #tpu.memory_space<vmem>>, vector<8x256xbf16>
    %1 = arith.extf %0 : vector<8x256xbf16> to vector<8x256xf32>
    %c0_1 = arith.constant 0 : index
    %c0_2 = arith.constant 0 : index
    %2 = vector.load %arg3[%c0_1, %c0_2] : memref<1x256xf32, #tpu.memory_space<vmem>>, vector<1x256xf32>
    %3 = vector.broadcast %2 : vector<1x256xf32> to vector<8x256xf32>
    %4 = arith.mulf %1, %3 : vector<8x256xf32>
    %c0_3 = arith.constant 0 : index
    %c0_4 = arith.constant 0 : index
    %5 = vector.load %arg4[%c0_3, %c0_4] : memref<1x256xf32, #tpu.memory_space<vmem>>, vector<1x256xf32>
    %6 = vector.broadcast %5 : vector<1x256xf32> to vector<8x256xf32>
    %7 = arith.addf %4, %6 : vector<8x256xf32>
    %cst = arith.constant 0.000000e+00 : f32
    %8 = vector.broadcast %cst : f32 to vector<8x256xf32>
    %9 = arith.maximumf %7, %8 : vector<8x256xf32>
    %10 = arith.truncf %9 : vector<8x256xf32> to vector<8x256xbf16>
    %c0_5 = arith.constant 0 : index
    %c0_6 = arith.constant 0 : index
    %11 = vector.load %arg5[%c0_5, %c0_6] : memref<8x256xbf16, #tpu.memory_space<vmem>>, vector<8x256xbf16>
    tpu.vector_store %arg5[%c0_5, %c0_6], %10 {strides = array<i32>} : memref<8x256xbf16, #tpu.memory_space<vmem>>, vector<8x256xbf16>,
    return
  }
  func.func @transform_0(%arg0: i32, %arg1: i32) -> (i32, i32) {
    %c0_i32 = arith.constant 0 : i32
    return %arg0, %arg1 : i32, i32
  }
  func.func @transform_1(%arg0: i32, %arg1: i32) -> (i32, i32) {
    %c0_i32 = arith.constant 0 : i32
    %c0_i32_0 = arith.constant 0 : i32
    return %c0_i32, %arg1 : i32, i32
  }
  func.func @transform_2(%arg0: i32, %arg1: i32) -> (i32, i32) {
    %c0_i32 = arith.constant 0 : i32
    %c0_i32_0 = arith.constant 0 : i32
    return %c0_i32, %arg1 : i32, i32
  }
  func.func @transform_3(%arg0: i32, %arg1: i32) -> (i32, i32) {
    %c0_i32 = arith.constant 0 : i32
    return %arg0, %arg1 : i32, i32
  }
}

module attributes {stable_mosaic.version = 11 : i64} {
  func.func @_mm_kernel(%arg0: i32, %arg1: i32, %arg2: i32, %arg3: memref<1x128xf32, #tpu.memory_space<vmem>>, %arg4: memref<1x128xf32, #tpu.memory_space<vmem>>, %arg5: memref<8x128xbf16, #tpu.memory_space<vmem>>, %arg6: memref<128x256xbf16, #tpu.memory_space<vmem>>, %arg7: memref<1x256xf32, #tpu.memory_space<vmem>>, %arg8: memref<8x256xbf16, #tpu.memory_space<vmem>>, %arg9: memref<8x256xf32, #tpu.memory_space<vmem>>) attributes {dimension_semantics = [#tpu.dimension_semantics<parallel>, #tpu.dimension_semantics<parallel>, #tpu.dimension_semantics<arbitrary>], iteration_bounds = array<i64: 1, 2, 1>, scalar_prefetch = 0 : i64, scratch_operands = 1 : i64, tpu.core_type = #tpu.core_type<tc>, window_params = [{transform_indices = @transform_0, window_bounds = array<i64: 1, 128>}, {transform_indices = @transform_1, window_bounds = array<i64: 1, 128>}, {transform_indices = @transform_2, window_bounds = array<i64: 8, 128>}, {transform_indices = @transform_3, window_bounds = array<i64: 128, 256>}, {transform_indices = @transform_4, window_bounds = array<i64: 1, 256>}, {transform_indices = @transform_5, window_bounds = array<i64: 8, 256>}]} {
    %c0_i32 = arith.constant 0 : i32
    %0 = arith.cmpi eq, %arg2, %c0_i32 : i32
    %1 = arith.extui %0 : i1 to i32
    %c0_i32_0 = arith.constant 0 : i32
    %2 = arith.cmpi ne, %1, %c0_i32_0 : i32
    scf.if %2 {
      %cst_10 = arith.constant 0.000000e+00 : f32
      %12 = vector.broadcast %cst_10 : f32 to vector<8x256xf32>
      %c0_11 = arith.constant 0 : index
      %c0_12 = arith.constant 0 : index
      %13 = vector.load %arg9[%c0_11, %c0_12] : memref<8x256xf32, #tpu.memory_space<vmem>>, vector<8x256xf32>
      tpu.vector_store %arg9[%c0_11, %c0_12], %12 {strides = array<i32>} : memref<8x256xf32, #tpu.memory_space<vmem>>, vector<8x256xf32>,
    } else {
    }
    %c0 = arith.constant 0 : index
    %c0_1 = arith.constant 0 : index
    %3 = vector.load %arg5[%c0, %c0_1] : memref<8x128xbf16, #tpu.memory_space<vmem>>, vector<8x128xbf16>
    %c0_2 = arith.constant 0 : index
    %c0_3 = arith.constant 0 : index
    %4 = vector.load %arg9[%c0_2, %c0_3] : memref<8x256xf32, #tpu.memory_space<vmem>>, vector<8x256xf32>
    %c0_4 = arith.constant 0 : index
    %c0_5 = arith.constant 0 : index
    %5 = vector.load %arg6[%c0_4, %c0_5] : memref<128x256xbf16, #tpu.memory_space<vmem>>, vector<128x256xbf16>
    %cst = arith.constant dense<0.000000e+00> : vector<8x256xf32>
    %6 = tpu.matmul %3, %5, %cst {dimension_numbers = #tpu.dot_dimension_numbers<[1], [0], [0], [1], [0, 0, 1, 1], [], []>} : vector<8x128xbf16>, vector<128x256xbf16>, vector<8x256xf32> -> vector<8x256xf32>
    %7 = arith.addf %4, %6 : vector<8x256xf32>
    %c0_6 = arith.constant 0 : index
    %c0_7 = arith.constant 0 : index
    %8 = vector.load %arg9[%c0_6, %c0_7] : memref<8x256xf32, #tpu.memory_space<vmem>>, vector<8x256xf32>
    tpu.vector_store %arg9[%c0_6, %c0_7], %7 {strides = array<i32>} : memref<8x256xf32, #tpu.memory_space<vmem>>, vector<8x256xf32>,
    %c0_i32_8 = arith.constant 0 : i32
    %9 = arith.cmpi eq, %arg2, %c0_i32_8 : i32
    %10 = arith.extui %9 : i1 to i32
    %c0_i32_9 = arith.constant 0 : i32
    %11 = arith.cmpi ne, %10, %c0_i32_9 : i32
    scf.if %11 {
      %c0_10 = arith.constant 0 : index
      %c0_11 = arith.constant 0 : index
      %12 = vector.load %arg9[%c0_10, %c0_11] : memref<8x256xf32, #tpu.memory_space<vmem>>, vector<8x256xf32>
      %c0_12 = arith.constant 0 : index
      %c0_13 = arith.constant 0 : index
      %13 = vector.load %arg7[%c0_12, %c0_13] : memref<1x256xf32, #tpu.memory_space<vmem>>, vector<1x256xf32>
      %14 = vector.broadcast %13 : vector<1x256xf32> to vector<8x256xf32>
      %15 = arith.addf %12, %14 : vector<8x256xf32>
      %16 = arith.truncf %15 : vector<8x256xf32> to vector<8x256xbf16>
      %c0_14 = arith.constant 0 : index
      %c0_15 = arith.constant 0 : index
      %17 = vector.load %arg8[%c0_14, %c0_15] : memref<8x256xbf16, #tpu.memory_space<vmem>>, vector<8x256xbf16>
      tpu.vector_store %arg8[%c0_14, %c0_15], %16 {strides = array<i32>} : memref<8x256xbf16, #tpu.memory_space<vmem>>, vector<8x256xbf16>,
    } else {
    }
    return
  }
  func.func @transform_0(%arg0: i32, %arg1: i32, %arg2: i32) -> (i32, i32) {
    %c0_i32 = arith.constant 0 : i32
    %c0_i32_0 = arith.constant 0 : i32
    return %c0_i32, %arg2 : i32, i32
  }
  func.func @transform_1(%arg0: i32, %arg1: i32, %arg2: i32) -> (i32, i32) {
    %c0_i32 = arith.constant 0 : i32
    %c0_i32_0 = arith.constant 0 : i32
    return %c0_i32, %arg2 : i32, i32
  }
  func.func @transform_2(%arg0: i32, %arg1: i32, %arg2: i32) -> (i32, i32) {
    %c0_i32 = arith.constant 0 : i32
    return %arg0, %arg2 : i32, i32
  }
  func.func @transform_3(%arg0: i32, %arg1: i32, %arg2: i32) -> (i32, i32) {
    %c0_i32 = arith.constant 0 : i32
    return %arg2, %arg1 : i32, i32
  }
  func.func @transform_4(%arg0: i32, %arg1: i32, %arg2: i32) -> (i32, i32) {
    %c0_i32 = arith.constant 0 : i32
    %c0_i32_0 = arith.constant 0 : i32
    return %c0_i32, %arg1 : i32, i32
  }
  func.func @transform_5(%arg0: i32, %arg1: i32, %arg2: i32) -> (i32, i32) {
    %c0_i32 = arith.constant 0 : i32
    return %arg0, %arg1 : i32, i32
  }
}

module attributes {stable_mosaic.version = 11 : i64} {
  func.func @_bn_stats_kernel(%arg0: i32, %arg1: memref<32x32xbf16, #tpu.memory_space<vmem>>, %arg2: memref<1x32xf32, #tpu.memory_space<vmem>>, %arg3: memref<1x32xf32, #tpu.memory_space<vmem>>, %arg4: memref<1x32xf32, #tpu.memory_space<vmem>>, %arg5: memref<1x32xf32, #tpu.memory_space<vmem>>) attributes {dimension_semantics = [#tpu.dimension_semantics<arbitrary>], iteration_bounds = array<i64: 1>, scalar_prefetch = 0 : i64, scratch_operands = 2 : i64, tpu.core_type = #tpu.core_type<tc>, window_params = [{transform_indices = @transform_0, window_bounds = array<i64: 32, 32>}, {pipeline_mode = #tpu.pipeline_mode<synchronous>, transform_indices = @transform_1, window_bounds = array<i64: 1, 32>}, {pipeline_mode = #tpu.pipeline_mode<synchronous>, transform_indices = @transform_2, window_bounds = array<i64: 1, 32>}]} {
    %c0_i32 = arith.constant 0 : i32
    %0 = arith.cmpi eq, %arg0, %c0_i32 : i32
    %1 = arith.extui %0 : i1 to i32
    %c0_i32_0 = arith.constant 0 : i32
    %2 = arith.cmpi ne, %1, %c0_i32_0 : i32
    scf.if %2 {
      %cst_13 = arith.constant 0.000000e+00 : f32
      %19 = vector.broadcast %cst_13 : f32 to vector<1x32xf32>
      %c0_14 = arith.constant 0 : index
      %c0_15 = arith.constant 0 : index
      %20 = vector.load %arg4[%c0_14, %c0_15] : memref<1x32xf32, #tpu.memory_space<vmem>>, vector<1x32xf32>
      tpu.vector_store %arg4[%c0_14, %c0_15], %19 {strides = array<i32>} : memref<1x32xf32, #tpu.memory_space<vmem>>, vector<1x32xf32>,
      %cst_16 = arith.constant 0.000000e+00 : f32
      %21 = vector.broadcast %cst_16 : f32 to vector<1x32xf32>
      %c0_17 = arith.constant 0 : index
      %c0_18 = arith.constant 0 : index
      %22 = vector.load %arg5[%c0_17, %c0_18] : memref<1x32xf32, #tpu.memory_space<vmem>>, vector<1x32xf32>
      tpu.vector_store %arg5[%c0_17, %c0_18], %21 {strides = array<i32>} : memref<1x32xf32, #tpu.memory_space<vmem>>, vector<1x32xf32>,
    } else {
    }
    %c0 = arith.constant 0 : index
    %c0_1 = arith.constant 0 : index
    %3 = vector.load %arg1[%c0, %c0_1] : memref<32x32xbf16, #tpu.memory_space<vmem>>, vector<32x32xbf16>
    %4 = arith.extf %3 : vector<32x32xbf16> to vector<32x32xf32>
    %c0_2 = arith.constant 0 : index
    %c0_3 = arith.constant 0 : index
    %5 = vector.load %arg4[%c0_2, %c0_3] : memref<1x32xf32, #tpu.memory_space<vmem>>, vector<1x32xf32>
    %cst = arith.constant dense<0.000000e+00> : vector<32xf32>
    %6 = vector.multi_reduction <add>, %4, %cst [0] : vector<32x32xf32> to vector<32xf32>
    %7 = vector.shape_cast %6 : vector<32xf32> to vector<1x32xf32>
    %8 = arith.addf %5, %7 : vector<1x32xf32>
    %c0_4 = arith.constant 0 : index
    %c0_5 = arith.constant 0 : index
    %9 = vector.load %arg4[%c0_4, %c0_5] : memref<1x32xf32, #tpu.memory_space<vmem>>, vector<1x32xf32>
    tpu.vector_store %arg4[%c0_4, %c0_5], %8 {strides = array<i32>} : memref<1x32xf32, #tpu.memory_space<vmem>>, vector<1x32xf32>,
    %c0_6 = arith.constant 0 : index
    %c0_7 = arith.constant 0 : index
    %10 = vector.load %arg5[%c0_6, %c0_7] : memref<1x32xf32, #tpu.memory_space<vmem>>, vector<1x32xf32>
    %11 = arith.mulf %4, %4 : vector<32x32xf32>
    %cst_8 = arith.constant dense<0.000000e+00> : vector<32xf32>
    %12 = vector.multi_reduction <add>, %11, %cst_8 [0] : vector<32x32xf32> to vector<32xf32>
    %13 = vector.shape_cast %12 : vector<32xf32> to vector<1x32xf32>
    %14 = arith.addf %10, %13 : vector<1x32xf32>
    %c0_9 = arith.constant 0 : index
    %c0_10 = arith.constant 0 : index
    %15 = vector.load %arg5[%c0_9, %c0_10] : memref<1x32xf32, #tpu.memory_space<vmem>>, vector<1x32xf32>
    tpu.vector_store %arg5[%c0_9, %c0_10], %14 {strides = array<i32>} : memref<1x32xf32, #tpu.memory_space<vmem>>, vector<1x32xf32>,
    %c0_i32_11 = arith.constant 0 : i32
    %16 = arith.cmpi eq, %arg0, %c0_i32_11 : i32
    %17 = arith.extui %16 : i1 to i32
    %c0_i32_12 = arith.constant 0 : i32
    %18 = arith.cmpi ne, %17, %c0_i32_12 : i32
    scf.if %18 {
      %c0_13 = arith.constant 0 : index
      %c0_14 = arith.constant 0 : index
      %19 = vector.load %arg4[%c0_13, %c0_14] : memref<1x32xf32, #tpu.memory_space<vmem>>, vector<1x32xf32>
      %c0_15 = arith.constant 0 : index
      %c0_16 = arith.constant 0 : index
      %20 = vector.load %arg2[%c0_15, %c0_16] : memref<1x32xf32, #tpu.memory_space<vmem>>, vector<1x32xf32>
      tpu.vector_store %arg2[%c0_15, %c0_16], %19 {strides = array<i32>} : memref<1x32xf32, #tpu.memory_space<vmem>>, vector<1x32xf32>,
      %c0_17 = arith.constant 0 : index
      %c0_18 = arith.constant 0 : index
      %21 = vector.load %arg5[%c0_17, %c0_18] : memref<1x32xf32, #tpu.memory_space<vmem>>, vector<1x32xf32>
      %c0_19 = arith.constant 0 : index
      %c0_20 = arith.constant 0 : index
      %22 = vector.load %arg3[%c0_19, %c0_20] : memref<1x32xf32, #tpu.memory_space<vmem>>, vector<1x32xf32>
      tpu.vector_store %arg3[%c0_19, %c0_20], %21 {strides = array<i32>} : memref<1x32xf32, #tpu.memory_space<vmem>>, vector<1x32xf32>,
    } else {
    }
    return
  }
  func.func @transform_0(%arg0: i32) -> (i32, i32) {
    %c0_i32 = arith.constant 0 : i32
    %c0_i32_0 = arith.constant 0 : i32
    return %arg0, %c0_i32 : i32, i32
  }
  func.func @transform_1(%arg0: i32) -> (i32, i32) {
    %c0_i32 = arith.constant 0 : i32
    %c0_i32_0 = arith.constant 0 : i32
    %c0_i32_1 = arith.constant 0 : i32
    return %c0_i32, %c0_i32_0 : i32, i32
  }
  func.func @transform_2(%arg0: i32) -> (i32, i32) {
    %c0_i32 = arith.constant 0 : i32
    %c0_i32_0 = arith.constant 0 : i32
    %c0_i32_1 = arith.constant 0 : i32
    return %c0_i32, %c0_i32_0 : i32, i32
  }
}

module attributes {stable_mosaic.version = 11 : i64} {
  func.func @_mm_kernel(%arg0: i32, %arg1: i32, %arg2: i32, %arg3: memref<1x128xf32, #tpu.memory_space<vmem>>, %arg4: memref<1x128xf32, #tpu.memory_space<vmem>>, %arg5: memref<32x128xbf16, #tpu.memory_space<vmem>>, %arg6: memref<128x256xbf16, #tpu.memory_space<vmem>>, %arg7: memref<1x256xf32, #tpu.memory_space<vmem>>, %arg8: memref<32x256xbf16, #tpu.memory_space<vmem>>, %arg9: memref<32x256xf32, #tpu.memory_space<vmem>>) attributes {dimension_semantics = [#tpu.dimension_semantics<parallel>, #tpu.dimension_semantics<parallel>, #tpu.dimension_semantics<arbitrary>], iteration_bounds = array<i64: 1, 1, 1>, scalar_prefetch = 0 : i64, scratch_operands = 1 : i64, tpu.core_type = #tpu.core_type<tc>, window_params = [{transform_indices = @transform_0, window_bounds = array<i64: 1, 128>}, {transform_indices = @transform_1, window_bounds = array<i64: 1, 128>}, {transform_indices = @transform_2, window_bounds = array<i64: 32, 128>}, {transform_indices = @transform_3, window_bounds = array<i64: 128, 256>}, {transform_indices = @transform_4, window_bounds = array<i64: 1, 256>}, {transform_indices = @transform_5, window_bounds = array<i64: 32, 256>}]} {
    %c0_i32 = arith.constant 0 : i32
    %0 = arith.cmpi eq, %arg2, %c0_i32 : i32
    %1 = arith.extui %0 : i1 to i32
    %c0_i32_0 = arith.constant 0 : i32
    %2 = arith.cmpi ne, %1, %c0_i32_0 : i32
    scf.if %2 {
      %cst_15 = arith.constant 0.000000e+00 : f32
      %22 = vector.broadcast %cst_15 : f32 to vector<32x256xf32>
      %c0_16 = arith.constant 0 : index
      %c0_17 = arith.constant 0 : index
      %23 = vector.load %arg9[%c0_16, %c0_17] : memref<32x256xf32, #tpu.memory_space<vmem>>, vector<32x256xf32>
      tpu.vector_store %arg9[%c0_16, %c0_17], %22 {strides = array<i32>} : memref<32x256xf32, #tpu.memory_space<vmem>>, vector<32x256xf32>,
    } else {
    }
    %c0 = arith.constant 0 : index
    %c0_1 = arith.constant 0 : index
    %3 = vector.load %arg5[%c0, %c0_1] : memref<32x128xbf16, #tpu.memory_space<vmem>>, vector<32x128xbf16>
    %4 = arith.extf %3 : vector<32x128xbf16> to vector<32x128xf32>
    %c0_2 = arith.constant 0 : index
    %c0_3 = arith.constant 0 : index
    %5 = vector.load %arg3[%c0_2, %c0_3] : memref<1x128xf32, #tpu.memory_space<vmem>>, vector<1x128xf32>
    %6 = vector.broadcast %5 : vector<1x128xf32> to vector<32x128xf32>
    %7 = arith.mulf %4, %6 : vector<32x128xf32>
    %c0_4 = arith.constant 0 : index
    %c0_5 = arith.constant 0 : index
    %8 = vector.load %arg4[%c0_4, %c0_5] : memref<1x128xf32, #tpu.memory_space<vmem>>, vector<1x128xf32>
    %9 = vector.broadcast %8 : vector<1x128xf32> to vector<32x128xf32>
    %10 = arith.addf %7, %9 : vector<32x128xf32>
    %cst = arith.constant 0.000000e+00 : f32
    %11 = vector.broadcast %cst : f32 to vector<32x128xf32>
    %12 = arith.maximumf %10, %11 : vector<32x128xf32>
    %13 = arith.truncf %12 : vector<32x128xf32> to vector<32x128xbf16>
    %c0_6 = arith.constant 0 : index
    %c0_7 = arith.constant 0 : index
    %14 = vector.load %arg9[%c0_6, %c0_7] : memref<32x256xf32, #tpu.memory_space<vmem>>, vector<32x256xf32>
    %c0_8 = arith.constant 0 : index
    %c0_9 = arith.constant 0 : index
    %15 = vector.load %arg6[%c0_8, %c0_9] : memref<128x256xbf16, #tpu.memory_space<vmem>>, vector<128x256xbf16>
    %cst_10 = arith.constant dense<0.000000e+00> : vector<32x256xf32>
    %16 = tpu.matmul %13, %15, %cst_10 {dimension_numbers = #tpu.dot_dimension_numbers<[1], [0], [0], [1], [0, 0, 1, 1], [], []>} : vector<32x128xbf16>, vector<128x256xbf16>, vector<32x256xf32> -> vector<32x256xf32>
    %17 = arith.addf %14, %16 : vector<32x256xf32>
    %c0_11 = arith.constant 0 : index
    %c0_12 = arith.constant 0 : index
    %18 = vector.load %arg9[%c0_11, %c0_12] : memref<32x256xf32, #tpu.memory_space<vmem>>, vector<32x256xf32>
    tpu.vector_store %arg9[%c0_11, %c0_12], %17 {strides = array<i32>} : memref<32x256xf32, #tpu.memory_space<vmem>>, vector<32x256xf32>,
    %c0_i32_13 = arith.constant 0 : i32
    %19 = arith.cmpi eq, %arg2, %c0_i32_13 : i32
    %20 = arith.extui %19 : i1 to i32
    %c0_i32_14 = arith.constant 0 : i32
    %21 = arith.cmpi ne, %20, %c0_i32_14 : i32
    scf.if %21 {
      %c0_15 = arith.constant 0 : index
      %c0_16 = arith.constant 0 : index
      %22 = vector.load %arg9[%c0_15, %c0_16] : memref<32x256xf32, #tpu.memory_space<vmem>>, vector<32x256xf32>
      %c0_17 = arith.constant 0 : index
      %c0_18 = arith.constant 0 : index
      %23 = vector.load %arg7[%c0_17, %c0_18] : memref<1x256xf32, #tpu.memory_space<vmem>>, vector<1x256xf32>
      %24 = vector.broadcast %23 : vector<1x256xf32> to vector<32x256xf32>
      %25 = arith.addf %22, %24 : vector<32x256xf32>
      %26 = arith.truncf %25 : vector<32x256xf32> to vector<32x256xbf16>
      %c0_19 = arith.constant 0 : index
      %c0_20 = arith.constant 0 : index
      %27 = vector.load %arg8[%c0_19, %c0_20] : memref<32x256xbf16, #tpu.memory_space<vmem>>, vector<32x256xbf16>
      tpu.vector_store %arg8[%c0_19, %c0_20], %26 {strides = array<i32>} : memref<32x256xbf16, #tpu.memory_space<vmem>>, vector<32x256xbf16>,
    } else {
    }
    return
  }
  func.func @transform_0(%arg0: i32, %arg1: i32, %arg2: i32) -> (i32, i32) {
    %c0_i32 = arith.constant 0 : i32
    %c0_i32_0 = arith.constant 0 : i32
    return %c0_i32, %arg2 : i32, i32
  }
  func.func @transform_1(%arg0: i32, %arg1: i32, %arg2: i32) -> (i32, i32) {
    %c0_i32 = arith.constant 0 : i32
    %c0_i32_0 = arith.constant 0 : i32
    return %c0_i32, %arg2 : i32, i32
  }
  func.func @transform_2(%arg0: i32, %arg1: i32, %arg2: i32) -> (i32, i32) {
    %c0_i32 = arith.constant 0 : i32
    return %arg0, %arg2 : i32, i32
  }
  func.func @transform_3(%arg0: i32, %arg1: i32, %arg2: i32) -> (i32, i32) {
    %c0_i32 = arith.constant 0 : i32
    return %arg2, %arg1 : i32, i32
  }
  func.func @transform_4(%arg0: i32, %arg1: i32, %arg2: i32) -> (i32, i32) {
    %c0_i32 = arith.constant 0 : i32
    %c0_i32_0 = arith.constant 0 : i32
    return %c0_i32, %arg1 : i32, i32
  }
  func.func @transform_5(%arg0: i32, %arg1: i32, %arg2: i32) -> (i32, i32) {
    %c0_i32 = arith.constant 0 : i32
    return %arg0, %arg1 : i32, i32
  }
}

module attributes {stable_mosaic.version = 11 : i64} {
  func.func @_bn_stats_kernel(%arg0: i32, %arg1: memref<128x16xbf16, #tpu.memory_space<vmem>>, %arg2: memref<1x16xf32, #tpu.memory_space<vmem>>, %arg3: memref<1x16xf32, #tpu.memory_space<vmem>>, %arg4: memref<1x16xf32, #tpu.memory_space<vmem>>, %arg5: memref<1x16xf32, #tpu.memory_space<vmem>>) attributes {dimension_semantics = [#tpu.dimension_semantics<arbitrary>], iteration_bounds = array<i64: 1>, scalar_prefetch = 0 : i64, scratch_operands = 2 : i64, tpu.core_type = #tpu.core_type<tc>, window_params = [{transform_indices = @transform_0, window_bounds = array<i64: 128, 16>}, {pipeline_mode = #tpu.pipeline_mode<synchronous>, transform_indices = @transform_1, window_bounds = array<i64: 1, 16>}, {pipeline_mode = #tpu.pipeline_mode<synchronous>, transform_indices = @transform_2, window_bounds = array<i64: 1, 16>}]} {
    %c0_i32 = arith.constant 0 : i32
    %0 = arith.cmpi eq, %arg0, %c0_i32 : i32
    %1 = arith.extui %0 : i1 to i32
    %c0_i32_0 = arith.constant 0 : i32
    %2 = arith.cmpi ne, %1, %c0_i32_0 : i32
    scf.if %2 {
      %cst_13 = arith.constant 0.000000e+00 : f32
      %19 = vector.broadcast %cst_13 : f32 to vector<1x16xf32>
      %c0_14 = arith.constant 0 : index
      %c0_15 = arith.constant 0 : index
      %20 = vector.load %arg4[%c0_14, %c0_15] : memref<1x16xf32, #tpu.memory_space<vmem>>, vector<1x16xf32>
      tpu.vector_store %arg4[%c0_14, %c0_15], %19 {strides = array<i32>} : memref<1x16xf32, #tpu.memory_space<vmem>>, vector<1x16xf32>,
      %cst_16 = arith.constant 0.000000e+00 : f32
      %21 = vector.broadcast %cst_16 : f32 to vector<1x16xf32>
      %c0_17 = arith.constant 0 : index
      %c0_18 = arith.constant 0 : index
      %22 = vector.load %arg5[%c0_17, %c0_18] : memref<1x16xf32, #tpu.memory_space<vmem>>, vector<1x16xf32>
      tpu.vector_store %arg5[%c0_17, %c0_18], %21 {strides = array<i32>} : memref<1x16xf32, #tpu.memory_space<vmem>>, vector<1x16xf32>,
    } else {
    }
    %c0 = arith.constant 0 : index
    %c0_1 = arith.constant 0 : index
    %3 = vector.load %arg1[%c0, %c0_1] : memref<128x16xbf16, #tpu.memory_space<vmem>>, vector<128x16xbf16>
    %4 = arith.extf %3 : vector<128x16xbf16> to vector<128x16xf32>
    %c0_2 = arith.constant 0 : index
    %c0_3 = arith.constant 0 : index
    %5 = vector.load %arg4[%c0_2, %c0_3] : memref<1x16xf32, #tpu.memory_space<vmem>>, vector<1x16xf32>
    %cst = arith.constant dense<0.000000e+00> : vector<16xf32>
    %6 = vector.multi_reduction <add>, %4, %cst [0] : vector<128x16xf32> to vector<16xf32>
    %7 = vector.shape_cast %6 : vector<16xf32> to vector<1x16xf32>
    %8 = arith.addf %5, %7 : vector<1x16xf32>
    %c0_4 = arith.constant 0 : index
    %c0_5 = arith.constant 0 : index
    %9 = vector.load %arg4[%c0_4, %c0_5] : memref<1x16xf32, #tpu.memory_space<vmem>>, vector<1x16xf32>
    tpu.vector_store %arg4[%c0_4, %c0_5], %8 {strides = array<i32>} : memref<1x16xf32, #tpu.memory_space<vmem>>, vector<1x16xf32>,
    %c0_6 = arith.constant 0 : index
    %c0_7 = arith.constant 0 : index
    %10 = vector.load %arg5[%c0_6, %c0_7] : memref<1x16xf32, #tpu.memory_space<vmem>>, vector<1x16xf32>
    %11 = arith.mulf %4, %4 : vector<128x16xf32>
    %cst_8 = arith.constant dense<0.000000e+00> : vector<16xf32>
    %12 = vector.multi_reduction <add>, %11, %cst_8 [0] : vector<128x16xf32> to vector<16xf32>
    %13 = vector.shape_cast %12 : vector<16xf32> to vector<1x16xf32>
    %14 = arith.addf %10, %13 : vector<1x16xf32>
    %c0_9 = arith.constant 0 : index
    %c0_10 = arith.constant 0 : index
    %15 = vector.load %arg5[%c0_9, %c0_10] : memref<1x16xf32, #tpu.memory_space<vmem>>, vector<1x16xf32>
    tpu.vector_store %arg5[%c0_9, %c0_10], %14 {strides = array<i32>} : memref<1x16xf32, #tpu.memory_space<vmem>>, vector<1x16xf32>,
    %c0_i32_11 = arith.constant 0 : i32
    %16 = arith.cmpi eq, %arg0, %c0_i32_11 : i32
    %17 = arith.extui %16 : i1 to i32
    %c0_i32_12 = arith.constant 0 : i32
    %18 = arith.cmpi ne, %17, %c0_i32_12 : i32
    scf.if %18 {
      %c0_13 = arith.constant 0 : index
      %c0_14 = arith.constant 0 : index
      %19 = vector.load %arg4[%c0_13, %c0_14] : memref<1x16xf32, #tpu.memory_space<vmem>>, vector<1x16xf32>
      %c0_15 = arith.constant 0 : index
      %c0_16 = arith.constant 0 : index
      %20 = vector.load %arg2[%c0_15, %c0_16] : memref<1x16xf32, #tpu.memory_space<vmem>>, vector<1x16xf32>
      tpu.vector_store %arg2[%c0_15, %c0_16], %19 {strides = array<i32>} : memref<1x16xf32, #tpu.memory_space<vmem>>, vector<1x16xf32>,
      %c0_17 = arith.constant 0 : index
      %c0_18 = arith.constant 0 : index
      %21 = vector.load %arg5[%c0_17, %c0_18] : memref<1x16xf32, #tpu.memory_space<vmem>>, vector<1x16xf32>
      %c0_19 = arith.constant 0 : index
      %c0_20 = arith.constant 0 : index
      %22 = vector.load %arg3[%c0_19, %c0_20] : memref<1x16xf32, #tpu.memory_space<vmem>>, vector<1x16xf32>
      tpu.vector_store %arg3[%c0_19, %c0_20], %21 {strides = array<i32>} : memref<1x16xf32, #tpu.memory_space<vmem>>, vector<1x16xf32>,
    } else {
    }
    return
  }
  func.func @transform_0(%arg0: i32) -> (i32, i32) {
    %c0_i32 = arith.constant 0 : i32
    %c0_i32_0 = arith.constant 0 : i32
    return %arg0, %c0_i32 : i32, i32
  }
  func.func @transform_1(%arg0: i32) -> (i32, i32) {
    %c0_i32 = arith.constant 0 : i32
    %c0_i32_0 = arith.constant 0 : i32
    %c0_i32_1 = arith.constant 0 : i32
    return %c0_i32, %c0_i32_0 : i32, i32
  }
  func.func @transform_2(%arg0: i32) -> (i32, i32) {
    %c0_i32 = arith.constant 0 : i32
    %c0_i32_0 = arith.constant 0 : i32
    %c0_i32_1 = arith.constant 0 : i32
    return %c0_i32, %c0_i32_0 : i32, i32
  }
}

module attributes {stable_mosaic.version = 11 : i64} {
  func.func @_mm_kernel(%arg0: i32, %arg1: i32, %arg2: i32, %arg3: memref<1x128xf32, #tpu.memory_space<vmem>>, %arg4: memref<1x128xf32, #tpu.memory_space<vmem>>, %arg5: memref<128x128xbf16, #tpu.memory_space<vmem>>, %arg6: memref<128x128xbf16, #tpu.memory_space<vmem>>, %arg7: memref<1x128xf32, #tpu.memory_space<vmem>>, %arg8: memref<128x128xbf16, #tpu.memory_space<vmem>>, %arg9: memref<128x128xf32, #tpu.memory_space<vmem>>) attributes {dimension_semantics = [#tpu.dimension_semantics<parallel>, #tpu.dimension_semantics<parallel>, #tpu.dimension_semantics<arbitrary>], iteration_bounds = array<i64: 1, 1, 1>, scalar_prefetch = 0 : i64, scratch_operands = 1 : i64, tpu.core_type = #tpu.core_type<tc>, window_params = [{transform_indices = @transform_0, window_bounds = array<i64: 1, 128>}, {transform_indices = @transform_1, window_bounds = array<i64: 1, 128>}, {transform_indices = @transform_2, window_bounds = array<i64: 128, 128>}, {transform_indices = @transform_3, window_bounds = array<i64: 128, 128>}, {transform_indices = @transform_4, window_bounds = array<i64: 1, 128>}, {transform_indices = @transform_5, window_bounds = array<i64: 128, 128>}]} {
    %c0_i32 = arith.constant 0 : i32
    %0 = arith.cmpi eq, %arg2, %c0_i32 : i32
    %1 = arith.extui %0 : i1 to i32
    %c0_i32_0 = arith.constant 0 : i32
    %2 = arith.cmpi ne, %1, %c0_i32_0 : i32
    scf.if %2 {
      %cst_15 = arith.constant 0.000000e+00 : f32
      %22 = vector.broadcast %cst_15 : f32 to vector<128x128xf32>
      %c0_16 = arith.constant 0 : index
      %c0_17 = arith.constant 0 : index
      %23 = vector.load %arg9[%c0_16, %c0_17] : memref<128x128xf32, #tpu.memory_space<vmem>>, vector<128x128xf32>
      tpu.vector_store %arg9[%c0_16, %c0_17], %22 {strides = array<i32>} : memref<128x128xf32, #tpu.memory_space<vmem>>, vector<128x128xf32>,
    } else {
    }
    %c0 = arith.constant 0 : index
    %c0_1 = arith.constant 0 : index
    %3 = vector.load %arg5[%c0, %c0_1] : memref<128x128xbf16, #tpu.memory_space<vmem>>, vector<128x128xbf16>
    %4 = arith.extf %3 : vector<128x128xbf16> to vector<128x128xf32>
    %c0_2 = arith.constant 0 : index
    %c0_3 = arith.constant 0 : index
    %5 = vector.load %arg3[%c0_2, %c0_3] : memref<1x128xf32, #tpu.memory_space<vmem>>, vector<1x128xf32>
    %6 = vector.broadcast %5 : vector<1x128xf32> to vector<128x128xf32>
    %7 = arith.mulf %4, %6 : vector<128x128xf32>
    %c0_4 = arith.constant 0 : index
    %c0_5 = arith.constant 0 : index
    %8 = vector.load %arg4[%c0_4, %c0_5] : memref<1x128xf32, #tpu.memory_space<vmem>>, vector<1x128xf32>
    %9 = vector.broadcast %8 : vector<1x128xf32> to vector<128x128xf32>
    %10 = arith.addf %7, %9 : vector<128x128xf32>
    %cst = arith.constant 0.000000e+00 : f32
    %11 = vector.broadcast %cst : f32 to vector<128x128xf32>
    %12 = arith.maximumf %10, %11 : vector<128x128xf32>
    %13 = arith.truncf %12 : vector<128x128xf32> to vector<128x128xbf16>
    %c0_6 = arith.constant 0 : index
    %c0_7 = arith.constant 0 : index
    %14 = vector.load %arg9[%c0_6, %c0_7] : memref<128x128xf32, #tpu.memory_space<vmem>>, vector<128x128xf32>
    %c0_8 = arith.constant 0 : index
    %c0_9 = arith.constant 0 : index
    %15 = vector.load %arg6[%c0_8, %c0_9] : memref<128x128xbf16, #tpu.memory_space<vmem>>, vector<128x128xbf16>
    %cst_10 = arith.constant dense<0.000000e+00> : vector<128x128xf32>
    %16 = tpu.matmul %13, %15, %cst_10 {dimension_numbers = #tpu.dot_dimension_numbers<[1], [0], [0], [1], [0, 0, 1, 1], [], []>} : vector<128x128xbf16>, vector<128x128xbf16>, vector<128x128xf32> -> vector<128x128xf32>
    %17 = arith.addf %14, %16 : vector<128x128xf32>
    %c0_11 = arith.constant 0 : index
    %c0_12 = arith.constant 0 : index
    %18 = vector.load %arg9[%c0_11, %c0_12] : memref<128x128xf32, #tpu.memory_space<vmem>>, vector<128x128xf32>
    tpu.vector_store %arg9[%c0_11, %c0_12], %17 {strides = array<i32>} : memref<128x128xf32, #tpu.memory_space<vmem>>, vector<128x128xf32>,
    %c0_i32_13 = arith.constant 0 : i32
    %19 = arith.cmpi eq, %arg2, %c0_i32_13 : i32
    %20 = arith.extui %19 : i1 to i32
    %c0_i32_14 = arith.constant 0 : i32
    %21 = arith.cmpi ne, %20, %c0_i32_14 : i32
    scf.if %21 {
      %c0_15 = arith.constant 0 : index
      %c0_16 = arith.constant 0 : index
      %22 = vector.load %arg9[%c0_15, %c0_16] : memref<128x128xf32, #tpu.memory_space<vmem>>, vector<128x128xf32>
      %c0_17 = arith.constant 0 : index
      %c0_18 = arith.constant 0 : index
      %23 = vector.load %arg7[%c0_17, %c0_18] : memref<1x128xf32, #tpu.memory_space<vmem>>, vector<1x128xf32>
      %24 = vector.broadcast %23 : vector<1x128xf32> to vector<128x128xf32>
      %25 = arith.addf %22, %24 : vector<128x128xf32>
      %26 = arith.truncf %25 : vector<128x128xf32> to vector<128x128xbf16>
      %c0_19 = arith.constant 0 : index
      %c0_20 = arith.constant 0 : index
      %27 = vector.load %arg8[%c0_19, %c0_20] : memref<128x128xbf16, #tpu.memory_space<vmem>>, vector<128x128xbf16>
      tpu.vector_store %arg8[%c0_19, %c0_20], %26 {strides = array<i32>} : memref<128x128xbf16, #tpu.memory_space<vmem>>, vector<128x128xbf16>,
    } else {
    }
    return
  }
  func.func @transform_0(%arg0: i32, %arg1: i32, %arg2: i32) -> (i32, i32) {
    %c0_i32 = arith.constant 0 : i32
    %c0_i32_0 = arith.constant 0 : i32
    return %c0_i32, %arg2 : i32, i32
  }
  func.func @transform_1(%arg0: i32, %arg1: i32, %arg2: i32) -> (i32, i32) {
    %c0_i32 = arith.constant 0 : i32
    %c0_i32_0 = arith.constant 0 : i32
    return %c0_i32, %arg2 : i32, i32
  }
  func.func @transform_2(%arg0: i32, %arg1: i32, %arg2: i32) -> (i32, i32) {
    %c0_i32 = arith.constant 0 : i32
    return %arg0, %arg2 : i32, i32
  }
  func.func @transform_3(%arg0: i32, %arg1: i32, %arg2: i32) -> (i32, i32) {
    %c0_i32 = arith.constant 0 : i32
    return %arg2, %arg1 : i32, i32
  }
  func.func @transform_4(%arg0: i32, %arg1: i32, %arg2: i32) -> (i32, i32) {
    %c0_i32 = arith.constant 0 : i32
    %c0_i32_0 = arith.constant 0 : i32
    return %c0_i32, %arg1 : i32, i32
  }
  func.func @transform_5(%arg0: i32, %arg1: i32, %arg2: i32) -> (i32, i32) {
    %c0_i32 = arith.constant 0 : i32
    return %arg0, %arg1 : i32, i32
  }
}

module attributes {stable_mosaic.version = 11 : i64} {
  func.func @_bn_stats_kernel(%arg0: i32, %arg1: memref<512x8xbf16, #tpu.memory_space<vmem>>, %arg2: memref<1x8xf32, #tpu.memory_space<vmem>>, %arg3: memref<1x8xf32, #tpu.memory_space<vmem>>, %arg4: memref<1x8xf32, #tpu.memory_space<vmem>>, %arg5: memref<1x8xf32, #tpu.memory_space<vmem>>) attributes {dimension_semantics = [#tpu.dimension_semantics<arbitrary>], iteration_bounds = array<i64: 1>, scalar_prefetch = 0 : i64, scratch_operands = 2 : i64, tpu.core_type = #tpu.core_type<tc>, window_params = [{transform_indices = @transform_0, window_bounds = array<i64: 512, 8>}, {pipeline_mode = #tpu.pipeline_mode<synchronous>, transform_indices = @transform_1, window_bounds = array<i64: 1, 8>}, {pipeline_mode = #tpu.pipeline_mode<synchronous>, transform_indices = @transform_2, window_bounds = array<i64: 1, 8>}]} {
    %c0_i32 = arith.constant 0 : i32
    %0 = arith.cmpi eq, %arg0, %c0_i32 : i32
    %1 = arith.extui %0 : i1 to i32
    %c0_i32_0 = arith.constant 0 : i32
    %2 = arith.cmpi ne, %1, %c0_i32_0 : i32
    scf.if %2 {
      %cst_13 = arith.constant 0.000000e+00 : f32
      %19 = vector.broadcast %cst_13 : f32 to vector<1x8xf32>
      %c0_14 = arith.constant 0 : index
      %c0_15 = arith.constant 0 : index
      %20 = vector.load %arg4[%c0_14, %c0_15] : memref<1x8xf32, #tpu.memory_space<vmem>>, vector<1x8xf32>
      tpu.vector_store %arg4[%c0_14, %c0_15], %19 {strides = array<i32>} : memref<1x8xf32, #tpu.memory_space<vmem>>, vector<1x8xf32>,
      %cst_16 = arith.constant 0.000000e+00 : f32
      %21 = vector.broadcast %cst_16 : f32 to vector<1x8xf32>
      %c0_17 = arith.constant 0 : index
      %c0_18 = arith.constant 0 : index
      %22 = vector.load %arg5[%c0_17, %c0_18] : memref<1x8xf32, #tpu.memory_space<vmem>>, vector<1x8xf32>
      tpu.vector_store %arg5[%c0_17, %c0_18], %21 {strides = array<i32>} : memref<1x8xf32, #tpu.memory_space<vmem>>, vector<1x8xf32>,
    } else {
    }
    %c0 = arith.constant 0 : index
    %c0_1 = arith.constant 0 : index
    %3 = vector.load %arg1[%c0, %c0_1] : memref<512x8xbf16, #tpu.memory_space<vmem>>, vector<512x8xbf16>
    %4 = arith.extf %3 : vector<512x8xbf16> to vector<512x8xf32>
    %c0_2 = arith.constant 0 : index
    %c0_3 = arith.constant 0 : index
    %5 = vector.load %arg4[%c0_2, %c0_3] : memref<1x8xf32, #tpu.memory_space<vmem>>, vector<1x8xf32>
    %cst = arith.constant dense<0.000000e+00> : vector<8xf32>
    %6 = vector.multi_reduction <add>, %4, %cst [0] : vector<512x8xf32> to vector<8xf32>
    %7 = vector.shape_cast %6 : vector<8xf32> to vector<1x8xf32>
    %8 = arith.addf %5, %7 : vector<1x8xf32>
    %c0_4 = arith.constant 0 : index
    %c0_5 = arith.constant 0 : index
    %9 = vector.load %arg4[%c0_4, %c0_5] : memref<1x8xf32, #tpu.memory_space<vmem>>, vector<1x8xf32>
    tpu.vector_store %arg4[%c0_4, %c0_5], %8 {strides = array<i32>} : memref<1x8xf32, #tpu.memory_space<vmem>>, vector<1x8xf32>,
    %c0_6 = arith.constant 0 : index
    %c0_7 = arith.constant 0 : index
    %10 = vector.load %arg5[%c0_6, %c0_7] : memref<1x8xf32, #tpu.memory_space<vmem>>, vector<1x8xf32>
    %11 = arith.mulf %4, %4 : vector<512x8xf32>
    %cst_8 = arith.constant dense<0.000000e+00> : vector<8xf32>
    %12 = vector.multi_reduction <add>, %11, %cst_8 [0] : vector<512x8xf32> to vector<8xf32>
    %13 = vector.shape_cast %12 : vector<8xf32> to vector<1x8xf32>
    %14 = arith.addf %10, %13 : vector<1x8xf32>
    %c0_9 = arith.constant 0 : index
    %c0_10 = arith.constant 0 : index
    %15 = vector.load %arg5[%c0_9, %c0_10] : memref<1x8xf32, #tpu.memory_space<vmem>>, vector<1x8xf32>
    tpu.vector_store %arg5[%c0_9, %c0_10], %14 {strides = array<i32>} : memref<1x8xf32, #tpu.memory_space<vmem>>, vector<1x8xf32>,
    %c0_i32_11 = arith.constant 0 : i32
    %16 = arith.cmpi eq, %arg0, %c0_i32_11 : i32
    %17 = arith.extui %16 : i1 to i32
    %c0_i32_12 = arith.constant 0 : i32
    %18 = arith.cmpi ne, %17, %c0_i32_12 : i32
    scf.if %18 {
      %c0_13 = arith.constant 0 : index
      %c0_14 = arith.constant 0 : index
      %19 = vector.load %arg4[%c0_13, %c0_14] : memref<1x8xf32, #tpu.memory_space<vmem>>, vector<1x8xf32>
      %c0_15 = arith.constant 0 : index
      %c0_16 = arith.constant 0 : index
      %20 = vector.load %arg2[%c0_15, %c0_16] : memref<1x8xf32, #tpu.memory_space<vmem>>, vector<1x8xf32>
      tpu.vector_store %arg2[%c0_15, %c0_16], %19 {strides = array<i32>} : memref<1x8xf32, #tpu.memory_space<vmem>>, vector<1x8xf32>,
      %c0_17 = arith.constant 0 : index
      %c0_18 = arith.constant 0 : index
      %21 = vector.load %arg5[%c0_17, %c0_18] : memref<1x8xf32, #tpu.memory_space<vmem>>, vector<1x8xf32>
      %c0_19 = arith.constant 0 : index
      %c0_20 = arith.constant 0 : index
      %22 = vector.load %arg3[%c0_19, %c0_20] : memref<1x8xf32, #tpu.memory_space<vmem>>, vector<1x8xf32>
      tpu.vector_store %arg3[%c0_19, %c0_20], %21 {strides = array<i32>} : memref<1x8xf32, #tpu.memory_space<vmem>>, vector<1x8xf32>,
    } else {
    }
    return
  }
  func.func @transform_0(%arg0: i32) -> (i32, i32) {
    %c0_i32 = arith.constant 0 : i32
    %c0_i32_0 = arith.constant 0 : i32
    return %arg0, %c0_i32 : i32, i32
  }
  func.func @transform_1(%arg0: i32) -> (i32, i32) {
    %c0_i32 = arith.constant 0 : i32
    %c0_i32_0 = arith.constant 0 : i32
    %c0_i32_1 = arith.constant 0 : i32
    return %c0_i32, %c0_i32_0 : i32, i32
  }
  func.func @transform_2(%arg0: i32) -> (i32, i32) {
    %c0_i32 = arith.constant 0 : i32
    %c0_i32_0 = arith.constant 0 : i32
    %c0_i32_1 = arith.constant 0 : i32
    return %c0_i32, %c0_i32_0 : i32, i32
  }
}

module attributes {stable_mosaic.version = 11 : i64} {
  func.func @_mm_kernel(%arg0: i32, %arg1: i32, %arg2: i32, %arg3: memref<1x128xf32, #tpu.memory_space<vmem>>, %arg4: memref<1x128xf32, #tpu.memory_space<vmem>>, %arg5: memref<512x128xbf16, #tpu.memory_space<vmem>>, %arg6: memref<128x128xbf16, #tpu.memory_space<vmem>>, %arg7: memref<1x128xf32, #tpu.memory_space<vmem>>, %arg8: memref<512x128xf32, #tpu.memory_space<vmem>>, %arg9: memref<512x128xf32, #tpu.memory_space<vmem>>) attributes {dimension_semantics = [#tpu.dimension_semantics<parallel>, #tpu.dimension_semantics<parallel>, #tpu.dimension_semantics<arbitrary>], iteration_bounds = array<i64: 1, 1, 1>, scalar_prefetch = 0 : i64, scratch_operands = 1 : i64, tpu.core_type = #tpu.core_type<tc>, window_params = [{transform_indices = @transform_0, window_bounds = array<i64: 1, 128>}, {transform_indices = @transform_1, window_bounds = array<i64: 1, 128>}, {transform_indices = @transform_2, window_bounds = array<i64: 512, 128>}, {transform_indices = @transform_3, window_bounds = array<i64: 128, 128>}, {transform_indices = @transform_4, window_bounds = array<i64: 1, 128>}, {transform_indices = @transform_5, window_bounds = array<i64: 512, 128>}]} {
    %c0_i32 = arith.constant 0 : i32
    %0 = arith.cmpi eq, %arg2, %c0_i32 : i32
    %1 = arith.extui %0 : i1 to i32
    %c0_i32_0 = arith.constant 0 : i32
    %2 = arith.cmpi ne, %1, %c0_i32_0 : i32
    scf.if %2 {
      %cst_15 = arith.constant 0.000000e+00 : f32
      %22 = vector.broadcast %cst_15 : f32 to vector<512x128xf32>
      %c0_16 = arith.constant 0 : index
      %c0_17 = arith.constant 0 : index
      %23 = vector.load %arg9[%c0_16, %c0_17] : memref<512x128xf32, #tpu.memory_space<vmem>>, vector<512x128xf32>
      tpu.vector_store %arg9[%c0_16, %c0_17], %22 {strides = array<i32>} : memref<512x128xf32, #tpu.memory_space<vmem>>, vector<512x128xf32>,
    } else {
    }
    %c0 = arith.constant 0 : index
    %c0_1 = arith.constant 0 : index
    %3 = vector.load %arg5[%c0, %c0_1] : memref<512x128xbf16, #tpu.memory_space<vmem>>, vector<512x128xbf16>
    %4 = arith.extf %3 : vector<512x128xbf16> to vector<512x128xf32>
    %c0_2 = arith.constant 0 : index
    %c0_3 = arith.constant 0 : index
    %5 = vector.load %arg3[%c0_2, %c0_3] : memref<1x128xf32, #tpu.memory_space<vmem>>, vector<1x128xf32>
    %6 = vector.broadcast %5 : vector<1x128xf32> to vector<512x128xf32>
    %7 = arith.mulf %4, %6 : vector<512x128xf32>
    %c0_4 = arith.constant 0 : index
    %c0_5 = arith.constant 0 : index
    %8 = vector.load %arg4[%c0_4, %c0_5] : memref<1x128xf32, #tpu.memory_space<vmem>>, vector<1x128xf32>
    %9 = vector.broadcast %8 : vector<1x128xf32> to vector<512x128xf32>
    %10 = arith.addf %7, %9 : vector<512x128xf32>
    %cst = arith.constant 0.000000e+00 : f32
    %11 = vector.broadcast %cst : f32 to vector<512x128xf32>
    %12 = arith.maximumf %10, %11 : vector<512x128xf32>
    %13 = arith.truncf %12 : vector<512x128xf32> to vector<512x128xbf16>
    %c0_6 = arith.constant 0 : index
    %c0_7 = arith.constant 0 : index
    %14 = vector.load %arg9[%c0_6, %c0_7] : memref<512x128xf32, #tpu.memory_space<vmem>>, vector<512x128xf32>
    %c0_8 = arith.constant 0 : index
    %c0_9 = arith.constant 0 : index
    %15 = vector.load %arg6[%c0_8, %c0_9] : memref<128x128xbf16, #tpu.memory_space<vmem>>, vector<128x128xbf16>
    %cst_10 = arith.constant dense<0.000000e+00> : vector<512x128xf32>
    %16 = tpu.matmul %13, %15, %cst_10 {dimension_numbers = #tpu.dot_dimension_numbers<[1], [0], [0], [1], [0, 0, 1, 1], [], []>} : vector<512x128xbf16>, vector<128x128xbf16>, vector<512x128xf32> -> vector<512x128xf32>
    %17 = arith.addf %14, %16 : vector<512x128xf32>
    %c0_11 = arith.constant 0 : index
    %c0_12 = arith.constant 0 : index
    %18 = vector.load %arg9[%c0_11, %c0_12] : memref<512x128xf32, #tpu.memory_space<vmem>>, vector<512x128xf32>
    tpu.vector_store %arg9[%c0_11, %c0_12], %17 {strides = array<i32>} : memref<512x128xf32, #tpu.memory_space<vmem>>, vector<512x128xf32>,
    %c0_i32_13 = arith.constant 0 : i32
    %19 = arith.cmpi eq, %arg2, %c0_i32_13 : i32
    %20 = arith.extui %19 : i1 to i32
    %c0_i32_14 = arith.constant 0 : i32
    %21 = arith.cmpi ne, %20, %c0_i32_14 : i32
    scf.if %21 {
      %c0_15 = arith.constant 0 : index
      %c0_16 = arith.constant 0 : index
      %22 = vector.load %arg9[%c0_15, %c0_16] : memref<512x128xf32, #tpu.memory_space<vmem>>, vector<512x128xf32>
      %c0_17 = arith.constant 0 : index
      %c0_18 = arith.constant 0 : index
      %23 = vector.load %arg7[%c0_17, %c0_18] : memref<1x128xf32, #tpu.memory_space<vmem>>, vector<1x128xf32>
      %24 = vector.broadcast %23 : vector<1x128xf32> to vector<512x128xf32>
      %25 = arith.addf %22, %24 : vector<512x128xf32>
      %26 = math.tanh %25 : vector<512x128xf32>
      %cst_19 = arith.constant 5.000000e-01 : f32
      %27 = vector.broadcast %cst_19 : f32 to vector<512x128xf32>
      %28 = arith.mulf %27, %26 : vector<512x128xf32>
      %cst_20 = arith.constant 5.000000e-01 : f32
      %29 = vector.broadcast %cst_20 : f32 to vector<512x128xf32>
      %30 = arith.addf %28, %29 : vector<512x128xf32>
      %c0_21 = arith.constant 0 : index
      %c0_22 = arith.constant 0 : index
      %31 = vector.load %arg8[%c0_21, %c0_22] : memref<512x128xf32, #tpu.memory_space<vmem>>, vector<512x128xf32>
      tpu.vector_store %arg8[%c0_21, %c0_22], %30 {strides = array<i32>} : memref<512x128xf32, #tpu.memory_space<vmem>>, vector<512x128xf32>,
    } else {
    }
    return
  }
  func.func @transform_0(%arg0: i32, %arg1: i32, %arg2: i32) -> (i32, i32) {
    %c0_i32 = arith.constant 0 : i32
    %c0_i32_0 = arith.constant 0 : i32
    return %c0_i32, %arg2 : i32, i32
  }
  func.func @transform_1(%arg0: i32, %arg1: i32, %arg2: i32) -> (i32, i32) {
    %c0_i32 = arith.constant 0 : i32
    %c0_i32_0 = arith.constant 0 : i32
    return %c0_i32, %arg2 : i32, i32
  }
  func.func @transform_2(%arg0: i32, %arg1: i32, %arg2: i32) -> (i32, i32) {
    %c0_i32 = arith.constant 0 : i32
    return %arg0, %arg2 : i32, i32
  }
  func.func @transform_3(%arg0: i32, %arg1: i32, %arg2: i32) -> (i32, i32) {
    %c0_i32 = arith.constant 0 : i32
    return %arg2, %arg1 : i32, i32
  }
  func.func @transform_4(%arg0: i32, %arg1: i32, %arg2: i32) -> (i32, i32) {
    %c0_i32 = arith.constant 0 : i32
    %c0_i32_0 = arith.constant 0 : i32
    return %c0_i32, %arg1 : i32, i32
  }
  func.func @transform_5(%arg0: i32, %arg1: i32, %arg2: i32) -> (i32, i32) {
    %c0_i32 = arith.constant 0 : i32
    return %arg0, %arg1 : i32, i32
  }
}

</mosaic_0001>

<llo_original>
// kernel: g_sndcgan_forward.11
$region0: #{g_sndcgan_forward.11}
  #allocation0 [shape = 'u32[]', space=smem, size = 0x4, offset = 0x4, fixed_abs, tag = 'smem constant byte address 0x4 - core index']
  #allocation1 [shape = 'u32[72,128]{1,0:T(1,128)}', space=vmem, size = 0x9000, scoped, tag = 'internal scratch']
  #allocation2 [shape = 'f32[1,256]{1,0:T(1,128)}', space=vmem, size = 0x400, scoped, tag = 'scratch operand']
  #allocation3 [shape = 'f32[1,256]{1,0:T(1,128)}', space=vmem, size = 0x400, scoped, tag = 'scratch operand']
  %s0 = inlined_call_operand.vmem [shape: bf16[8,256], index: 0, kind: input, shape index: {}]
  %s1 = inlined_call_operand.vmem [shape: f32[1,256], index: 1, kind: output, shape index: {0}]
  %s2 = inlined_call_operand.vmem [shape: f32[1,256], index: 2, kind: output, shape index: {1}]
  %3 = xla_tuple %s1, %s2
  %s4 = sld [smem:[#allocation0]]
  $region30: #{g_sndcgan_forward.11} parent=0
    _
  %s6 = ssub.s32 1, %s4
  %s7 = scalar_select 0, %s6, %s4
  // Predicated region
  $region2: #{g_sndcgan_forward.11} parent=0 // pred_check
    _
  $region3: #{g_sndcgan_forward.11} parent=0 // pred_check_branch
    %9 = sbr.rel (0) target = $region5
  $region4: #{g_sndcgan_forward.11} parent=0 // pred_region
    _
  $region5: #{g_sndcgan_forward.11} parent=0 // pred_fallthru
    _
  %p10 = scmp.eq.s32.totalorder 0, 0
  // Predicated region
  $region6: #{g_sndcgan_forward.11} parent=0 // pred_check
    %p11 = pneg %p10
  $region7: #{g_sndcgan_forward.11} parent=0 // pred_check_branch
    %13 = sbr.rel (%p11) target = $region9
  $region8: #{g_sndcgan_forward.11} parent=0 // pred_region
    %v14 = vlaneseq
    %vm15 = vcmp.ge.s32.totalorder %v14, 0
    %vm16 = vcmp.lt.s32.totalorder %v14, 256
    %vm17 = vmand %vm15, %vm16
    %18 = vst.msk [vmem:[#allocation2] sm:$0x3] %vm17, 0.0
    %19 = vst.msk [vmem:[#allocation3] sm:$0x3] %vm17, 0.0
  $region9: #{g_sndcgan_forward.11} parent=0 // pred_fallthru
    _
  %v20 = vld [vmem:[%s0] sm:$0xff]
  %v21 = vunpack.c.l.bf16 %v20
  %v22 = vunpack.c.h.bf16 %v20
  %v23 = vld [vmem:[#allocation2] sm:$0x3]
  %v24 = vrot.slane %v21, 4
  %v25 = vadd.f32 %v21, %v24
  %v26 = vrot.slane %v25, 2
  %v27 = vadd.f32 %v25, %v26
  %v28 = vrot.slane %v27, 1
  %v29 = vadd.f32 %v27, %v28
  %v30 = vrot.slane %v22, 4
  %v31 = vadd.f32 %v22, %v30
  %v32 = vrot.slane %v31, 2
  %v33 = vadd.f32 %v31, %v32
  %v34 = vrot.slane %v33, 1
  %v35 = vadd.f32 %v33, %v34
  %v38 = vrot.slane %v35, 7
  %vm39 = vcmask 1040384
  %v40 = vsel %vm39, %v29, %v38
  %v42 = vadd.f32 %v23, %v40
  %v43 = vlaneseq
  %vm44 = vcmp.ge.s32.totalorder %v43, 0
  %vm45 = vcmp.lt.s32.totalorder %v43, 256
  %vm46 = vmand %vm44, %vm45
  %47 = vst.msk [vmem:[#allocation2] sm:$0x3] %vm46, %v42
  %v48 = vld [vmem:[#allocation3] sm:$0x3]
  %v49 = vmul.f32 %v21, %v21
  %v50 = vmul.f32 %v22, %v22
  %v51 = vrot.slane %v49, 4
  %v52 = vadd.f32 %v49, %v51
  %v53 = vrot.slane %v52, 2
  %v54 = vadd.f32 %v52, %v53
  %v55 = vrot.slane %v54, 1
  %v56 = vadd.f32 %v54, %v55
  %v57 = vrot.slane %v50, 4
  %v58 = vadd.f32 %v50, %v57
  %v59 = vrot.slane %v58, 2
  %v60 = vadd.f32 %v58, %v59
  %v61 = vrot.slane %v60, 1
  %v62 = vadd.f32 %v60, %v61
  %v65 = vrot.slane %v62, 7
  %v66 = vsel %vm39, %v56, %v65
  %v68 = vadd.f32 %v48, %v66
  %69 = vst.msk [vmem:[#allocation3] sm:$0x3] %vm46, %v68
  // Predicated region
  $region10: #{g_sndcgan_forward.11} parent=0 // pred_check
    %p70 = pneg %p10
  $region11: #{g_sndcgan_forward.11} parent=0 // pred_check_branch
    %72 = sbr.rel (%p70) target = $region13
  $region12: #{g_sndcgan_forward.11} parent=0 // pred_region
    %v73 = vld [vmem:[#allocation2] sm:$0x3]
    %74 = vst.msk [vmem:[%s1] sm:$0x3] %vm46, %v73
    %v75 = vld [vmem:[#allocation3] sm:$0x3]
    %76 = vst.msk [vmem:[%s2] sm:$0x3] %vm46, %v75
  $region13: #{g_sndcgan_forward.11} parent=0 // pred_fallthru
    _
  // Predicated region
  $region14: #{g_sndcgan_forward.11} parent=0 // pred_check
    _
  $region15: #{g_sndcgan_forward.11} parent=0 // pred_check_branch
    %78 = sbr.rel (0) target = $region17
  $region16: #{g_sndcgan_forward.11} parent=0 // pred_region
    _
  $region17: #{g_sndcgan_forward.11} parent=0 // pred_fallthru
    _
  // Predicated region
  $region18: #{g_sndcgan_forward.11} parent=0 // pred_check
    _
  $region19: #{g_sndcgan_forward.11} parent=0 // pred_check_branch
    %80 = sbr.rel (0) target = $region21
  $region20: #{g_sndcgan_forward.11} parent=0 // pred_region
    _
  $region21: #{g_sndcgan_forward.11} parent=0 // pred_fallthru
    _
  // Predicated region
  $region22: #{g_sndcgan_forward.11} parent=0 // pred_check
    _
  $region23: #{g_sndcgan_forward.11} parent=0 // pred_check_branch
    %82 = sbr.rel (0) target = $region25
  $region24: #{g_sndcgan_forward.11} parent=0 // pred_region
    _
  $region25: #{g_sndcgan_forward.11} parent=0 // pred_fallthru
    _
  // Predicated region
  $region26: #{g_sndcgan_forward.11} parent=0 // pred_check
    _
  $region27: #{g_sndcgan_forward.11} parent=0 // pred_check_branch
    %84 = sbr.rel (0) target = $region29
  $region28: #{g_sndcgan_forward.11} parent=0 // pred_region
    _
  $region29: #{g_sndcgan_forward.11} parent=0 // pred_fallthru
    _

// kernel: g_sndcgan_forward.12
$region0: #{g_sndcgan_forward.12}
  #allocation0 [shape = 'u32[]', space=smem, size = 0x4, offset = 0x4, fixed_abs, tag = 'smem constant byte address 0x4 - core index']
  #allocation1 [shape = 'u32[72,128]{1,0:T(1,128)}', space=vmem, size = 0x9000, scoped, tag = 'internal scratch']
  %s0 = inlined_call_operand.vmem [shape: bf16[8,256], index: 0, kind: input, shape index: {}]
  %s1 = inlined_call_operand.vmem [shape: f32[1,256], index: 1, kind: input, shape index: {}]
  %s2 = inlined_call_operand.vmem [shape: f32[1,256], index: 2, kind: input, shape index: {}]
  %s3 = inlined_call_operand.vmem [shape: bf16[8,256], index: 3, kind: output, shape index: {}]
  %s4 = sld [smem:[#allocation0]]
  $region22: #{g_sndcgan_forward.12} parent=0
    _
  %s6 = ssub.s32 1, %s4
  %s7 = scalar_select 0, %s6, %s4
  // Predicated region
  $region2: #{g_sndcgan_forward.12} parent=0 // pred_check
    _
  $region3: #{g_sndcgan_forward.12} parent=0 // pred_check_branch
    %9 = sbr.rel (0) target = $region5
  $region4: #{g_sndcgan_forward.12} parent=0 // pred_region
    _
  $region5: #{g_sndcgan_forward.12} parent=0 // pred_fallthru
    _
  // Predicated region
  $region6: #{g_sndcgan_forward.12} parent=0 // pred_check
    _
  $region7: #{g_sndcgan_forward.12} parent=0 // pred_check_branch
    %11 = sbr.rel (0) target = $region9
  $region8: #{g_sndcgan_forward.12} parent=0 // pred_region
    _
  $region9: #{g_sndcgan_forward.12} parent=0 // pred_fallthru
    _
  // Predicated region
  $region10: #{g_sndcgan_forward.12} parent=0 // pred_check
    _
  $region11: #{g_sndcgan_forward.12} parent=0 // pred_check_branch
    %13 = sbr.rel (0) target = $region13
  $region12: #{g_sndcgan_forward.12} parent=0 // pred_region
    _
  $region13: #{g_sndcgan_forward.12} parent=0 // pred_fallthru
    _
  %v14 = vld [vmem:[%s0] sm:$0xff]
  %v15 = vunpack.c.l.bf16 %v14
  %v16 = vunpack.c.h.bf16 %v14
  %v17 = vld [vmem:[%s1] sm:$0x3]
  %v19 = vperm.slane %v17, 0
  %v20 = vperm.slane %v17, 1
  %v23 = vmul.f32 %v15, %v19
  %v24 = vmul.f32 %v16, %v20
  %v25 = vld [vmem:[%s2] sm:$0x3]
  %v27 = vperm.slane %v25, 0
  %v28 = vperm.slane %v25, 1
  %v31 = vadd.f32 %v23, %v27
  %v32 = vadd.f32 %v24, %v28
  %v33 = vmax.f32 %v31, 0.0
  %v34 = vmax.f32 %v32, 0.0
  %v35 = vpack.c.bf16 %v34, %v33
  %36 = vst [vmem:[%s3] sm:$0xff] %v35
  // Predicated region
  $region14: #{g_sndcgan_forward.12} parent=0 // pred_check
    _
  $region15: #{g_sndcgan_forward.12} parent=0 // pred_check_branch
    %38 = sbr.rel (0) target = $region17
  $region16: #{g_sndcgan_forward.12} parent=0 // pred_region
    _
  $region17: #{g_sndcgan_forward.12} parent=0 // pred_fallthru
    _
  // Predicated region
  $region18: #{g_sndcgan_forward.12} parent=0 // pred_check
    _
  $region19: #{g_sndcgan_forward.12} parent=0 // pred_check_branch
    %40 = sbr.rel (0) target = $region21
  $region20: #{g_sndcgan_forward.12} parent=0 // pred_region
    _
  $region21: #{g_sndcgan_forward.12} parent=0 // pred_fallthru
    _

// kernel: g_sndcgan_forward.10
$region0: #{g_sndcgan_forward.10}
  #allocation0 [shape = 'u32[]', space=smem, size = 0x4, offset = 0x4, fixed_abs, tag = 'smem constant byte address 0x4 - core index']
  #allocation1 [shape = 'u32[72,128]{1,0:T(1,128)}', space=vmem, size = 0x9000, scoped, tag = 'internal scratch']
  #allocation2 [shape = 'f32[8,256]{1,0:T(8,128)}', space=vmem, size = 0x2000, scoped, tag = 'scratch operand']
  %s0 = inlined_call_operand.vmem [shape: f32[1,128], index: 0, kind: input, shape index: {}]
  %s1 = inlined_call_operand.vmem [shape: f32[1,128], index: 1, kind: input, shape index: {}]
  %s2 = inlined_call_operand.vmem [shape: bf16[8,128], index: 2, kind: input, shape index: {}]
  %s3 = inlined_call_operand.vmem [shape: bf16[128,256], index: 3, kind: input, shape index: {}]
  %s4 = inlined_call_operand.vmem [shape: f32[1,256], index: 4, kind: input, shape index: {}]
  %s5 = inlined_call_operand.vmem [shape: bf16[8,256], index: 5, kind: output, shape index: {}]
  %s6 = sld [smem:[#allocation0]]
  $region38: #{g_sndcgan_forward.10} parent=0
    _
  %s8 = ssub.s32 1, %s6
  %s9 = scalar_select 0, %s8, %s6
  // Predicated region
  $region2: #{g_sndcgan_forward.10} parent=0 // pred_check
    _
  $region3: #{g_sndcgan_forward.10} parent=0 // pred_check_branch
    %11 = sbr.rel (0) target = $region5
  $region4: #{g_sndcgan_forward.10} parent=0 // pred_region
    _
  $region5: #{g_sndcgan_forward.10} parent=0 // pred_fallthru
    _
  // Predicated region
  $region6: #{g_sndcgan_forward.10} parent=0 // pred_check
    _
  $region7: #{g_sndcgan_forward.10} parent=0 // pred_check_branch
    %13 = sbr.rel (0) target = $region9
  $region8: #{g_sndcgan_forward.10} parent=0 // pred_region
    _
  $region9: #{g_sndcgan_forward.10} parent=0 // pred_fallthru
    _
  // Predicated region
  $region10: #{g_sndcgan_forward.10} parent=0 // pred_check
    _
  $region11: #{g_sndcgan_forward.10} parent=0 // pred_check_branch
    %15 = sbr.rel (0) target = $region13
  $region12: #{g_sndcgan_forward.10} parent=0 // pred_region
    _
  $region13: #{g_sndcgan_forward.10} parent=0 // pred_fallthru
    _
  // Predicated region
  $region14: #{g_sndcgan_forward.10} parent=0 // pred_check
    _
  $region15: #{g_sndcgan_forward.10} parent=0 // pred_check_branch
    %17 = sbr.rel (0) target = $region17
  $region16: #{g_sndcgan_forward.10} parent=0 // pred_region
    _
  $region17: #{g_sndcgan_forward.10} parent=0 // pred_fallthru
    _
  // Predicated region
  $region18: #{g_sndcgan_forward.10} parent=0 // pred_check
    _
  $region19: #{g_sndcgan_forward.10} parent=0 // pred_check_branch
    %19 = sbr.rel (0) target = $region21
  $region20: #{g_sndcgan_forward.10} parent=0 // pred_region
    _
  $region21: #{g_sndcgan_forward.10} parent=0 // pred_fallthru
    _
  %p20 = scmp.eq.s32.totalorder 0, 0
  // Predicated region
  $region22: #{g_sndcgan_forward.10} parent=0 // pred_check
    %p21 = pneg %p20
  $region23: #{g_sndcgan_forward.10} parent=0 // pred_check_branch
    %23 = sbr.rel (%p21) target = $region25
  $region24: #{g_sndcgan_forward.10} parent=0 // pred_region
    %24 = vst [vmem:[#allocation2] sm:$0xff] 0.0
    %25 = vst [vmem:[#allocation2 + $0x8] sm:$0xff] 0.0
  $region25: #{g_sndcgan_forward.10} parent=0 // pred_fallthru
    _
  %v26 = vld [vmem:[%s2] sm:$0xf]
  %v27 = vld [vmem:[#allocation2] sm:$0xff]
  %v28 = vld [vmem:[#allocation2 + $0x8] sm:$0xff]
  %v29 = vld [vmem:[%s3] sm:$0xff]
  %v30 = vld [vmem:[%s3 + $0x8] sm:$0xff]
  %v31 = vld [vmem:[%s3 + $0x10] sm:$0xff]
  %v32 = vld [vmem:[%s3 + $0x18] sm:$0xff]
  %v33 = vld [vmem:[%s3 + $0x20] sm:$0xff]
  %v34 = vld [vmem:[%s3 + $0x28] sm:$0xff]
  %v35 = vld [vmem:[%s3 + $0x30] sm:$0xff]
  %v36 = vld [vmem:[%s3 + $0x38] sm:$0xff]
  %v37 = vld [vmem:[%s3 + $0x40] sm:$0xff]
  %v38 = vld [vmem:[%s3 + $0x48] sm:$0xff]
  %v39 = vld [vmem:[%s3 + $0x50] sm:$0xff]
  %v40 = vld [vmem:[%s3 + $0x58] sm:$0xff]
  %v41 = vld [vmem:[%s3 + $0x60] sm:$0xff]
  %v42 = vld [vmem:[%s3 + $0x68] sm:$0xff]
  %v43 = vld [vmem:[%s3 + $0x70] sm:$0xff]
  %v44 = vld [vmem:[%s3 + $0x78] sm:$0xff]
  %v61 = vunpack.c.l.b16 %v29
  %v62 = vunpack.c.h.b16 %v29
  %v63 = vunpack.c.l.b16 %v30
  %v64 = vunpack.c.h.b16 %v30
  %v65 = vunpack.c.l.b16 %v31
  %v66 = vunpack.c.h.b16 %v31
  %v67 = vunpack.c.l.b16 %v32
  %v68 = vunpack.c.h.b16 %v32
  %v69 = vunpack.c.l.b16 %v33
  %v70 = vunpack.c.h.b16 %v33
  %v71 = vunpack.c.l.b16 %v34
  %v72 = vunpack.c.h.b16 %v34
  %v73 = vunpack.c.l.b16 %v35
  %v74 = vunpack.c.h.b16 %v35
  %v75 = vunpack.c.l.b16 %v36
  %v76 = vunpack.c.h.b16 %v36
  %v77 = vunpack.c.l.b16 %v37
  %v78 = vunpack.c.h.b16 %v37
  %v79 = vunpack.c.l.b16 %v38
  %v80 = vunpack.c.h.b16 %v38
  %v81 = vunpack.c.l.b16 %v39
  %v82 = vunpack.c.h.b16 %v39
  %v83 = vunpack.c.l.b16 %v40
  %v84 = vunpack.c.h.b16 %v40
  %v85 = vunpack.c.l.b16 %v41
  %v86 = vunpack.c.h.b16 %v41
  %v87 = vunpack.c.l.b16 %v42
  %v88 = vunpack.c.h.b16 %v42
  %v89 = vunpack.c.l.b16 %v43
  %v90 = vunpack.c.h.b16 %v43
  %v91 = vunpack.c.l.b16 %v44
  %v92 = vunpack.c.h.b16 %v44
  %v93 = vpack.c.b16 %v63, %v61
  %v94 = vpack.c.b16 %v64, %v62
  %v95 = vpack.c.b16 %v67, %v65
  %v96 = vpack.c.b16 %v68, %v66
  %v97 = vpack.c.b16 %v71, %v69
  %v98 = vpack.c.b16 %v72, %v70
  %v99 = vpack.c.b16 %v75, %v73
  %v100 = vpack.c.b16 %v76, %v74
  %v101 = vpack.c.b16 %v79, %v77
  %v102 = vpack.c.b16 %v80, %v78
  %v103 = vpack.c.b16 %v83, %v81
  %v104 = vpack.c.b16 %v84, %v82
  %v105 = vpack.c.b16 %v87, %v85
  %v106 = vpack.c.b16 %v88, %v86
  %v107 = vpack.c.b16 %v91, %v89
  %v108 = vpack.c.b16 %v92, %v90
  %125 = vmatpush.bf16.msra.mxu0 %v107
  %126 = vmatpush.bf16.msra.mxu0 %v105
  %127 = vmatpush.bf16.msra.mxu0 %v103
  %128 = vmatpush.bf16.msra.mxu0 %v101
  %129 = vmatpush.bf16.msra.mxu0 %v99
  %130 = vmatpush.bf16.msra.mxu0 %v97
  %131 = vmatpush.bf16.msra.mxu0 %v95
  %132 = vmatpush.bf16.msra.mxu0 %v93
  %133 = vmatmul.bf16.gmra.mxu0 %v26
  %v134 = vpop.f32.mrf.mxu0
  %v135 = vadd.f32 0.0, %v134
  %v136 = vpop.f32.mrf.mxu0
  %137 = vdwg.mxu0
  %138 = vmatpush.bf16.msra.mxu0 %v108
  %139 = vmatpush.bf16.msra.mxu0 %v106
  %140 = vmatpush.bf16.msra.mxu0 %v104
  %141 = vmatpush.bf16.msra.mxu0 %v102
  %142 = vmatpush.bf16.msra.mxu0 %v100
  %143 = vmatpush.bf16.msra.mxu0 %v98
  %144 = vmatpush.bf16.msra.mxu0 %v96
  %145 = vmatpush.bf16.msra.mxu0 %v94
  %146 = vmatmul.bf16.gmra.mxu0 %v26
  %v147 = vpop.f32.mrf.mxu0
  %v148 = vadd.f32 0.0, %v147
  %v149 = vpop.f32.mrf.mxu0
  %150 = vdwg.mxu0
  %v151 = vadd.f32 %v27, %v135
  %v152 = vadd.f32 %v28, %v148
  %153 = vst [vmem:[#allocation2] sm:$0xff] %v151
  %154 = vst [vmem:[#allocation2 + $0x8] sm:$0xff] %v152
  // Predicated region
  $region26: #{g_sndcgan_forward.10} parent=0 // pred_check
    %p155 = pneg %p20
  $region27: #{g_sndcgan_forward.10} parent=0 // pred_check_branch
    %157 = sbr.rel (%p155) target = $region29
  $region28: #{g_sndcgan_forward.10} parent=0 // pred_region
    %v158 = vld [vmem:[#allocation2] sm:$0xff]
    %v159 = vld [vmem:[#allocation2 + $0x8] sm:$0xff]
    %v160 = vld [vmem:[%s4] sm:$0x3]
    %v162 = vperm.slane %v160, 0
    %v163 = vperm.slane %v160, 1
    %v166 = vadd.f32 %v158, %v162
    %v167 = vadd.f32 %v159, %v163
    %v168 = vpack.c.bf16 %v167, %v166
    %169 = vst [vmem:[%s5] sm:$0xff] %v168
  $region29: #{g_sndcgan_forward.10} parent=0 // pred_fallthru
    _
  // Predicated region
  $region30: #{g_sndcgan_forward.10} parent=0 // pred_check
    _
  $region31: #{g_sndcgan_forward.10} parent=0 // pred_check_branch
    %171 = sbr.rel (0) target = $region33
  $region32: #{g_sndcgan_forward.10} parent=0 // pred_region
    _
  $region33: #{g_sndcgan_forward.10} parent=0 // pred_fallthru
    _
  // Predicated region
  $region34: #{g_sndcgan_forward.10} parent=0 // pred_check
    _
  $region35: #{g_sndcgan_forward.10} parent=0 // pred_check_branch
    %173 = sbr.rel (0) target = $region37
  $region36: #{g_sndcgan_forward.10} parent=0 // pred_region
    _
  $region37: #{g_sndcgan_forward.10} parent=0 // pred_fallthru
    _

// kernel: g_sndcgan_forward.13
$region0: #{g_sndcgan_forward.13}
  #allocation0 [shape = 'u32[]', space=smem, size = 0x4, offset = 0x4, fixed_abs, tag = 'smem constant byte address 0x4 - core index']
  #allocation1 [shape = 'u32[72,128]{1,0:T(1,128)}', space=vmem, size = 0x9000, scoped, tag = 'internal scratch']
  #allocation2 [shape = 'f32[8,256]{1,0:T(8,128)}', space=vmem, size = 0x2000, scoped, tag = 'scratch operand']
  %s0 = inlined_call_operand.vmem [shape: f32[1,128], index: 0, kind: input, shape index: {}]
  %s1 = inlined_call_operand.vmem [shape: f32[1,128], index: 1, kind: input, shape index: {}]
  %s2 = inlined_call_operand.vmem [shape: bf16[8,128], index: 2, kind: input, shape index: {}]
  %s3 = inlined_call_operand.vmem [shape: bf16[128,512], index: 3, kind: input, shape index: {}]
  %s4 = inlined_call_operand.vmem [shape: f32[1,512], index: 4, kind: input, shape index: {}]
  %s5 = inlined_call_operand.vmem [shape: bf16[8,512], index: 5, kind: output, shape index: {}]
  %s6 = sld [smem:[#allocation0]]
  $region99: #{g_sndcgan_forward.13} parent=0
    _
  %s8 = ssub.s32 1, %s6
  %s9 = scalar_select 0, %s8, %s6
  $region1: #{g_sndcgan_forward.13} parent=0
    #allocation3 [shape = 'u8[131072]{0}', space=vmem, size = 0x20000, scoped, tag = 'input window, operand 3']
    loop: start=0, step=1, limit=4
    $region2: #{g_sndcgan_forward.13} parent=1 // loop_pre_header
      _
    $region3: #{g_sndcgan_forward.13} parent=1 // loop_header
      %s11 = sphi 0, %s15
      %p12 = scmp.ge.s32.totalorder %s11, 4
      %s18 = sphi 0, %s37
      %s19 = sphi 0, %s33
      %s20 = sphi 0, %s29
      %s21 = sphi 0, %s18
      %s22 = sphi 0, %s19
      %s23 = sphi 0, %s20
      %s24 = sphi 0, %s21
      %s25 = sphi 0, %s22
      %s26 = sphi 0, %s23
      %s40 = sphi 0, %s42
      %s43 = sphi 0, %s40
      %s44 = sphi 0, %s43
      %s60 = sphi 0, %s44
      %s66 = sphi 0, %s68
      %s69 = sphi 0, %s66
      %s70 = sphi 0, %s69
      %s86 = sphi 0, %s70
      %s94 = sphi 0, %s96
      %s97 = sphi 0, %s94
      %s98 = sphi 0, %s97
      %s114 = sphi 0, %s98
      %s122 = sphi 0, %s124
      %s125 = sphi 0, %s122
      %s126 = sphi 0, %s125
      %s142 = sphi 0, %s126
      %s148 = sphi 0, %s150
      %s151 = sphi 0, %s148
      %s152 = sphi 0, %s151
      %s168 = sphi 0, %s152
      %s176 = sphi 0, %s178
      %s179 = sphi 0, %s176
      %s180 = sphi 0, %s179
      %s196 = sphi 0, %s180
    $region4: #{g_sndcgan_forward.13} parent=1 // loop_header_branch
      %14 = sbr.rel (%p12) target = $region8
    $region5: #{g_sndcgan_forward.13} parent=1 // loop_body
      %s16 = ssub.s32 %s11, 1
      %s17 = ssub.s32 %s11, 2
      %s27 = sadd.s32 1, %s20
      %p28 = scmp.ge.s32.totalorder %s27, 1
      %s29 = scalar_select %p28, 0, %s27
      %s30 = sadd.s32 1, %s19
      %s31 = scalar_select %p28, %s30, %s19
      %p32 = scmp.ge.s32.totalorder %s31, 2
      %s33 = scalar_select %p32, 0, %s31
      %s34 = sadd.s32 1, %s18
      %s35 = scalar_select %p32, %s34, %s18
      %p36 = scmp.ge.s32.totalorder %s35, 1
      %s37 = scalar_select %p36, 0, %s35
      %s38 = ssub.s32 %s20, %s29
      %p39 = scmp.eq.s32.totalorder %s38, 0
      %s41 = sadd.s32 %s40, 1
      %s42 = scalar_select %p39, %s40, %s41
      %p45 = pneg %p39
      %p46 = scmp.eq.s32.totalorder %s11, 1
      %p47 = por %p45, %p46
      %p48 = scmp.ne.s32.totalorder %s40, %s43
      %p49 = scmp.eq.s32.totalorder %s11, 0
      %p50 = por %p48, %p49
      %p51 = scmp.ne.s32.totalorder %s40, %s43
      %p52 = scmp.eq.s32.totalorder %s16, 1
      %p53 = por %p51, %p52
      %p54 = scmp.ne.s32.totalorder %s43, %s44
      %p55 = scmp.eq.s32.totalorder %s16, 0
      %p56 = por %p54, %p55
      %p57 = scmp.ne.s32.totalorder %s43, %s44
      %p58 = scmp.eq.s32.totalorder %s17, 1
      %p59 = por %p57, %p58
      %p61 = scmp.ne.s32.totalorder %s44, %s60
      %p62 = scmp.eq.s32.totalorder %s17, 0
      %p63 = por %p61, %p62
      %s64 = ssub.s32 %s20, %s29
      %p65 = scmp.eq.s32.totalorder %s64, 0
      %s67 = sadd.s32 %s66, 1
      %s68 = scalar_select %p65, %s66, %s67
      %p71 = pneg %p65
      %p72 = scmp.eq.s32.totalorder %s11, 1
      %p73 = por %p71, %p72
      %p74 = scmp.ne.s32.totalorder %s66, %s69
      %p75 = scmp.eq.s32.totalorder %s11, 0
      %p76 = por %p74, %p75
      %p77 = scmp.ne.s32.totalorder %s66, %s69
      %p78 = scmp.eq.s32.totalorder %s16, 1
      %p79 = por %p77, %p78
      %p80 = scmp.ne.s32.totalorder %s69, %s70
      %p81 = scmp.eq.s32.totalorder %s16, 0
      %p82 = por %p80, %p81
      %p83 = scmp.ne.s32.totalorder %s69, %s70
      %p84 = scmp.eq.s32.totalorder %s17, 1
      %p85 = por %p83, %p84
      %p87 = scmp.ne.s32.totalorder %s70, %s86
      %p88 = scmp.eq.s32.totalorder %s17, 0
      %p89 = por %p87, %p88
      %s90 = ssub.s32 %s18, %s37
      %s91 = ssub.s32 %s20, %s29
      %s92 = sor.u32 %s90, %s91
      %p93 = scmp.eq.s32.totalorder %s92, 0
      %s95 = sadd.s32 %s94, 1
      %s96 = scalar_select %p93, %s94, %s95
      %p99 = pneg %p93
      %p100 = scmp.eq.s32.totalorder %s11, 1
      %p101 = por %p99, %p100
      %p102 = scmp.ne.s32.totalorder %s94, %s97
      %p103 = scmp.eq.s32.totalorder %s11, 0
      %p104 = por %p102, %p103
      %p105 = scmp.ne.s32.totalorder %s94, %s97
      %p106 = scmp.eq.s32.totalorder %s16, 1
      %p107 = por %p105, %p106
      %p108 = scmp.ne.s32.totalorder %s97, %s98
      %p109 = scmp.eq.s32.totalorder %s16, 0
      %p110 = por %p108, %p109
      %p111 = scmp.ne.s32.totalorder %s97, %s98
      %p112 = scmp.eq.s32.totalorder %s17, 1
      %p113 = por %p111, %p112
      %p115 = scmp.ne.s32.totalorder %s98, %s114
      %p116 = scmp.eq.s32.totalorder %s17, 0
      %p117 = por %p115, %p116
      %s118 = ssub.s32 %s20, %s29
      %s119 = ssub.s32 %s19, %s33
      %s120 = sor.u32 %s118, %s119
      %p121 = scmp.eq.s32.totalorder %s120, 0
      %s123 = sadd.s32 %s122, 1
      %s124 = scalar_select %p121, %s122, %s123
      %p127 = pneg %p121
      %p128 = scmp.eq.s32.totalorder %s11, 1
      %p129 = por %p127, %p128
      %p130 = scmp.ne.s32.totalorder %s122, %s125
      %p131 = scmp.eq.s32.totalorder %s11, 0
      %p132 = por %p130, %p131
      %p133 = scmp.ne.s32.totalorder %s122, %s125
      %p134 = scmp.eq.s32.totalorder %s16, 1
      %p135 = por %p133, %p134
      %p136 = scmp.ne.s32.totalorder %s125, %s126
      %p137 = scmp.eq.s32.totalorder %s16, 0
      %p138 = por %p136, %p137
      %p139 = scmp.ne.s32.totalorder %s125, %s126
      %p140 = scmp.eq.s32.totalorder %s17, 1
      %p141 = por %p139, %p140
      %p143 = scmp.ne.s32.totalorder %s126, %s142
      %p144 = scmp.eq.s32.totalorder %s17, 0
      %p145 = por %p143, %p144
      %s146 = ssub.s32 %s19, %s33
      %p147 = scmp.eq.s32.totalorder %s146, 0
      %s149 = sadd.s32 %s148, 1
      %s150 = scalar_select %p147, %s148, %s149
      %p153 = pneg %p147
      %p154 = scmp.eq.s32.totalorder %s11, 1
      %p155 = por %p153, %p154
      %p156 = scmp.ne.s32.totalorder %s148, %s151
      %p157 = scmp.eq.s32.totalorder %s11, 0
      %p158 = por %p156, %p157
      %p159 = scmp.ne.s32.totalorder %s148, %s151
      %p160 = scmp.eq.s32.totalorder %s16, 1
      %p161 = por %p159, %p160
      %p162 = scmp.ne.s32.totalorder %s151, %s152
      %p163 = scmp.eq.s32.totalorder %s16, 0
      %p164 = por %p162, %p163
      %p165 = scmp.ne.s32.totalorder %s151, %s152
      %p166 = scmp.eq.s32.totalorder %s17, 1
      %p167 = por %p165, %p166
      %p169 = scmp.ne.s32.totalorder %s152, %s168
      %p170 = scmp.eq.s32.totalorder %s17, 0
      %p171 = por %p169, %p170
      %s172 = ssub.s32 %s18, %s37
      %s173 = ssub.s32 %s19, %s33
      %s174 = sor.u32 %s172, %s173
      %p175 = scmp.eq.s32.totalorder %s174, 0
      %s177 = sadd.s32 %s176, 1
      %s178 = scalar_select %p175, %s176, %s177
      %p181 = pneg %p175
      %p182 = scmp.eq.s32.totalorder %s11, 1
      %p183 = por %p181, %p182
      %p184 = scmp.ne.s32.totalorder %s176, %s179
      %p185 = scmp.eq.s32.totalorder %s11, 0
      %p186 = por %p184, %p185
      %p187 = scmp.ne.s32.totalorder %s176, %s179
      %p188 = scmp.eq.s32.totalorder %s16, 1
      %p189 = por %p187, %p188
      %p190 = scmp.ne.s32.totalorder %s179, %s180
      %p191 = scmp.eq.s32.totalorder %s16, 0
      %p192 = por %p190, %p191
      %p193 = scmp.ne.s32.totalorder %s179, %s180
      %p194 = scmp.eq.s32.totalorder %s17, 1
      %p195 = por %p193, %p194
      %p197 = scmp.ne.s32.totalorder %s180, %s196
      %p198 = scmp.eq.s32.totalorder %s17, 0
      %p199 = por %p197, %p198
      %p200 = scmp.le.s32.totalorder 1, %s11
      %p201 = scmp.lt.s32.totalorder %s11, 3
      %p202 = pnand %p200, %p201
      %p203 = pneg %p202
      // Predicated region
      $region9: #{g_sndcgan_forward.13} parent=5 // pred_check
        _
      $region10: #{g_sndcgan_forward.13} parent=5 // pred_check_branch
        %205 = sbr.rel (%p202) target = $region12
      $region11: #{g_sndcgan_forward.13} parent=5 // pred_region
        %s206 = ssub.s32 %s11, 1
        // Predicated region
        $region13: #{g_sndcgan_forward.13} parent=11 // pred_check
          %p207 = pneg %p56
        $region14: #{g_sndcgan_forward.13} parent=11 // pred_check_branch
          %209 = sbr.rel (%p207) target = $region16
        $region15: #{g_sndcgan_forward.13} parent=11 // pred_region
          %p210 = scmp.lt.s32.totalorder %s23, 0
          %s211 = scalar_select %p210, %s23, 0
          %s212 = scalar_lea.vmem %s0, %s211
        $region16: #{g_sndcgan_forward.13} parent=11 // pred_fallthru
          _
        // Predicated region
        $region17: #{g_sndcgan_forward.13} parent=11 // pred_check
          %p213 = pneg %p82
        $region18: #{g_sndcgan_forward.13} parent=11 // pred_check_branch
          %215 = sbr.rel (%p213) target = $region20
        $region19: #{g_sndcgan_forward.13} parent=11 // pred_region
          %p216 = scmp.lt.s32.totalorder %s23, 0
          %s217 = scalar_select %p216, %s23, 0
          %s218 = scalar_lea.vmem %s1, %s217
        $region20: #{g_sndcgan_forward.13} parent=11 // pred_fallthru
          _
        // Predicated region
        $region21: #{g_sndcgan_forward.13} parent=11 // pred_check
          %p219 = pneg %p110
        $region22: #{g_sndcgan_forward.13} parent=11 // pred_check_branch
          %221 = sbr.rel (%p219) target = $region24
        $region23: #{g_sndcgan_forward.13} parent=11 // pred_region
          %p222 = scmp.lt.s32.totalorder %s21, 0
          %s223 = scalar_select %p222, %s21, 0
          %p224 = scmp.lt.s32.totalorder %s23, 0
          %s225 = scalar_select %p224, %s23, 0
          %s226 = sadd.s32 %s225, %s223
          %s227 = smul.addr %s226, 4
          %s228 = scalar_lea.vmem %s2, %s227
        $region24: #{g_sndcgan_forward.13} parent=11 // pred_fallthru
          _
      $region12: #{g_sndcgan_forward.13} parent=5 // pred_fallthru
        _
      %p229 = scmp.lt.s32.totalorder %s11, 2
      // Predicated region
      $region25: #{g_sndcgan_forward.13} parent=5 // pred_check
        %p230 = pneg %p229
      $region26: #{g_sndcgan_forward.13} parent=5 // pred_check_branch
        %232 = sbr.rel (%p230) target = $region28
      $region27: #{g_sndcgan_forward.13} parent=5 // pred_region
        // Predicated region
        $region29: #{g_sndcgan_forward.13} parent=27 // pred_check
          %p233 = pneg %p132
        $region30: #{g_sndcgan_forward.13} parent=27 // pred_check_branch
          %235 = sbr.rel (%p233) target = $region32
        $region31: #{g_sndcgan_forward.13} parent=27 // pred_region
          %s236 = sand.u32 %s122, 1
          %s237 = sand.u32 %s122, 1
          %s238 = smul.addr %s237, 128
          %s239 = scalar_lea.vmem [#allocation3], %s238
          %s240 = smul.u32 16, %s20
          %s241 = smul.u32 2, %s19
          %s242 = smul.addr %s240, 4
          %s243 = sadd.s32 %s241, %s242
          %s244 = smul.addr %s243, 4
          %s245 = scalar_lea.vmem %s3, %s244
          // Predicated region
          $region33: #{g_sndcgan_forward.13} parent=31 // pred_check
            _
          $region34: #{g_sndcgan_forward.13} parent=31 // pred_check_branch
            %247 = sbr.rel (0) target = $region36
          $region35: #{g_sndcgan_forward.13} parent=31 // pred_region
            // Predicated region
            $region37: #{g_sndcgan_forward.13} parent=35 // pred_check
              _
            $region38: #{g_sndcgan_forward.13} parent=35 // pred_check_branch
              %249 = sbr.rel (0) target = $region40
            $region39: #{g_sndcgan_forward.13} parent=35 // pred_region
              // Predicated region
              $region52: #{g_sndcgan_forward.13} parent=39 // pred_check
                _
              $region53: #{g_sndcgan_forward.13} parent=39 // pred_check_branch
                %295 = sbr.rel (0) target = $region55
              $region54: #{g_sndcgan_forward.13} parent=39 // pred_region
                loop: start=0, step=1, limit=1
                $region56: #{g_sndcgan_forward.13} parent=54 // loop_pre_header
                  _
                $region57: #{g_sndcgan_forward.13} parent=54 // loop_header
                  %s297 = sphi 0, %s301
                  %p298 = scmp.ge.s32.totalorder %s297, 1
                  %s302 = sphi %s245, %s245
                  %s303 = sphi %s239, %s239
                $region58: #{g_sndcgan_forward.13} parent=54 // loop_header_branch
                  %300 = sbr.rel (%p298) target = $region62
                $region59: #{g_sndcgan_forward.13} parent=54 // loop_body
                  %v304 = vld [vmem:[%s302] sm:$0xff]
                  %305 = vst [vmem:[%s303] sm:$0xff] %v304
                  %v306 = vld [vmem:[%s302 + $0x10] sm:$0xff]
                  %307 = vst [vmem:[%s303 + $0x8] sm:$0xff] %v306
                  %v308 = vld [vmem:[%s302 + $0x20] sm:$0xff]
                  %309 = vst [vmem:[%s303 + $0x10] sm:$0xff] %v308
                  %v310 = vld [vmem:[%s302 + $0x30] sm:$0xff]
                  %311 = vst [vmem:[%s303 + $0x18] sm:$0xff] %v310
                  %v312 = vld [vmem:[%s302 + $0x40] sm:$0xff]
                  %313 = vst [vmem:[%s303 + $0x20] sm:$0xff] %v312
                  %v314 = vld [vmem:[%s302 + $0x50] sm:$0xff]
                  %315 = vst [vmem:[%s303 + $0x28] sm:$0xff] %v314
                  %v316 = vld [vmem:[%s302 + $0x60] sm:$0xff]
                  %317 = vst [vmem:[%s303 + $0x30] sm:$0xff] %v316
                  %v318 = vld [vmem:[%s302 + $0x70] sm:$0xff]
                  %319 = vst [vmem:[%s303 + $0x38] sm:$0xff] %v318
                  %v320 = vld [vmem:[%s302 + $0x80] sm:$0xff]
                  %321 = vst [vmem:[%s303 + $0x40] sm:$0xff] %v320
                  %v322 = vld [vmem:[%s302 + $0x90] sm:$0xff]
                  %323 = vst [vmem:[%s303 + $0x48] sm:$0xff] %v322
                  %v324 = vld [vmem:[%s302 + $0xa0] sm:$0xff]
                  %325 = vst [vmem:[%s303 + $0x50] sm:$0xff] %v324
                  %v326 = vld [vmem:[%s302 + $0xb0] sm:$0xff]
                  %327 = vst [vmem:[%s303 + $0x58] sm:$0xff] %v326
                  %v328 = vld [vmem:[%s302 + $0xc0] sm:$0xff]
                  %329 = vst [vmem:[%s303 + $0x60] sm:$0xff] %v328
                  %v330 = vld [vmem:[%s302 + $0xd0] sm:$0xff]
                  %331 = vst [vmem:[%s303 + $0x68] sm:$0xff] %v330
                  %v332 = vld [vmem:[%s302 + $0xe0] sm:$0xff]
                  %333 = vst [vmem:[%s303 + $0x70] sm:$0xff] %v332
                  %v334 = vld [vmem:[%s302 + $0xf0] sm:$0xff]
                  %335 = vst [vmem:[%s303 + $0x78] sm:$0xff] %v334
                $region60: #{g_sndcgan_forward.13} parent=54 // loop_footer
                  %s301 = sadd.s32 1, %s297
                $region61: #{g_sndcgan_forward.13} parent=54 // loop_footer_branch
                  %296 = sbr.rel target = $region57
                $region62: #{g_sndcgan_forward.13} parent=54 // loop_exit
                  _
              $region55: #{g_sndcgan_forward.13} parent=39 // pred_fallthru
                _
              // Predicated region
              $region63: #{g_sndcgan_forward.13} parent=39 // pred_check
                _
              $region64: #{g_sndcgan_forward.13} parent=39 // pred_check_branch
                %337 = sbr.rel target = $region66
              $region65: #{g_sndcgan_forward.13} parent=39 // pred_region
                _
              $region66: #{g_sndcgan_forward.13} parent=39 // pred_fallthru
                _
            $region40: #{g_sndcgan_forward.13} parent=35 // pred_fallthru
              _
            // Predicated region
            $region41: #{g_sndcgan_forward.13} parent=35 // pred_check
              _
            $region42: #{g_sndcgan_forward.13} parent=35 // pred_check_branch
              %251 = sbr.rel target = $region44
            $region43: #{g_sndcgan_forward.13} parent=35 // pred_region
              %s253 = ssub.s32 256, 1
              loop: start=0, step=1, limit=1
              $region45: #{g_sndcgan_forward.13} parent=43 // loop_pre_header
                _
              $region46: #{g_sndcgan_forward.13} parent=43 // loop_header
                %s255 = sphi 0, %s259
                %p256 = scmp.ge.s32.totalorder %s255, 1
                %s260 = sphi %s245, %s245
                %s261 = sphi %s239, %s239
              $region47: #{g_sndcgan_forward.13} parent=43 // loop_header_branch
                %258 = sbr.rel (%p256) target = $region51
              $region48: #{g_sndcgan_forward.13} parent=43 // loop_body
                %v262 = vld [vmem:[%s260] sm:%s253]
                %263 = vst [vmem:[%s261] sm:%s253] %v262
                %v264 = vld [vmem:[%s260 + $0x10] sm:%s253]
                %265 = vst [vmem:[%s261 + $0x8] sm:%s253] %v264
                %v266 = vld [vmem:[%s260 + $0x20] sm:%s253]
                %267 = vst [vmem:[%s261 + $0x10] sm:%s253] %v266
                %v268 = vld [vmem:[%s260 + $0x30] sm:%s253]
                %269 = vst [vmem:[%s261 + $0x18] sm:%s253] %v268
                %v270 = vld [vmem:[%s260 + $0x40] sm:%s253]
                %271 = vst [vmem:[%s261 + $0x20] sm:%s253] %v270
                %v272 = vld [vmem:[%s260 + $0x50] sm:%s253]
                %273 = vst [vmem:[%s261 + $0x28] sm:%s253] %v272
                %v274 = vld [vmem:[%s260 + $0x60] sm:%s253]
                %275 = vst [vmem:[%s261 + $0x30] sm:%s253] %v274
                %v276 = vld [vmem:[%s260 + $0x70] sm:%s253]
                %277 = vst [vmem:[%s261 + $0x38] sm:%s253] %v276
                %v278 = vld [vmem:[%s260 + $0x80] sm:%s253]
                %279 = vst [vmem:[%s261 + $0x40] sm:%s253] %v278
                %v280 = vld [vmem:[%s260 + $0x90] sm:%s253]
                %281 = vst [vmem:[%s261 + $0x48] sm:%s253] %v280
                %v282 = vld [vmem:[%s260 + $0xa0] sm:%s253]
                %283 = vst [vmem:[%s261 + $0x50] sm:%s253] %v282
                %v284 = vld [vmem:[%s260 + $0xb0] sm:%s253]
                %285 = vst [vmem:[%s261 + $0x58] sm:%s253] %v284
                %v286 = vld [vmem:[%s260 + $0xc0] sm:%s253]
                %287 = vst [vmem:[%s261 + $0x60] sm:%s253] %v286
                %v288 = vld [vmem:[%s260 + $0xd0] sm:%s253]
                %289 = vst [vmem:[%s261 + $0x68] sm:%s253] %v288
                %v290 = vld [vmem:[%s260 + $0xe0] sm:%s253]
                %291 = vst [vmem:[%s261 + $0x70] sm:%s253] %v290
                %v292 = vld [vmem:[%s260 + $0xf0] sm:%s253]
                %293 = vst [vmem:[%s261 + $0x78] sm:%s253] %v292
              $region49: #{g_sndcgan_forward.13} parent=43 // loop_footer
                %s259 = sadd.s32 1, %s255
              $region50: #{g_sndcgan_forward.13} parent=43 // loop_footer_branch
                %254 = sbr.rel target = $region46
              $region51: #{g_sndcgan_forward.13} parent=43 // loop_exit
                _
            $region44: #{g_sndcgan_forward.13} parent=35 // pred_fallthru
              _
          $region36: #{g_sndcgan_forward.13} parent=31 // pred_fallthru
            _
          %338 = vnop
        $region32: #{g_sndcgan_forward.13} parent=27 // pred_fallthru
          _
        // Predicated region
        $region67: #{g_sndcgan_forward.13} parent=27 // pred_check
          %p339 = pneg %p158
        $region68: #{g_sndcgan_forward.13} parent=27 // pred_check_branch
          %341 = sbr.rel (%p339) target = $region70
        $region69: #{g_sndcgan_forward.13} parent=27 // pred_region
          %s342 = smul.u32 2, %s19
          %p343 = scmp.lt.s32.totalorder %s342, 3
          %s344 = scalar_select %p343, %s342, 3
          %s345 = scalar_lea.vmem %s4, %s344
          %s346 = smul.u32 2, %s19
        $region70: #{g_sndcgan_forward.13} parent=27 // pred_fallthru
          _
      $region28: #{g_sndcgan_forward.13} parent=5 // pred_fallthru
        _
      %p347 = scmp.le.s32.totalorder 1, %s11
      %p348 = scmp.lt.s32.totalorder %s11, 3
      %p349 = pnand %p347, %p348
      %p350 = pneg %p349
      // Predicated region
      $region71: #{g_sndcgan_forward.13} parent=5 // pred_check
        _
      $region72: #{g_sndcgan_forward.13} parent=5 // pred_check_branch
        %352 = sbr.rel (%p349) target = $region74
      $region73: #{g_sndcgan_forward.13} parent=5 // pred_region
        %s353 = ssub.s32 %s11, 1
        %s354 = sand.u32 %s125, 1
        %s355 = sand.u32 %s125, 1
        %s356 = smul.addr %s355, 128
        %s357 = scalar_lea.vmem [#allocation3], %s356
        // Predicated region
        $region75: #{g_sndcgan_forward.13} parent=73 // pred_check
          %p358 = pneg %p138
        $region76: #{g_sndcgan_forward.13} parent=73 // pred_check_branch
          %360 = sbr.rel (%p358) target = $region78
        $region77: #{g_sndcgan_forward.13} parent=73 // pred_region
          _
        $region78: #{g_sndcgan_forward.13} parent=73 // pred_fallthru
          _
        %p361 = scmp.lt.s32.totalorder %s23, 0
        %s362 = scalar_select %p361, %s23, 0
        %s363 = scalar_lea.vmem %s0, %s362
        %p364 = pneg %p56
        %p365 = pneg %p53
        %p366 = scmp.lt.s32.totalorder %s23, 0
        %s367 = scalar_select %p366, %s23, 0
        %s368 = scalar_lea.vmem %s1, %s367
        %p369 = pneg %p82
        %p370 = pneg %p79
        %p371 = scmp.lt.s32.totalorder %s21, 0
        %s372 = scalar_select %p371, %s21, 0
        %p373 = scmp.lt.s32.totalorder %s23, 0
        %s374 = scalar_select %p373, %s23, 0
        %s375 = sadd.s32 %s374, %s372
        %s376 = smul.addr %s375, 4
        %s377 = scalar_lea.vmem %s2, %s376
        %p378 = pneg %p110
        %p379 = pneg %p107
        %s380 = sand.u32 %s125, 1
        %s381 = sand.u32 %s125, 1
        %s382 = smul.addr %s381, 128
        %s383 = scalar_lea.vmem [#allocation3], %s382
        %p384 = pneg %p138
        %p385 = pneg %p135
        %s386 = smul.u32 2, %s22
        %p387 = scmp.lt.s32.totalorder %s386, 3
        %s388 = scalar_select %p387, %s386, 3
        %s389 = scalar_lea.vmem %s4, %s388
        %p390 = pneg %p164
        %p391 = pneg %p161
        %p392 = pneg %p192
        %p393 = pneg %p189
        %s394 = smul.u32 2, %s22
        %p395 = scmp.lt.s32.totalorder %s21, 0
        %s396 = scalar_select %p395, %s21, 0
        %p397 = scmp.lt.s32.totalorder %s394, 3
        %s398 = scalar_select %p397, %s394, 3
        %s399 = smul.addr %s396, 4
        %s400 = sadd.s32 %s398, %s399
        %s401 = smul.addr %s400, 4
        %s402 = scalar_lea.vmem %s5, %s401
        %p403 = scmp.lt.s32.totalorder %s23, 0
        %s404 = scalar_select %p403, %s23, 0
        %s405 = scalar_lea.vmem %s0, %s404
        %p406 = scmp.lt.s32.totalorder %s23, 0
        %s407 = scalar_select %p406, %s23, 0
        %s408 = scalar_lea.vmem %s1, %s407
        %p409 = scmp.lt.s32.totalorder %s21, 0
        %s410 = scalar_select %p409, %s21, 0
        %p411 = scmp.lt.s32.totalorder %s23, 0
        %s412 = scalar_select %p411, %s23, 0
        %s413 = sadd.s32 %s412, %s410
        %s414 = smul.addr %s413, 4
        %s415 = scalar_lea.vmem %s2, %s414
        %s416 = smul.u32 16, %s23
        %s417 = smul.u32 2, %s22
        %s418 = smul.u32 2, %s22
        %p419 = scmp.lt.s32.totalorder %s418, 3
        %s420 = scalar_select %p419, %s418, 3
        %s421 = scalar_lea.vmem %s4, %s420
        %s422 = smul.u32 2, %s22
        %s423 = smul.u32 2, %s22
        %p424 = scmp.lt.s32.totalorder %s21, 0
        %s425 = scalar_select %p424, %s21, 0
        %p426 = scmp.lt.s32.totalorder %s423, 3
        %s427 = scalar_select %p426, %s423, 3
        %s428 = smul.addr %s425, 4
        %s429 = sadd.s32 %s427, %s428
        %s430 = smul.addr %s429, 4
        %s431 = scalar_lea.vmem %s5, %s430
        %s432 = smul.u32 2, %s22
        %p433 = scmp.eq.s32.totalorder %s23, 0
        // Predicated region
        $region79: #{g_sndcgan_forward.13} parent=73 // pred_check
          %p434 = pneg %p433
        $region80: #{g_sndcgan_forward.13} parent=73 // pred_check_branch
          %436 = sbr.rel (%p434) target = $region82
        $region81: #{g_sndcgan_forward.13} parent=73 // pred_region
          %437 = vst [vmem:[#allocation2] sm:$0xff] 0.0
          %438 = vst [vmem:[#allocation2 + $0x8] sm:$0xff] 0.0
        $region82: #{g_sndcgan_forward.13} parent=73 // pred_fallthru
          _
        %v439 = vld [vmem:[%s415] sm:$0xf]
        %v440 = vld [vmem:[#allocation2] sm:$0xff]
        %v441 = vld [vmem:[#allocation2 + $0x8] sm:$0xff]
        %v442 = vld [vmem:[%s357] sm:$0xff]
        %v443 = vld [vmem:[%s357 + $0x8] sm:$0xff]
        %v444 = vld [vmem:[%s357 + $0x10] sm:$0xff]
        %v445 = vld [vmem:[%s357 + $0x18] sm:$0xff]
        %v446 = vld [vmem:[%s357 + $0x20] sm:$0xff]
        %v447 = vld [vmem:[%s357 + $0x28] sm:$0xff]
        %v448 = vld [vmem:[%s357 + $0x30] sm:$0xff]
        %v449 = vld [vmem:[%s357 + $0x38] sm:$0xff]
        %v450 = vld [vmem:[%s357 + $0x40] sm:$0xff]
        %v451 = vld [vmem:[%s357 + $0x48] sm:$0xff]
        %v452 = vld [vmem:[%s357 + $0x50] sm:$0xff]
        %v453 = vld [vmem:[%s357 + $0x58] sm:$0xff]
        %v454 = vld [vmem:[%s357 + $0x60] sm:$0xff]
        %v455 = vld [vmem:[%s357 + $0x68] sm:$0xff]
        %v456 = vld [vmem:[%s357 + $0x70] sm:$0xff]
        %v457 = vld [vmem:[%s357 + $0x78] sm:$0xff]
        %v474 = vunpack.c.l.b16 %v442
        %v475 = vunpack.c.h.b16 %v442
        %v476 = vunpack.c.l.b16 %v443
        %v477 = vunpack.c.h.b16 %v443
        %v478 = vunpack.c.l.b16 %v444
        %v479 = vunpack.c.h.b16 %v444
        %v480 = vunpack.c.l.b16 %v445
        %v481 = vunpack.c.h.b16 %v445
        %v482 = vunpack.c.l.b16 %v446
        %v483 = vunpack.c.h.b16 %v446
        %v484 = vunpack.c.l.b16 %v447
        %v485 = vunpack.c.h.b16 %v447
        %v486 = vunpack.c.l.b16 %v448
        %v487 = vunpack.c.h.b16 %v448
        %v488 = vunpack.c.l.b16 %v449
        %v489 = vunpack.c.h.b16 %v449
        %v490 = vunpack.c.l.b16 %v450
        %v491 = vunpack.c.h.b16 %v450
        %v492 = vunpack.c.l.b16 %v451
        %v493 = vunpack.c.h.b16 %v451
        %v494 = vunpack.c.l.b16 %v452
        %v495 = vunpack.c.h.b16 %v452
        %v496 = vunpack.c.l.b16 %v453
        %v497 = vunpack.c.h.b16 %v453
        %v498 = vunpack.c.l.b16 %v454
        %v499 = vunpack.c.h.b16 %v454
        %v500 = vunpack.c.l.b16 %v455
        %v501 = vunpack.c.h.b16 %v455
        %v502 = vunpack.c.l.b16 %v456
        %v503 = vunpack.c.h.b16 %v456
        %v504 = vunpack.c.l.b16 %v457
        %v505 = vunpack.c.h.b16 %v457
        %v506 = vpack.c.b16 %v476, %v474
        %v507 = vpack.c.b16 %v477, %v475
        %v508 = vpack.c.b16 %v480, %v478
        %v509 = vpack.c.b16 %v481, %v479
        %v510 = vpack.c.b16 %v484, %v482
        %v511 = vpack.c.b16 %v485, %v483
        %v512 = vpack.c.b16 %v488, %v486
        %v513 = vpack.c.b16 %v489, %v487
        %v514 = vpack.c.b16 %v492, %v490
        %v515 = vpack.c.b16 %v493, %v491
        %v516 = vpack.c.b16 %v496, %v494
        %v517 = vpack.c.b16 %v497, %v495
        %v518 = vpack.c.b16 %v500, %v498
        %v519 = vpack.c.b16 %v501, %v499
        %v520 = vpack.c.b16 %v504, %v502
        %v521 = vpack.c.b16 %v505, %v503
        %538 = vmatpush.bf16.msra.mxu0 %v520
        %539 = vmatpush.bf16.msra.mxu0 %v518
        %540 = vmatpush.bf16.msra.mxu0 %v516
        %541 = vmatpush.bf16.msra.mxu0 %v514
        %542 = vmatpush.bf16.msra.mxu0 %v512
        %543 = vmatpush.bf16.msra.mxu0 %v510
        %544 = vmatpush.bf16.msra.mxu0 %v508
        %545 = vmatpush.bf16.msra.mxu0 %v506
        %546 = vmatmul.bf16.gmra.mxu0 %v439
        %v547 = vpop.f32.mrf.mxu0
        %v548 = vadd.f32 0.0, %v547
        %v549 = vpop.f32.mrf.mxu0
        %550 = vdwg.mxu0
        %551 = vmatpush.bf16.msra.mxu0 %v521
        %552 = vmatpush.bf16.msra.mxu0 %v519
        %553 = vmatpush.bf16.msra.mxu0 %v517
        %554 = vmatpush.bf16.msra.mxu0 %v515
        %555 = vmatpush.bf16.msra.mxu0 %v513
        %556 = vmatpush.bf16.msra.mxu0 %v511
        %557 = vmatpush.bf16.msra.mxu0 %v509
        %558 = vmatpush.bf16.msra.mxu0 %v507
        %559 = vmatmul.bf16.gmra.mxu0 %v439
        %v560 = vpop.f32.mrf.mxu0
        %v561 = vadd.f32 0.0, %v560
        %v562 = vpop.f32.mrf.mxu0
        %563 = vdwg.mxu0
        %v564 = vadd.f32 %v440, %v548
        %v565 = vadd.f32 %v441, %v561
        %566 = vst [vmem:[#allocation2] sm:$0xff] %v564
        %567 = vst [vmem:[#allocation2 + $0x8] sm:$0xff] %v565
        // Predicated region
        $region83: #{g_sndcgan_forward.13} parent=73 // pred_check
          %p568 = pneg %p433
        $region84: #{g_sndcgan_forward.13} parent=73 // pred_check_branch
          %570 = sbr.rel (%p568) target = $region86
        $region85: #{g_sndcgan_forward.13} parent=73 // pred_region
          %v571 = vld [vmem:[#allocation2] sm:$0xff]
          %v572 = vld [vmem:[#allocation2 + $0x8] sm:$0xff]
          %v573 = vld [vmem:[%s421] sm:$0x3]
          %v575 = vperm.slane %v573, 0
          %v576 = vperm.slane %v573, 1
          %v579 = vadd.f32 %v571, %v575
          %v580 = vadd.f32 %v572, %v576
          %v581 = vpack.c.bf16 %v580, %v579
          %582 = vst [vmem:[%s431] sm:$0xff] %v581
        $region86: #{g_sndcgan_forward.13} parent=73 // pred_fallthru
          _
        %s583 = smul.u32 2, %s22
        %p584 = scmp.lt.s32.totalorder %s21, 0
        %s585 = scalar_select %p584, %s21, 0
        %p586 = scmp.lt.s32.totalorder %s583, 3
        %s587 = scalar_select %p586, %s583, 3
        %s588 = smul.addr %s585, 4
        %s589 = sadd.s32 %s587, %s588
        %s590 = smul.addr %s589, 4
        %s591 = scalar_lea.vmem %s5, %s590
        // Predicated region
        $region87: #{g_sndcgan_forward.13} parent=73 // pred_check
          %p592 = pneg %p189
        $region88: #{g_sndcgan_forward.13} parent=73 // pred_check_branch
          %594 = sbr.rel (%p592) target = $region90
        $region89: #{g_sndcgan_forward.13} parent=73 // pred_region
          %s595 = smul.u32 2, %s22
        $region90: #{g_sndcgan_forward.13} parent=73 // pred_fallthru
          _
      $region74: #{g_sndcgan_forward.13} parent=5 // pred_fallthru
        _
      %p596 = scmp.le.s32.totalorder 2, %s11
      // Predicated region
      $region91: #{g_sndcgan_forward.13} parent=5 // pred_check
        %p597 = pneg %p596
      $region92: #{g_sndcgan_forward.13} parent=5 // pred_check_branch
        %599 = sbr.rel (%p597) target = $region94
      $region93: #{g_sndcgan_forward.13} parent=5 // pred_region
        %s600 = ssub.s32 %s11, 2
        // Predicated region
        $region95: #{g_sndcgan_forward.13} parent=93 // pred_check
          %p601 = pneg %p195
        $region96: #{g_sndcgan_forward.13} parent=93 // pred_check_branch
          %603 = sbr.rel (%p601) target = $region98
        $region97: #{g_sndcgan_forward.13} parent=93 // pred_region
          %s604 = smul.u32 2, %s25
          %p605 = scmp.lt.s32.totalorder %s24, 0
          %s606 = scalar_select %p605, %s24, 0
          %p607 = scmp.lt.s32.totalorder %s604, 3
          %s608 = scalar_select %p607, %s604, 3
          %s609 = smul.addr %s606, 4
          %s610 = sadd.s32 %s608, %s609
          %s611 = smul.addr %s610, 4
          %s612 = scalar_lea.vmem %s5, %s611
        $region98: #{g_sndcgan_forward.13} parent=93 // pred_fallthru
          _
      $region94: #{g_sndcgan_forward.13} parent=5 // pred_fallthru
        _
    $region6: #{g_sndcgan_forward.13} parent=1 // loop_footer
      %s15 = sadd.s32 1, %s11
    $region7: #{g_sndcgan_forward.13} parent=1 // loop_footer_branch
      %10 = sbr.rel target = $region3
    $region8: #{g_sndcgan_forward.13} parent=1 // loop_exit
      _

// kernel: g_sndcgan_forward.14
$region0: #{g_sndcgan_forward.14}
  #allocation0 [shape = 'u32[]', space=smem, size = 0x4, offset = 0x4, fixed_abs, tag = 'smem constant byte address 0x4 - core index']
  #allocation1 [shape = 'u32[72,128]{1,0:T(1,128)}', space=vmem, size = 0x9000, scoped, tag = 'internal scratch']
  #allocation2 [shape = 'f32[1,32]{1,0:T(1,128)}', space=vmem, size = 0x200, scoped, tag = 'scratch operand']
  #allocation3 [shape = 'f32[1,32]{1,0:T(1,128)}', space=vmem, size = 0x200, scoped, tag = 'scratch operand']
  %s0 = inlined_call_operand.vmem [shape: bf16[32,32], index: 0, kind: input, shape index: {}]
  %s1 = inlined_call_operand.vmem [shape: f32[1,32], index: 1, kind: output, shape index: {0}]
  %s2 = inlined_call_operand.vmem [shape: f32[1,32], index: 2, kind: output, shape index: {1}]
  %3 = xla_tuple %s1, %s2
  %s4 = sld [smem:[#allocation0]]
  $region30: #{g_sndcgan_forward.14} parent=0
    _
  %s6 = ssub.s32 1, %s4
  %s7 = scalar_select 0, %s6, %s4
  // Predicated region
  $region2: #{g_sndcgan_forward.14} parent=0 // pred_check
    _
  $region3: #{g_sndcgan_forward.14} parent=0 // pred_check_branch
    %9 = sbr.rel (0) target = $region5
  $region4: #{g_sndcgan_forward.14} parent=0 // pred_region
    _
  $region5: #{g_sndcgan_forward.14} parent=0 // pred_fallthru
    _
  %p10 = scmp.eq.s32.totalorder 0, 0
  // Predicated region
  $region6: #{g_sndcgan_forward.14} parent=0 // pred_check
    %p11 = pneg %p10
  $region7: #{g_sndcgan_forward.14} parent=0 // pred_check_branch
    %13 = sbr.rel (%p11) target = $region9
  $region8: #{g_sndcgan_forward.14} parent=0 // pred_region
    %vm14 = vcmask 253952
    %15 = vst.msk [vmem:[#allocation2] sm:$0x1] %vm14, 0.0
    %16 = vst.msk [vmem:[#allocation3] sm:$0x1] %vm14, 0.0
  $region9: #{g_sndcgan_forward.14} parent=0 // pred_fallthru
    _
  %v17 = vld [vmem:[%s0] sm:$0xf]
  %v18 = vld [vmem:[%s0 + $0x4] sm:$0xf]
  %v19 = vld [vmem:[%s0 + $0x8] sm:$0xf]
  %v20 = vld [vmem:[%s0 + $0xc] sm:$0xf]
  %v21 = vunpack.c.l.bf16 %v17
  %v22 = vunpack.c.l.bf16 %v18
  %v23 = vunpack.c.l.bf16 %v19
  %v24 = vunpack.c.l.bf16 %v20
  %v25 = vld [vmem:[#allocation2] sm:$0x1]
  %vm26 = vcmask 261120
  %v27 = vsel %vm26, %v21, 0.0
  %v28 = vsel %vm26, %v22, 0.0
  %v29 = vadd.f32 %v27, %v28
  %v30 = vsel %vm26, %v23, 0.0
  %v31 = vadd.f32 %v29, %v30
  %v32 = vsel %vm26, %v24, 0.0
  %v33 = vadd.f32 %v31, %v32
  %v34 = vrot.slane %v33, 4
  %v35 = vadd.f32 %v33, %v34
  %v36 = vrot.slane %v35, 2
  %v37 = vadd.f32 %v35, %v36
  %v38 = vrot.slane %v37, 1
  %v39 = vadd.f32 %v37, %v38
  %v40 = vadd.f32 %v25, %v39
  %vm41 = vcmask 253952
  %42 = vst.msk [vmem:[#allocation2] sm:$0x1] %vm41, %v40
  %v43 = vld [vmem:[#allocation3] sm:$0x1]
  %v44 = vmul.f32 %v21, %v21
  %v45 = vmul.f32 %v22, %v22
  %v46 = vmul.f32 %v23, %v23
  %v47 = vmul.f32 %v24, %v24
  %v48 = vsel %vm26, %v44, 0.0
  %v49 = vsel %vm26, %v45, 0.0
  %v50 = vadd.f32 %v48, %v49
  %v51 = vsel %vm26, %v46, 0.0
  %v52 = vadd.f32 %v50, %v51
  %v53 = vsel %vm26, %v47, 0.0
  %v54 = vadd.f32 %v52, %v53
  %v55 = vrot.slane %v54, 4
  %v56 = vadd.f32 %v54, %v55
  %v57 = vrot.slane %v56, 2
  %v58 = vadd.f32 %v56, %v57
  %v59 = vrot.slane %v58, 1
  %v60 = vadd.f32 %v58, %v59
  %v61 = vadd.f32 %v43, %v60
  %62 = vst.msk [vmem:[#allocation3] sm:$0x1] %vm41, %v61
  // Predicated region
  $region10: #{g_sndcgan_forward.14} parent=0 // pred_check
    %p63 = pneg %p10
  $region11: #{g_sndcgan_forward.14} parent=0 // pred_check_branch
    %65 = sbr.rel (%p63) target = $region13
  $region12: #{g_sndcgan_forward.14} parent=0 // pred_region
    %v66 = vld [vmem:[#allocation2] sm:$0x1]
    %67 = vst.msk [vmem:[%s1] sm:$0x1] %vm41, %v66
    %v68 = vld [vmem:[#allocation3] sm:$0x1]
    %69 = vst.msk [vmem:[%s2] sm:$0x1] %vm41, %v68
  $region13: #{g_sndcgan_forward.14} parent=0 // pred_fallthru
    _
  // Predicated region
  $region14: #{g_sndcgan_forward.14} parent=0 // pred_check
    _
  $region15: #{g_sndcgan_forward.14} parent=0 // pred_check_branch
    %71 = sbr.rel (0) target = $region17
  $region16: #{g_sndcgan_forward.14} parent=0 // pred_region
    _
  $region17: #{g_sndcgan_forward.14} parent=0 // pred_fallthru
    _
  // Predicated region
  $region18: #{g_sndcgan_forward.14} parent=0 // pred_check
    _
  $region19: #{g_sndcgan_forward.14} parent=0 // pred_check_branch
    %73 = sbr.rel (0) target = $region21
  $region20: #{g_sndcgan_forward.14} parent=0 // pred_region
    _
  $region21: #{g_sndcgan_forward.14} parent=0 // pred_fallthru
    _
  // Predicated region
  $region22: #{g_sndcgan_forward.14} parent=0 // pred_check
    _
  $region23: #{g_sndcgan_forward.14} parent=0 // pred_check_branch
    %75 = sbr.rel (0) target = $region25
  $region24: #{g_sndcgan_forward.14} parent=0 // pred_region
    _
  $region25: #{g_sndcgan_forward.14} parent=0 // pred_fallthru
    _
  // Predicated region
  $region26: #{g_sndcgan_forward.14} parent=0 // pred_check
    _
  $region27: #{g_sndcgan_forward.14} parent=0 // pred_check_branch
    %77 = sbr.rel (0) target = $region29
  $region28: #{g_sndcgan_forward.14} parent=0 // pred_region
    _
  $region29: #{g_sndcgan_forward.14} parent=0 // pred_fallthru
    _

// kernel: g_sndcgan_forward.15
$region0: #{g_sndcgan_forward.15}
  #allocation0 [shape = 'u32[]', space=smem, size = 0x4, offset = 0x4, fixed_abs, tag = 'smem constant byte address 0x4 - core index']
  #allocation1 [shape = 'u32[72,128]{1,0:T(1,128)}', space=vmem, size = 0x9000, scoped, tag = 'internal scratch']
  #allocation2 [shape = 'f32[32,256]{1,0:T(8,128)}', space=vmem, size = 0x8000, scoped, tag = 'scratch operand']
  %s0 = inlined_call_operand.vmem [shape: f32[1,128], index: 0, kind: input, shape index: {}]
  %s1 = inlined_call_operand.vmem [shape: f32[1,128], index: 1, kind: input, shape index: {}]
  %s2 = inlined_call_operand.vmem [shape: bf16[32,128], index: 2, kind: input, shape index: {}]
  %s3 = inlined_call_operand.vmem [shape: bf16[128,256], index: 3, kind: input, shape index: {}]
  %s4 = inlined_call_operand.vmem [shape: f32[1,256], index: 4, kind: input, shape index: {}]
  %s5 = inlined_call_operand.vmem [shape: bf16[32,256], index: 5, kind: output, shape index: {}]
  %s6 = sld [smem:[#allocation0]]
  $region38: #{g_sndcgan_forward.15} parent=0
    _
  %s8 = ssub.s32 1, %s6
  %s9 = scalar_select 0, %s8, %s6
  // Predicated region
  $region2: #{g_sndcgan_forward.15} parent=0 // pred_check
    _
  $region3: #{g_sndcgan_forward.15} parent=0 // pred_check_branch
    %11 = sbr.rel (0) target = $region5
  $region4: #{g_sndcgan_forward.15} parent=0 // pred_region
    _
  $region5: #{g_sndcgan_forward.15} parent=0 // pred_fallthru
    _
  // Predicated region
  $region6: #{g_sndcgan_forward.15} parent=0 // pred_check
    _
  $region7: #{g_sndcgan_forward.15} parent=0 // pred_check_branch
    %13 = sbr.rel (0) target = $region9
  $region8: #{g_sndcgan_forward.15} parent=0 // pred_region
    _
  $region9: #{g_sndcgan_forward.15} parent=0 // pred_fallthru
    _
  // Predicated region
  $region10: #{g_sndcgan_forward.15} parent=0 // pred_check
    _
  $region11: #{g_sndcgan_forward.15} parent=0 // pred_check_branch
    %15 = sbr.rel (0) target = $region13
  $region12: #{g_sndcgan_forward.15} parent=0 // pred_region
    _
  $region13: #{g_sndcgan_forward.15} parent=0 // pred_fallthru
    _
  // Predicated region
  $region14: #{g_sndcgan_forward.15} parent=0 // pred_check
    _
  $region15: #{g_sndcgan_forward.15} parent=0 // pred_check_branch
    %17 = sbr.rel (0) target = $region17
  $region16: #{g_sndcgan_forward.15} parent=0 // pred_region
    _
  $region17: #{g_sndcgan_forward.15} parent=0 // pred_fallthru
    _
  // Predicated region
  $region18: #{g_sndcgan_forward.15} parent=0 // pred_check
    _
  $region19: #{g_sndcgan_forward.15} parent=0 // pred_check_branch
    %19 = sbr.rel (0) target = $region21
  $region20: #{g_sndcgan_forward.15} parent=0 // pred_region
    _
  $region21: #{g_sndcgan_forward.15} parent=0 // pred_fallthru
    _
  %p20 = scmp.eq.s32.totalorder 0, 0
  // Predicated region
  $region22: #{g_sndcgan_forward.15} parent=0 // pred_check
    %p21 = pneg %p20
  $region23: #{g_sndcgan_forward.15} parent=0 // pred_check_branch
    %23 = sbr.rel (%p21) target = $region25
  $region24: #{g_sndcgan_forward.15} parent=0 // pred_region
    %24 = vst [vmem:[#allocation2] sm:$0xff] 0.0
    %25 = vst [vmem:[#allocation2 + $0x8] sm:$0xff] 0.0
    %26 = vst [vmem:[#allocation2 + $0x10] sm:$0xff] 0.0
    %27 = vst [vmem:[#allocation2 + $0x18] sm:$0xff] 0.0
    %28 = vst [vmem:[#allocation2 + $0x20] sm:$0xff] 0.0
    %29 = vst [vmem:[#allocation2 + $0x28] sm:$0xff] 0.0
    %30 = vst [vmem:[#allocation2 + $0x30] sm:$0xff] 0.0
    %31 = vst [vmem:[#allocation2 + $0x38] sm:$0xff] 0.0
  $region25: #{g_sndcgan_forward.15} parent=0 // pred_fallthru
    _
  %v32 = vld [vmem:[%s2] sm:$0xf]
  %v33 = vld [vmem:[%s2 + $0x4] sm:$0xf]
  %v34 = vld [vmem:[%s2 + $0x8] sm:$0xf]
  %v35 = vld [vmem:[%s2 + $0xc] sm:$0xf]
  %v36 = vunpack.c.l.bf16 %v32
  %v37 = vunpack.c.l.bf16 %v33
  %v38 = vunpack.c.l.bf16 %v34
  %v39 = vunpack.c.l.bf16 %v35
  %v40 = vld [vmem:[%s0] sm:$0x1]
  %v42 = vperm.slane %v40, 0
  %v44 = vmul.f32 %v36, %v42
  %v45 = vmul.f32 %v37, %v42
  %v46 = vmul.f32 %v38, %v42
  %v47 = vmul.f32 %v39, %v42
  %v48 = vld [vmem:[%s1] sm:$0x1]
  %v50 = vperm.slane %v48, 0
  %v52 = vadd.f32 %v44, %v50
  %v53 = vadd.f32 %v45, %v50
  %v54 = vadd.f32 %v46, %v50
  %v55 = vadd.f32 %v47, %v50
  %v56 = vmax.f32 %v52, 0.0
  %v57 = vmax.f32 %v53, 0.0
  %v58 = vmax.f32 %v54, 0.0
  %v59 = vmax.f32 %v55, 0.0
  %v60 = vpack.c.bf16 %v57, %v56
  %v61 = vpack.c.bf16 %v59, %v58
  %v62 = vld [vmem:[#allocation2] sm:$0xff]
  %v63 = vld [vmem:[#allocation2 + $0x8] sm:$0xff]
  %v64 = vld [vmem:[#allocation2 + $0x10] sm:$0xff]
  %v65 = vld [vmem:[#allocation2 + $0x18] sm:$0xff]
  %v66 = vld [vmem:[#allocation2 + $0x20] sm:$0xff]
  %v67 = vld [vmem:[#allocation2 + $0x28] sm:$0xff]
  %v68 = vld [vmem:[#allocation2 + $0x30] sm:$0xff]
  %v69 = vld [vmem:[#allocation2 + $0x38] sm:$0xff]
  %v70 = vld [vmem:[%s3] sm:$0xff]
  %v71 = vld [vmem:[%s3 + $0x8] sm:$0xff]
  %v72 = vld [vmem:[%s3 + $0x10] sm:$0xff]
  %v73 = vld [vmem:[%s3 + $0x18] sm:$0xff]
  %v74 = vld [vmem:[%s3 + $0x20] sm:$0xff]
  %v75 = vld [vmem:[%s3 + $0x28] sm:$0xff]
  %v76 = vld [vmem:[%s3 + $0x30] sm:$0xff]
  %v77 = vld [vmem:[%s3 + $0x38] sm:$0xff]
  %v78 = vld [vmem:[%s3 + $0x40] sm:$0xff]
  %v79 = vld [vmem:[%s3 + $0x48] sm:$0xff]
  %v80 = vld [vmem:[%s3 + $0x50] sm:$0xff]
  %v81 = vld [vmem:[%s3 + $0x58] sm:$0xff]
  %v82 = vld [vmem:[%s3 + $0x60] sm:$0xff]
  %v83 = vld [vmem:[%s3 + $0x68] sm:$0xff]
  %v84 = vld [vmem:[%s3 + $0x70] sm:$0xff]
  %v85 = vld [vmem:[%s3 + $0x78] sm:$0xff]
  %v102 = vunpack.c.l.b16 %v70
  %v103 = vunpack.c.h.b16 %v70
  %v104 = vunpack.c.l.b16 %v71
  %v105 = vunpack.c.h.b16 %v71
  %v106 = vunpack.c.l.b16 %v72
  %v107 = vunpack.c.h.b16 %v72
  %v108 = vunpack.c.l.b16 %v73
  %v109 = vunpack.c.h.b16 %v73
  %v110 = vunpack.c.l.b16 %v74
  %v111 = vunpack.c.h.b16 %v74
  %v112 = vunpack.c.l.b16 %v75
  %v113 = vunpack.c.h.b16 %v75
  %v114 = vunpack.c.l.b16 %v76
  %v115 = vunpack.c.h.b16 %v76
  %v116 = vunpack.c.l.b16 %v77
  %v117 = vunpack.c.h.b16 %v77
  %v118 = vunpack.c.l.b16 %v78
  %v119 = vunpack.c.h.b16 %v78
  %v120 = vunpack.c.l.b16 %v79
  %v121 = vunpack.c.h.b16 %v79
  %v122 = vunpack.c.l.b16 %v80
  %v123 = vunpack.c.h.b16 %v80
  %v124 = vunpack.c.l.b16 %v81
  %v125 = vunpack.c.h.b16 %v81
  %v126 = vunpack.c.l.b16 %v82
  %v127 = vunpack.c.h.b16 %v82
  %v128 = vunpack.c.l.b16 %v83
  %v129 = vunpack.c.h.b16 %v83
  %v130 = vunpack.c.l.b16 %v84
  %v131 = vunpack.c.h.b16 %v84
  %v132 = vunpack.c.l.b16 %v85
  %v133 = vunpack.c.h.b16 %v85
  %v134 = vpack.c.b16 %v104, %v102
  %v135 = vpack.c.b16 %v105, %v103
  %v136 = vpack.c.b16 %v108, %v106
  %v137 = vpack.c.b16 %v109, %v107
  %v138 = vpack.c.b16 %v112, %v110
  %v139 = vpack.c.b16 %v113, %v111
  %v140 = vpack.c.b16 %v116, %v114
  %v141 = vpack.c.b16 %v117, %v115
  %v142 = vpack.c.b16 %v120, %v118
  %v143 = vpack.c.b16 %v121, %v119
  %v144 = vpack.c.b16 %v124, %v122
  %v145 = vpack.c.b16 %v125, %v123
  %v146 = vpack.c.b16 %v128, %v126
  %v147 = vpack.c.b16 %v129, %v127
  %v148 = vpack.c.b16 %v132, %v130
  %v149 = vpack.c.b16 %v133, %v131
  %166 = vmatpush.bf16.msra.mxu0 %v148
  %167 = vmatpush.bf16.msra.mxu0 %v146
  %168 = vmatpush.bf16.msra.mxu0 %v144
  %169 = vmatpush.bf16.msra.mxu0 %v142
  %170 = vmatpush.bf16.msra.mxu0 %v140
  %171 = vmatpush.bf16.msra.mxu0 %v138
  %172 = vmatpush.bf16.msra.mxu0 %v136
  %173 = vmatpush.bf16.msra.mxu0 %v134
  %174 = vmatmul.bf16.gmra.mxu0 %v60
  %v175 = vpop.f32.mrf.mxu0
  %v176 = vadd.f32 0.0, %v175
  %v177 = vpop.f32.mrf.mxu0
  %v178 = vadd.f32 0.0, %v177
  %179 = vmatmul.bf16.gmra.mxu0 %v61
  %v180 = vpop.f32.mrf.mxu0
  %v181 = vadd.f32 0.0, %v180
  %v182 = vpop.f32.mrf.mxu0
  %v183 = vadd.f32 0.0, %v182
  %184 = vdwg.mxu0
  %185 = vmatpush.bf16.msra.mxu0 %v149
  %186 = vmatpush.bf16.msra.mxu0 %v147
  %187 = vmatpush.bf16.msra.mxu0 %v145
  %188 = vmatpush.bf16.msra.mxu0 %v143
  %189 = vmatpush.bf16.msra.mxu0 %v141
  %190 = vmatpush.bf16.msra.mxu0 %v139
  %191 = vmatpush.bf16.msra.mxu0 %v137
  %192 = vmatpush.bf16.msra.mxu0 %v135
  %193 = vmatmul.bf16.gmra.mxu0 %v60
  %v194 = vpop.f32.mrf.mxu0
  %v195 = vadd.f32 0.0, %v194
  %v196 = vpop.f32.mrf.mxu0
  %v197 = vadd.f32 0.0, %v196
  %198 = vmatmul.bf16.gmra.mxu0 %v61
  %v199 = vpop.f32.mrf.mxu0
  %v200 = vadd.f32 0.0, %v199
  %v201 = vpop.f32.mrf.mxu0
  %v202 = vadd.f32 0.0, %v201
  %203 = vdwg.mxu0
  %v204 = vadd.f32 %v62, %v176
  %v205 = vadd.f32 %v63, %v195
  %v206 = vadd.f32 %v64, %v178
  %v207 = vadd.f32 %v65, %v197
  %v208 = vadd.f32 %v66, %v181
  %v209 = vadd.f32 %v67, %v200
  %v210 = vadd.f32 %v68, %v183
  %v211 = vadd.f32 %v69, %v202
  %212 = vst [vmem:[#allocation2] sm:$0xff] %v204
  %213 = vst [vmem:[#allocation2 + $0x8] sm:$0xff] %v205
  %214 = vst [vmem:[#allocation2 + $0x10] sm:$0xff] %v206
  %215 = vst [vmem:[#allocation2 + $0x18] sm:$0xff] %v207
  %216 = vst [vmem:[#allocation2 + $0x20] sm:$0xff] %v208
  %217 = vst [vmem:[#allocation2 + $0x28] sm:$0xff] %v209
  %218 = vst [vmem:[#allocation2 + $0x30] sm:$0xff] %v210
  %219 = vst [vmem:[#allocation2 + $0x38] sm:$0xff] %v211
  // Predicated region
  $region26: #{g_sndcgan_forward.15} parent=0 // pred_check
    %p220 = pneg %p20
  $region27: #{g_sndcgan_forward.15} parent=0 // pred_check_branch
    %222 = sbr.rel (%p220) target = $region29
  $region28: #{g_sndcgan_forward.15} parent=0 // pred_region
    %v223 = vld [vmem:[#allocation2] sm:$0xff]
    %v224 = vld [vmem:[#allocation2 + $0x8] sm:$0xff]
    %v225 = vld [vmem:[#allocation2 + $0x10] sm:$0xff]
    %v226 = vld [vmem:[#allocation2 + $0x18] sm:$0xff]
    %v227 = vld [vmem:[#allocation2 + $0x20] sm:$0xff]
    %v228 = vld [vmem:[#allocation2 + $0x28] sm:$0xff]
    %v229 = vld [vmem:[#allocation2 + $0x30] sm:$0xff]
    %v230 = vld [vmem:[#allocation2 + $0x38] sm:$0xff]
    %v231 = vld [vmem:[%s4] sm:$0x3]
    %v233 = vperm.slane %v231, 0
    %v234 = vperm.slane %v231, 1
    %v237 = vadd.f32 %v223, %v233
    %v238 = vadd.f32 %v224, %v234
    %v239 = vadd.f32 %v225, %v233
    %v240 = vadd.f32 %v226, %v234
    %v241 = vadd.f32 %v227, %v233
    %v242 = vadd.f32 %v228, %v234
    %v243 = vadd.f32 %v229, %v233
    %v244 = vadd.f32 %v230, %v234
    %v245 = vpack.c.bf16 %v238, %v237
    %v246 = vpack.c.bf16 %v240, %v239
    %v247 = vpack.c.bf16 %v242, %v241
    %v248 = vpack.c.bf16 %v244, %v243
    %249 = vst [vmem:[%s5] sm:$0xff] %v245
    %250 = vst [vmem:[%s5 + $0x8] sm:$0xff] %v246
    %251 = vst [vmem:[%s5 + $0x10] sm:$0xff] %v247
    %252 = vst [vmem:[%s5 + $0x18] sm:$0xff] %v248
  $region29: #{g_sndcgan_forward.15} parent=0 // pred_fallthru
    _
  // Predicated region
  $region30: #{g_sndcgan_forward.15} parent=0 // pred_check
    _
  $region31: #{g_sndcgan_forward.15} parent=0 // pred_check_branch
    %254 = sbr.rel (0) target = $region33
  $region32: #{g_sndcgan_forward.15} parent=0 // pred_region
    _
  $region33: #{g_sndcgan_forward.15} parent=0 // pred_fallthru
    _
  // Predicated region
  $region34: #{g_sndcgan_forward.15} parent=0 // pred_check
    _
  $region35: #{g_sndcgan_forward.15} parent=0 // pred_check_branch
    %256 = sbr.rel (0) target = $region37
  $region36: #{g_sndcgan_forward.15} parent=0 // pred_region
    _
  $region37: #{g_sndcgan_forward.15} parent=0 // pred_fallthru
    _

// kernel: g_sndcgan_forward.16
$region0: #{g_sndcgan_forward.16}
  #allocation0 [shape = 'u32[]', space=smem, size = 0x4, offset = 0x4, fixed_abs, tag = 'smem constant byte address 0x4 - core index']
  #allocation1 [shape = 'u32[72,128]{1,0:T(1,128)}', space=vmem, size = 0x9000, scoped, tag = 'internal scratch']
  #allocation2 [shape = 'f32[1,16]{1,0:T(1,128)}', space=vmem, size = 0x200, scoped, tag = 'scratch operand']
  #allocation3 [shape = 'f32[1,16]{1,0:T(1,128)}', space=vmem, size = 0x200, scoped, tag = 'scratch operand']
  %s0 = inlined_call_operand.vmem [shape: bf16[128,16], index: 0, kind: input, shape index: {}]
  %s1 = inlined_call_operand.vmem [shape: f32[1,16], index: 1, kind: output, shape index: {0}]
  %s2 = inlined_call_operand.vmem [shape: f32[1,16], index: 2, kind: output, shape index: {1}]
  %3 = xla_tuple %s1, %s2
  %s4 = sld [smem:[#allocation0]]
  $region30: #{g_sndcgan_forward.16} parent=0
    _
  %s6 = ssub.s32 1, %s4
  %s7 = scalar_select 0, %s6, %s4
  // Predicated region
  $region2: #{g_sndcgan_forward.16} parent=0 // pred_check
    _
  $region3: #{g_sndcgan_forward.16} parent=0 // pred_check_branch
    %9 = sbr.rel (0) target = $region5
  $region4: #{g_sndcgan_forward.16} parent=0 // pred_region
    _
  $region5: #{g_sndcgan_forward.16} parent=0 // pred_fallthru
    _
  %p10 = scmp.eq.s32.totalorder 0, 0
  // Predicated region
  $region6: #{g_sndcgan_forward.16} parent=0 // pred_check
    %p11 = pneg %p10
  $region7: #{g_sndcgan_forward.16} parent=0 // pred_check_branch
    %13 = sbr.rel (%p11) target = $region9
  $region8: #{g_sndcgan_forward.16} parent=0 // pred_region
    %vm14 = vcmask 122880
    %15 = vst.msk [vmem:[#allocation2] sm:$0x1] %vm14, 0.0
    %16 = vst.msk [vmem:[#allocation3] sm:$0x1] %vm14, 0.0
  $region9: #{g_sndcgan_forward.16} parent=0 // pred_fallthru
    _
  %v17 = vld [vmem:[%s0] sm:$0xf]
  %v18 = vld [vmem:[%s0 + $0x4] sm:$0xf]
  %v19 = vld [vmem:[%s0 + $0x8] sm:$0xf]
  %v20 = vld [vmem:[%s0 + $0xc] sm:$0xf]
  %v21 = vld [vmem:[%s0 + $0x10] sm:$0xf]
  %v22 = vld [vmem:[%s0 + $0x14] sm:$0xf]
  %v23 = vld [vmem:[%s0 + $0x18] sm:$0xf]
  %v24 = vld [vmem:[%s0 + $0x1c] sm:$0xf]
  %v25 = vld [vmem:[%s0 + $0x20] sm:$0xf]
  %v26 = vld [vmem:[%s0 + $0x24] sm:$0xf]
  %v27 = vld [vmem:[%s0 + $0x28] sm:$0xf]
  %v28 = vld [vmem:[%s0 + $0x2c] sm:$0xf]
  %v29 = vld [vmem:[%s0 + $0x30] sm:$0xf]
  %v30 = vld [vmem:[%s0 + $0x34] sm:$0xf]
  %v31 = vld [vmem:[%s0 + $0x38] sm:$0xf]
  %v32 = vld [vmem:[%s0 + $0x3c] sm:$0xf]
  %v33 = vunpack.c.l.bf16 %v17
  %v34 = vunpack.c.l.bf16 %v18
  %v35 = vunpack.c.l.bf16 %v19
  %v36 = vunpack.c.l.bf16 %v20
  %v37 = vunpack.c.l.bf16 %v21
  %v38 = vunpack.c.l.bf16 %v22
  %v39 = vunpack.c.l.bf16 %v23
  %v40 = vunpack.c.l.bf16 %v24
  %v41 = vunpack.c.l.bf16 %v25
  %v42 = vunpack.c.l.bf16 %v26
  %v43 = vunpack.c.l.bf16 %v27
  %v44 = vunpack.c.l.bf16 %v28
  %v45 = vunpack.c.l.bf16 %v29
  %v46 = vunpack.c.l.bf16 %v30
  %v47 = vunpack.c.l.bf16 %v31
  %v48 = vunpack.c.l.bf16 %v32
  %v49 = vld [vmem:[#allocation2] sm:$0x1]
  %vm50 = vcmask 130048
  %v51 = vsel %vm50, %v33, 0.0
  %v52 = vsel %vm50, %v34, 0.0
  %v53 = vadd.f32 %v51, %v52
  %v54 = vsel %vm50, %v35, 0.0
  %v55 = vadd.f32 %v53, %v54
  %v56 = vsel %vm50, %v36, 0.0
  %v57 = vadd.f32 %v55, %v56
  %v58 = vsel %vm50, %v37, 0.0
  %v59 = vadd.f32 %v57, %v58
  %v60 = vsel %vm50, %v38, 0.0
  %v61 = vadd.f32 %v59, %v60
  %v62 = vsel %vm50, %v39, 0.0
  %v63 = vadd.f32 %v61, %v62
  %v64 = vsel %vm50, %v40, 0.0
  %v65 = vadd.f32 %v63, %v64
  %v66 = vsel %vm50, %v41, 0.0
  %v67 = vadd.f32 %v65, %v66
  %v68 = vsel %vm50, %v42, 0.0
  %v69 = vadd.f32 %v67, %v68
  %v70 = vsel %vm50, %v43, 0.0
  %v71 = vadd.f32 %v69, %v70
  %v72 = vsel %vm50, %v44, 0.0
  %v73 = vadd.f32 %v71, %v72
  %v74 = vsel %vm50, %v45, 0.0
  %v75 = vadd.f32 %v73, %v74
  %v76 = vsel %vm50, %v46, 0.0
  %v77 = vadd.f32 %v75, %v76
  %v78 = vsel %vm50, %v47, 0.0
  %v79 = vadd.f32 %v77, %v78
  %v80 = vsel %vm50, %v48, 0.0
  %v81 = vadd.f32 %v79, %v80
  %v82 = vrot.slane %v81, 4
  %v83 = vadd.f32 %v81, %v82
  %v84 = vrot.slane %v83, 2
  %v85 = vadd.f32 %v83, %v84
  %v86 = vrot.slane %v85, 1
  %v87 = vadd.f32 %v85, %v86
  %v88 = vadd.f32 %v49, %v87
  %vm89 = vcmask 122880
  %90 = vst.msk [vmem:[#allocation2] sm:$0x1] %vm89, %v88
  %v91 = vld [vmem:[#allocation3] sm:$0x1]
  %v92 = vmul.f32 %v33, %v33
  %v93 = vmul.f32 %v34, %v34
  %v94 = vmul.f32 %v35, %v35
  %v95 = vmul.f32 %v36, %v36
  %v96 = vmul.f32 %v37, %v37
  %v97 = vmul.f32 %v38, %v38
  %v98 = vmul.f32 %v39, %v39
  %v99 = vmul.f32 %v40, %v40
  %v100 = vmul.f32 %v41, %v41
  %v101 = vmul.f32 %v42, %v42
  %v102 = vmul.f32 %v43, %v43
  %v103 = vmul.f32 %v44, %v44
  %v104 = vmul.f32 %v45, %v45
  %v105 = vmul.f32 %v46, %v46
  %v106 = vmul.f32 %v47, %v47
  %v107 = vmul.f32 %v48, %v48
  %v108 = vsel %vm50, %v92, 0.0
  %v109 = vsel %vm50, %v93, 0.0
  %v110 = vadd.f32 %v108, %v109
  %v111 = vsel %vm50, %v94, 0.0
  %v112 = vadd.f32 %v110, %v111
  %v113 = vsel %vm50, %v95, 0.0
  %v114 = vadd.f32 %v112, %v113
  %v115 = vsel %vm50, %v96, 0.0
  %v116 = vadd.f32 %v114, %v115
  %v117 = vsel %vm50, %v97, 0.0
  %v118 = vadd.f32 %v116, %v117
  %v119 = vsel %vm50, %v98, 0.0
  %v120 = vadd.f32 %v118, %v119
  %v121 = vsel %vm50, %v99, 0.0
  %v122 = vadd.f32 %v120, %v121
  %v123 = vsel %vm50, %v100, 0.0
  %v124 = vadd.f32 %v122, %v123
  %v125 = vsel %vm50, %v101, 0.0
  %v126 = vadd.f32 %v124, %v125
  %v127 = vsel %vm50, %v102, 0.0
  %v128 = vadd.f32 %v126, %v127
  %v129 = vsel %vm50, %v103, 0.0
  %v130 = vadd.f32 %v128, %v129
  %v131 = vsel %vm50, %v104, 0.0
  %v132 = vadd.f32 %v130, %v131
  %v133 = vsel %vm50, %v105, 0.0
  %v134 = vadd.f32 %v132, %v133
  %v135 = vsel %vm50, %v106, 0.0
  %v136 = vadd.f32 %v134, %v135
  %v137 = vsel %vm50, %v107, 0.0
  %v138 = vadd.f32 %v136, %v137
  %v139 = vrot.slane %v138, 4
  %v140 = vadd.f32 %v138, %v139
  %v141 = vrot.slane %v140, 2
  %v142 = vadd.f32 %v140, %v141
  %v143 = vrot.slane %v142, 1
  %v144 = vadd.f32 %v142, %v143
  %v145 = vadd.f32 %v91, %v144
  %146 = vst.msk [vmem:[#allocation3] sm:$0x1] %vm89, %v145
  // Predicated region
  $region10: #{g_sndcgan_forward.16} parent=0 // pred_check
    %p147 = pneg %p10
  $region11: #{g_sndcgan_forward.16} parent=0 // pred_check_branch
    %149 = sbr.rel (%p147) target = $region13
  $region12: #{g_sndcgan_forward.16} parent=0 // pred_region
    %v150 = vld [vmem:[#allocation2] sm:$0x1]
    %151 = vst.msk [vmem:[%s1] sm:$0x1] %vm89, %v150
    %v152 = vld [vmem:[#allocation3] sm:$0x1]
    %153 = vst.msk [vmem:[%s2] sm:$0x1] %vm89, %v152
  $region13: #{g_sndcgan_forward.16} parent=0 // pred_fallthru
    _
  // Predicated region
  $region14: #{g_sndcgan_forward.16} parent=0 // pred_check
    _
  $region15: #{g_sndcgan_forward.16} parent=0 // pred_check_branch
    %155 = sbr.rel (0) target = $region17
  $region16: #{g_sndcgan_forward.16} parent=0 // pred_region
    _
  $region17: #{g_sndcgan_forward.16} parent=0 // pred_fallthru
    _
  // Predicated region
  $region18: #{g_sndcgan_forward.16} parent=0 // pred_check
    _
  $region19: #{g_sndcgan_forward.16} parent=0 // pred_check_branch
    %157 = sbr.rel (0) target = $region21
  $region20: #{g_sndcgan_forward.16} parent=0 // pred_region
    _
  $region21: #{g_sndcgan_forward.16} parent=0 // pred_fallthru
    _
  // Predicated region
  $region22: #{g_sndcgan_forward.16} parent=0 // pred_check
    _
  $region23: #{g_sndcgan_forward.16} parent=0 // pred_check_branch
    %159 = sbr.rel (0) target = $region25
  $region24: #{g_sndcgan_forward.16} parent=0 // pred_region
    _
  $region25: #{g_sndcgan_forward.16} parent=0 // pred_fallthru
    _
  // Predicated region
  $region26: #{g_sndcgan_forward.16} parent=0 // pred_check
    _
  $region27: #{g_sndcgan_forward.16} parent=0 // pred_check_branch
    %161 = sbr.rel (0) target = $region29
  $region28: #{g_sndcgan_forward.16} parent=0 // pred_region
    _
  $region29: #{g_sndcgan_forward.16} parent=0 // pred_fallthru
    _

// kernel: g_sndcgan_forward.17
$region0: #{g_sndcgan_forward.17}
  #allocation0 [shape = 'u32[]', space=smem, size = 0x4, offset = 0x4, fixed_abs, tag = 'smem constant byte address 0x4 - core index']
  #allocation1 [shape = 'u32[72,128]{1,0:T(1,128)}', space=vmem, size = 0x9000, scoped, tag = 'internal scratch']
  #allocation2 [shape = 'f32[128,128]{1,0:T(8,128)}', space=vmem, size = 0x10000, scoped, tag = 'scratch operand']
  %s0 = inlined_call_operand.vmem [shape: f32[1,128], index: 0, kind: input, shape index: {}]
  %s1 = inlined_call_operand.vmem [shape: f32[1,128], index: 1, kind: input, shape index: {}]
  %s2 = inlined_call_operand.vmem [shape: bf16[128,128], index: 2, kind: input, shape index: {}]
  %s3 = inlined_call_operand.vmem [shape: bf16[128,128], index: 3, kind: input, shape index: {}]
  %s4 = inlined_call_operand.vmem [shape: f32[1,128], index: 4, kind: input, shape index: {}]
  %s5 = inlined_call_operand.vmem [shape: bf16[128,128], index: 5, kind: output, shape index: {}]
  %s6 = sld [smem:[#allocation0]]
  $region38: #{g_sndcgan_forward.17} parent=0
    _
  %s8 = ssub.s32 1, %s6
  %s9 = scalar_select 0, %s8, %s6
  // Predicated region
  $region2: #{g_sndcgan_forward.17} parent=0 // pred_check
    _
  $region3: #{g_sndcgan_forward.17} parent=0 // pred_check_branch
    %11 = sbr.rel (0) target = $region5
  $region4: #{g_sndcgan_forward.17} parent=0 // pred_region
    _
  $region5: #{g_sndcgan_forward.17} parent=0 // pred_fallthru
    _
  // Predicated region
  $region6: #{g_sndcgan_forward.17} parent=0 // pred_check
    _
  $region7: #{g_sndcgan_forward.17} parent=0 // pred_check_branch
    %13 = sbr.rel (0) target = $region9
  $region8: #{g_sndcgan_forward.17} parent=0 // pred_region
    _
  $region9: #{g_sndcgan_forward.17} parent=0 // pred_fallthru
    _
  // Predicated region
  $region10: #{g_sndcgan_forward.17} parent=0 // pred_check
    _
  $region11: #{g_sndcgan_forward.17} parent=0 // pred_check_branch
    %15 = sbr.rel (0) target = $region13
  $region12: #{g_sndcgan_forward.17} parent=0 // pred_region
    _
  $region13: #{g_sndcgan_forward.17} parent=0 // pred_fallthru
    _
  // Predicated region
  $region14: #{g_sndcgan_forward.17} parent=0 // pred_check
    _
  $region15: #{g_sndcgan_forward.17} parent=0 // pred_check_branch
    %17 = sbr.rel (0) target = $region17
  $region16: #{g_sndcgan_forward.17} parent=0 // pred_region
    _
  $region17: #{g_sndcgan_forward.17} parent=0 // pred_fallthru
    _
  // Predicated region
  $region18: #{g_sndcgan_forward.17} parent=0 // pred_check
    _
  $region19: #{g_sndcgan_forward.17} parent=0 // pred_check_branch
    %19 = sbr.rel (0) target = $region21
  $region20: #{g_sndcgan_forward.17} parent=0 // pred_region
    _
  $region21: #{g_sndcgan_forward.17} parent=0 // pred_fallthru
    _
  %p20 = scmp.eq.s32.totalorder 0, 0
  // Predicated region
  $region22: #{g_sndcgan_forward.17} parent=0 // pred_check
    %p21 = pneg %p20
  $region23: #{g_sndcgan_forward.17} parent=0 // pred_check_branch
    %23 = sbr.rel (%p21) target = $region25
  $region24: #{g_sndcgan_forward.17} parent=0 // pred_region
    %24 = vst [vmem:[#allocation2] sm:$0xff] 0.0
    %25 = vst [vmem:[#allocation2 + $0x8] sm:$0xff] 0.0
    %26 = vst [vmem:[#allocation2 + $0x10] sm:$0xff] 0.0
    %27 = vst [vmem:[#allocation2 + $0x18] sm:$0xff] 0.0
    %28 = vst [vmem:[#allocation2 + $0x20] sm:$0xff] 0.0
    %29 = vst [vmem:[#allocation2 + $0x28] sm:$0xff] 0.0
    %30 = vst [vmem:[#allocation2 + $0x30] sm:$0xff] 0.0
    %31 = vst [vmem:[#allocation2 + $0x38] sm:$0xff] 0.0
    %32 = vst [vmem:[#allocation2 + $0x40] sm:$0xff] 0.0
    %33 = vst [vmem:[#allocation2 + $0x48] sm:$0xff] 0.0
    %34 = vst [vmem:[#allocation2 + $0x50] sm:$0xff] 0.0
    %35 = vst [vmem:[#allocation2 + $0x58] sm:$0xff] 0.0
    %36 = vst [vmem:[#allocation2 + $0x60] sm:$0xff] 0.0
    %37 = vst [vmem:[#allocation2 + $0x68] sm:$0xff] 0.0
    %38 = vst [vmem:[#allocation2 + $0x70] sm:$0xff] 0.0
    %39 = vst [vmem:[#allocation2 + $0x78] sm:$0xff] 0.0
  $region25: #{g_sndcgan_forward.17} parent=0 // pred_fallthru
    _
  %v40 = vld [vmem:[%s2] sm:$0xf]
  %v41 = vld [vmem:[%s2 + $0x4] sm:$0xf]
  %v42 = vld [vmem:[%s2 + $0x8] sm:$0xf]
  %v43 = vld [vmem:[%s2 + $0xc] sm:$0xf]
  %v44 = vld [vmem:[%s2 + $0x10] sm:$0xf]
  %v45 = vld [vmem:[%s2 + $0x14] sm:$0xf]
  %v46 = vld [vmem:[%s2 + $0x18] sm:$0xf]
  %v47 = vld [vmem:[%s2 + $0x1c] sm:$0xf]
  %v48 = vld [vmem:[%s2 + $0x20] sm:$0xf]
  %v49 = vld [vmem:[%s2 + $0x24] sm:$0xf]
  %v50 = vld [vmem:[%s2 + $0x28] sm:$0xf]
  %v51 = vld [vmem:[%s2 + $0x2c] sm:$0xf]
  %v52 = vld [vmem:[%s2 + $0x30] sm:$0xf]
  %v53 = vld [vmem:[%s2 + $0x34] sm:$0xf]
  %v54 = vld [vmem:[%s2 + $0x38] sm:$0xf]
  %v55 = vld [vmem:[%s2 + $0x3c] sm:$0xf]
  %v56 = vunpack.c.l.bf16 %v40
  %v57 = vunpack.c.l.bf16 %v41
  %v58 = vunpack.c.l.bf16 %v42
  %v59 = vunpack.c.l.bf16 %v43
  %v60 = vunpack.c.l.bf16 %v44
  %v61 = vunpack.c.l.bf16 %v45
  %v62 = vunpack.c.l.bf16 %v46
  %v63 = vunpack.c.l.bf16 %v47
  %v64 = vunpack.c.l.bf16 %v48
  %v65 = vunpack.c.l.bf16 %v49
  %v66 = vunpack.c.l.bf16 %v50
  %v67 = vunpack.c.l.bf16 %v51
  %v68 = vunpack.c.l.bf16 %v52
  %v69 = vunpack.c.l.bf16 %v53
  %v70 = vunpack.c.l.bf16 %v54
  %v71 = vunpack.c.l.bf16 %v55
  %v72 = vld [vmem:[%s0] sm:$0x1]
  %v74 = vperm.slane %v72, 0
  %v76 = vmul.f32 %v56, %v74
  %v77 = vmul.f32 %v57, %v74
  %v78 = vmul.f32 %v58, %v74
  %v79 = vmul.f32 %v59, %v74
  %v80 = vmul.f32 %v60, %v74
  %v81 = vmul.f32 %v61, %v74
  %v82 = vmul.f32 %v62, %v74
  %v83 = vmul.f32 %v63, %v74
  %v84 = vmul.f32 %v64, %v74
  %v85 = vmul.f32 %v65, %v74
  %v86 = vmul.f32 %v66, %v74
  %v87 = vmul.f32 %v67, %v74
  %v88 = vmul.f32 %v68, %v74
  %v89 = vmul.f32 %v69, %v74
  %v90 = vmul.f32 %v70, %v74
  %v91 = vmul.f32 %v71, %v74
  %v92 = vld [vmem:[%s1] sm:$0x1]
  %v94 = vperm.slane %v92, 0
  %v96 = vadd.f32 %v76, %v94
  %v97 = vadd.f32 %v77, %v94
  %v98 = vadd.f32 %v78, %v94
  %v99 = vadd.f32 %v79, %v94
  %v100 = vadd.f32 %v80, %v94
  %v101 = vadd.f32 %v81, %v94
  %v102 = vadd.f32 %v82, %v94
  %v103 = vadd.f32 %v83, %v94
  %v104 = vadd.f32 %v84, %v94
  %v105 = vadd.f32 %v85, %v94
  %v106 = vadd.f32 %v86, %v94
  %v107 = vadd.f32 %v87, %v94
  %v108 = vadd.f32 %v88, %v94
  %v109 = vadd.f32 %v89, %v94
  %v110 = vadd.f32 %v90, %v94
  %v111 = vadd.f32 %v91, %v94
  %v112 = vmax.f32 %v96, 0.0
  %v113 = vmax.f32 %v97, 0.0
  %v114 = vmax.f32 %v98, 0.0
  %v115 = vmax.f32 %v99, 0.0
  %v116 = vmax.f32 %v100, 0.0
  %v117 = vmax.f32 %v101, 0.0
  %v118 = vmax.f32 %v102, 0.0
  %v119 = vmax.f32 %v103, 0.0
  %v120 = vmax.f32 %v104, 0.0
  %v121 = vmax.f32 %v105, 0.0
  %v122 = vmax.f32 %v106, 0.0
  %v123 = vmax.f32 %v107, 0.0
  %v124 = vmax.f32 %v108, 0.0
  %v125 = vmax.f32 %v109, 0.0
  %v126 = vmax.f32 %v110, 0.0
  %v127 = vmax.f32 %v111, 0.0
  %v128 = vpack.c.bf16 %v113, %v112
  %v129 = vpack.c.bf16 %v115, %v114
  %v130 = vpack.c.bf16 %v117, %v116
  %v131 = vpack.c.bf16 %v119, %v118
  %v132 = vpack.c.bf16 %v121, %v120
  %v133 = vpack.c.bf16 %v123, %v122
  %v134 = vpack.c.bf16 %v125, %v124
  %v135 = vpack.c.bf16 %v127, %v126
  %v136 = vld [vmem:[#allocation2] sm:$0xff]
  %v137 = vld [vmem:[#allocation2 + $0x8] sm:$0xff]
  %v138 = vld [vmem:[#allocation2 + $0x10] sm:$0xff]
  %v139 = vld [vmem:[#allocation2 + $0x18] sm:$0xff]
  %v140 = vld [vmem:[#allocation2 + $0x20] sm:$0xff]
  %v141 = vld [vmem:[#allocation2 + $0x28] sm:$0xff]
  %v142 = vld [vmem:[#allocation2 + $0x30] sm:$0xff]
  %v143 = vld [vmem:[#allocation2 + $0x38] sm:$0xff]
  %v144 = vld [vmem:[#allocation2 + $0x40] sm:$0xff]
  %v145 = vld [vmem:[#allocation2 + $0x48] sm:$0xff]
  %v146 = vld [vmem:[#allocation2 + $0x50] sm:$0xff]
  %v147 = vld [vmem:[#allocation2 + $0x58] sm:$0xff]
  %v148 = vld [vmem:[#allocation2 + $0x60] sm:$0xff]
  %v149 = vld [vmem:[#allocation2 + $0x68] sm:$0xff]
  %v150 = vld [vmem:[#allocation2 + $0x70] sm:$0xff]
  %v151 = vld [vmem:[#allocation2 + $0x78] sm:$0xff]
  %v152 = vld [vmem:[%s3] sm:$0xf]
  %v153 = vld [vmem:[%s3 + $0x4] sm:$0xf]
  %v154 = vld [vmem:[%s3 + $0x8] sm:$0xf]
  %v155 = vld [vmem:[%s3 + $0xc] sm:$0xf]
  %v156 = vld [vmem:[%s3 + $0x10] sm:$0xf]
  %v157 = vld [vmem:[%s3 + $0x14] sm:$0xf]
  %v158 = vld [vmem:[%s3 + $0x18] sm:$0xf]
  %v159 = vld [vmem:[%s3 + $0x1c] sm:$0xf]
  %v160 = vld [vmem:[%s3 + $0x20] sm:$0xf]
  %v161 = vld [vmem:[%s3 + $0x24] sm:$0xf]
  %v162 = vld [vmem:[%s3 + $0x28] sm:$0xf]
  %v163 = vld [vmem:[%s3 + $0x2c] sm:$0xf]
  %v164 = vld [vmem:[%s3 + $0x30] sm:$0xf]
  %v165 = vld [vmem:[%s3 + $0x34] sm:$0xf]
  %v166 = vld [vmem:[%s3 + $0x38] sm:$0xf]
  %v167 = vld [vmem:[%s3 + $0x3c] sm:$0xf]
  %v184 = vunpack.c.l.b16 %v152
  %v185 = vunpack.c.l.b16 %v153
  %v186 = vunpack.c.l.b16 %v154
  %v187 = vunpack.c.l.b16 %v155
  %v188 = vunpack.c.l.b16 %v156
  %v189 = vunpack.c.l.b16 %v157
  %v190 = vunpack.c.l.b16 %v158
  %v191 = vunpack.c.l.b16 %v159
  %v192 = vunpack.c.l.b16 %v160
  %v193 = vunpack.c.l.b16 %v161
  %v194 = vunpack.c.l.b16 %v162
  %v195 = vunpack.c.l.b16 %v163
  %v196 = vunpack.c.l.b16 %v164
  %v197 = vunpack.c.l.b16 %v165
  %v198 = vunpack.c.l.b16 %v166
  %v199 = vunpack.c.l.b16 %v167
  %v200 = vpack.c.b16 %v185, %v184
  %v201 = vpack.c.b16 %v187, %v186
  %v202 = vpack.c.b16 %v189, %v188
  %v203 = vpack.c.b16 %v191, %v190
  %v204 = vpack.c.b16 %v193, %v192
  %v205 = vpack.c.b16 %v195, %v194
  %v206 = vpack.c.b16 %v197, %v196
  %v207 = vpack.c.b16 %v199, %v198
  %216 = vmatpush.bf16.msra.mxu0 %v207
  %217 = vmatpush.bf16.msra.mxu0 %v206
  %218 = vmatpush.bf16.msra.mxu0 %v205
  %219 = vmatpush.bf16.msra.mxu0 %v204
  %220 = vmatpush.bf16.msra.mxu0 %v203
  %221 = vmatpush.bf16.msra.mxu0 %v202
  %222 = vmatpush.bf16.msra.mxu0 %v201
  %223 = vmatpush.bf16.msra.mxu0 %v200
  %224 = vmatmul.bf16.gmra.mxu0 %v128
  %v225 = vpop.f32.mrf.mxu0
  %v226 = vadd.f32 0.0, %v225
  %v227 = vpop.f32.mrf.mxu0
  %v228 = vadd.f32 0.0, %v227
  %229 = vmatmul.bf16.gmra.mxu0 %v129
  %v230 = vpop.f32.mrf.mxu0
  %v231 = vadd.f32 0.0, %v230
  %v232 = vpop.f32.mrf.mxu0
  %v233 = vadd.f32 0.0, %v232
  %234 = vmatmul.bf16.gmra.mxu0 %v130
  %v235 = vpop.f32.mrf.mxu0
  %v236 = vadd.f32 0.0, %v235
  %v237 = vpop.f32.mrf.mxu0
  %v238 = vadd.f32 0.0, %v237
  %239 = vmatmul.bf16.gmra.mxu0 %v131
  %v240 = vpop.f32.mrf.mxu0
  %v241 = vadd.f32 0.0, %v240
  %v242 = vpop.f32.mrf.mxu0
  %v243 = vadd.f32 0.0, %v242
  %244 = vmatmul.bf16.gmra.mxu0 %v132
  %v245 = vpop.f32.mrf.mxu0
  %v246 = vadd.f32 0.0, %v245
  %v247 = vpop.f32.mrf.mxu0
  %v248 = vadd.f32 0.0, %v247
  %249 = vmatmul.bf16.gmra.mxu0 %v133
  %v250 = vpop.f32.mrf.mxu0
  %v251 = vadd.f32 0.0, %v250
  %v252 = vpop.f32.mrf.mxu0
  %v253 = vadd.f32 0.0, %v252
  %254 = vmatmul.bf16.gmra.mxu0 %v134
  %v255 = vpop.f32.mrf.mxu0
  %v256 = vadd.f32 0.0, %v255
  %v257 = vpop.f32.mrf.mxu0
  %v258 = vadd.f32 0.0, %v257
  %259 = vmatmul.bf16.gmra.mxu0 %v135
  %v260 = vpop.f32.mrf.mxu0
  %v261 = vadd.f32 0.0, %v260
  %v262 = vpop.f32.mrf.mxu0
  %v263 = vadd.f32 0.0, %v262
  %264 = vdwg.mxu0
  %v265 = vadd.f32 %v136, %v226
  %v266 = vadd.f32 %v137, %v228
  %v267 = vadd.f32 %v138, %v231
  %v268 = vadd.f32 %v139, %v233
  %v269 = vadd.f32 %v140, %v236
  %v270 = vadd.f32 %v141, %v238
  %v271 = vadd.f32 %v142, %v241
  %v272 = vadd.f32 %v143, %v243
  %v273 = vadd.f32 %v144, %v246
  %v274 = vadd.f32 %v145, %v248
  %v275 = vadd.f32 %v146, %v251
  %v276 = vadd.f32 %v147, %v253
  %v277 = vadd.f32 %v148, %v256
  %v278 = vadd.f32 %v149, %v258
  %v279 = vadd.f32 %v150, %v261
  %v280 = vadd.f32 %v151, %v263
  %281 = vst [vmem:[#allocation2] sm:$0xff] %v265
  %282 = vst [vmem:[#allocation2 + $0x8] sm:$0xff] %v266
  %283 = vst [vmem:[#allocation2 + $0x10] sm:$0xff] %v267
  %284 = vst [vmem:[#allocation2 + $0x18] sm:$0xff] %v268
  %285 = vst [vmem:[#allocation2 + $0x20] sm:$0xff] %v269
  %286 = vst [vmem:[#allocation2 + $0x28] sm:$0xff] %v270
  %287 = vst [vmem:[#allocation2 + $0x30] sm:$0xff] %v271
  %288 = vst [vmem:[#allocation2 + $0x38] sm:$0xff] %v272
  %289 = vst [vmem:[#allocation2 + $0x40] sm:$0xff] %v273
  %290 = vst [vmem:[#allocation2 + $0x48] sm:$0xff] %v274
  %291 = vst [vmem:[#allocation2 + $0x50] sm:$0xff] %v275
  %292 = vst [vmem:[#allocation2 + $0x58] sm:$0xff] %v276
  %293 = vst [vmem:[#allocation2 + $0x60] sm:$0xff] %v277
  %294 = vst [vmem:[#allocation2 + $0x68] sm:$0xff] %v278
  %295 = vst [vmem:[#allocation2 + $0x70] sm:$0xff] %v279
  %296 = vst [vmem:[#allocation2 + $0x78] sm:$0xff] %v280
  // Predicated region
  $region26: #{g_sndcgan_forward.17} parent=0 // pred_check
    %p297 = pneg %p20
  $region27: #{g_sndcgan_forward.17} parent=0 // pred_check_branch
    %299 = sbr.rel (%p297) target = $region29
  $region28: #{g_sndcgan_forward.17} parent=0 // pred_region
    %v300 = vld [vmem:[#allocation2] sm:$0xff]
    %v301 = vld [vmem:[#allocation2 + $0x8] sm:$0xff]
    %v302 = vld [vmem:[#allocation2 + $0x10] sm:$0xff]
    %v303 = vld [vmem:[#allocation2 + $0x18] sm:$0xff]
    %v304 = vld [vmem:[#allocation2 + $0x20] sm:$0xff]
    %v305 = vld [vmem:[#allocation2 + $0x28] sm:$0xff]
    %v306 = vld [vmem:[#allocation2 + $0x30] sm:$0xff]
    %v307 = vld [vmem:[#allocation2 + $0x38] sm:$0xff]
    %v308 = vld [vmem:[#allocation2 + $0x40] sm:$0xff]
    %v309 = vld [vmem:[#allocation2 + $0x48] sm:$0xff]
    %v310 = vld [vmem:[#allocation2 + $0x50] sm:$0xff]
    %v311 = vld [vmem:[#allocation2 + $0x58] sm:$0xff]
    %v312 = vld [vmem:[#allocation2 + $0x60] sm:$0xff]
    %v313 = vld [vmem:[#allocation2 + $0x68] sm:$0xff]
    %v314 = vld [vmem:[#allocation2 + $0x70] sm:$0xff]
    %v315 = vld [vmem:[#allocation2 + $0x78] sm:$0xff]
    %v316 = vld [vmem:[%s4] sm:$0x1]
    %v318 = vperm.slane %v316, 0
    %v320 = vadd.f32 %v300, %v318
    %v321 = vadd.f32 %v301, %v318
    %v322 = vadd.f32 %v302, %v318
    %v323 = vadd.f32 %v303, %v318
    %v324 = vadd.f32 %v304, %v318
    %v325 = vadd.f32 %v305, %v318
    %v326 = vadd.f32 %v306, %v318
    %v327 = vadd.f32 %v307, %v318
    %v328 = vadd.f32 %v308, %v318
    %v329 = vadd.f32 %v309, %v318
    %v330 = vadd.f32 %v310, %v318
    %v331 = vadd.f32 %v311, %v318
    %v332 = vadd.f32 %v312, %v318
    %v333 = vadd.f32 %v313, %v318
    %v334 = vadd.f32 %v314, %v318
    %v335 = vadd.f32 %v315, %v318
    %v336 = vpack.c.bf16 %v320, %v320
    %v337 = vpack.c.bf16 %v321, %v321
    %v338 = vpack.c.bf16 %v322, %v322
    %v339 = vpack.c.bf16 %v323, %v323
    %v340 = vpack.c.bf16 %v324, %v324
    %v341 = vpack.c.bf16 %v325, %v325
    %v342 = vpack.c.bf16 %v326, %v326
    %v343 = vpack.c.bf16 %v327, %v327
    %v344 = vpack.c.bf16 %v328, %v328
    %v345 = vpack.c.bf16 %v329, %v329
    %v346 = vpack.c.bf16 %v330, %v330
    %v347 = vpack.c.bf16 %v331, %v331
    %v348 = vpack.c.bf16 %v332, %v332
    %v349 = vpack.c.bf16 %v333, %v333
    %v350 = vpack.c.bf16 %v334, %v334
    %v351 = vpack.c.bf16 %v335, %v335
    %352 = vst [vmem:[%s5] sm:$0xf] %v336
    %353 = vst [vmem:[%s5 + $0x4] sm:$0xf] %v337
    %354 = vst [vmem:[%s5 + $0x8] sm:$0xf] %v338
    %355 = vst [vmem:[%s5 + $0xc] sm:$0xf] %v339
    %356 = vst [vmem:[%s5 + $0x10] sm:$0xf] %v340
    %357 = vst [vmem:[%s5 + $0x14] sm:$0xf] %v341
    %358 = vst [vmem:[%s5 + $0x18] sm:$0xf] %v342
    %359 = vst [vmem:[%s5 + $0x1c] sm:$0xf] %v343
    %360 = vst [vmem:[%s5 + $0x20] sm:$0xf] %v344
    %361 = vst [vmem:[%s5 + $0x24] sm:$0xf] %v345
    %362 = vst [vmem:[%s5 + $0x28] sm:$0xf] %v346
    %363 = vst [vmem:[%s5 + $0x2c] sm:$0xf] %v347
    %364 = vst [vmem:[%s5 + $0x30] sm:$0xf] %v348
    %365 = vst [vmem:[%s5 + $0x34] sm:$0xf] %v349
    %366 = vst [vmem:[%s5 + $0x38] sm:$0xf] %v350
    %367 = vst [vmem:[%s5 + $0x3c] sm:$0xf] %v351
  $region29: #{g_sndcgan_forward.17} parent=0 // pred_fallthru
    _
  // Predicated region
  $region30: #{g_sndcgan_forward.17} parent=0 // pred_check
    _
  $region31: #{g_sndcgan_forward.17} parent=0 // pred_check_branch
    %369 = sbr.rel (0) target = $region33
  $region32: #{g_sndcgan_forward.17} parent=0 // pred_region
    _
  $region33: #{g_sndcgan_forward.17} parent=0 // pred_fallthru
    _
  // Predicated region
  $region34: #{g_sndcgan_forward.17} parent=0 // pred_check
    _
  $region35: #{g_sndcgan_forward.17} parent=0 // pred_check_branch
    %371 = sbr.rel (0) target = $region37
  $region36: #{g_sndcgan_forward.17} parent=0 // pred_region
    _
  $region37: #{g_sndcgan_forward.17} parent=0 // pred_fallthru
    _

// kernel: g_sndcgan_forward.18
$region0: #{g_sndcgan_forward.18}
  #allocation0 [shape = 'u32[]', space=smem, size = 0x4, offset = 0x4, fixed_abs, tag = 'smem constant byte address 0x4 - core index']
  #allocation1 [shape = 'u32[72,128]{1,0:T(1,128)}', space=vmem, size = 0x9000, scoped, tag = 'internal scratch']
  #allocation2 [shape = 'f32[1,8]{1,0:T(1,128)}', space=vmem, size = 0x200, scoped, tag = 'scratch operand']
  #allocation3 [shape = 'f32[1,8]{1,0:T(1,128)}', space=vmem, size = 0x200, scoped, tag = 'scratch operand']
  %s0 = inlined_call_operand.vmem [shape: bf16[512,8], index: 0, kind: input, shape index: {}]
  %s1 = inlined_call_operand.vmem [shape: f32[1,8], index: 1, kind: output, shape index: {0}]
  %s2 = inlined_call_operand.vmem [shape: f32[1,8], index: 2, kind: output, shape index: {1}]
  %3 = xla_tuple %s1, %s2
  %s4 = sld [smem:[#allocation0]]
  $region30: #{g_sndcgan_forward.18} parent=0
    _
  %s6 = ssub.s32 1, %s4
  %s7 = scalar_select 0, %s6, %s4
  // Predicated region
  $region2: #{g_sndcgan_forward.18} parent=0 // pred_check
    _
  $region3: #{g_sndcgan_forward.18} parent=0 // pred_check_branch
    %9 = sbr.rel (0) target = $region5
  $region4: #{g_sndcgan_forward.18} parent=0 // pred_region
    _
  $region5: #{g_sndcgan_forward.18} parent=0 // pred_fallthru
    _
  %p10 = scmp.eq.s32.totalorder 0, 0
  // Predicated region
  $region6: #{g_sndcgan_forward.18} parent=0 // pred_check
    %p11 = pneg %p10
  $region7: #{g_sndcgan_forward.18} parent=0 // pred_check_branch
    %13 = sbr.rel (%p11) target = $region9
  $region8: #{g_sndcgan_forward.18} parent=0 // pred_region
    %vm14 = vcmask 57344
    %15 = vst.msk [vmem:[#allocation2] sm:$0x1] %vm14, 0.0
    %16 = vst.msk [vmem:[#allocation3] sm:$0x1] %vm14, 0.0
  $region9: #{g_sndcgan_forward.18} parent=0 // pred_fallthru
    _
  %v17 = vld [vmem:[%s0] sm:$0xf]
  %v18 = vld [vmem:[%s0 + $0x4] sm:$0xf]
  %v19 = vld [vmem:[%s0 + $0x8] sm:$0xf]
  %v20 = vld [vmem:[%s0 + $0xc] sm:$0xf]
  %v21 = vld [vmem:[%s0 + $0x10] sm:$0xf]
  %v22 = vld [vmem:[%s0 + $0x14] sm:$0xf]
  %v23 = vld [vmem:[%s0 + $0x18] sm:$0xf]
  %v24 = vld [vmem:[%s0 + $0x1c] sm:$0xf]
  %v25 = vld [vmem:[%s0 + $0x20] sm:$0xf]
  %v26 = vld [vmem:[%s0 + $0x24] sm:$0xf]
  %v27 = vld [vmem:[%s0 + $0x28] sm:$0xf]
  %v28 = vld [vmem:[%s0 + $0x2c] sm:$0xf]
  %v29 = vld [vmem:[%s0 + $0x30] sm:$0xf]
  %v30 = vld [vmem:[%s0 + $0x34] sm:$0xf]
  %v31 = vld [vmem:[%s0 + $0x38] sm:$0xf]
  %v32 = vld [vmem:[%s0 + $0x3c] sm:$0xf]
  %v33 = vld [vmem:[%s0 + $0x40] sm:$0xf]
  %v34 = vld [vmem:[%s0 + $0x44] sm:$0xf]
  %v35 = vld [vmem:[%s0 + $0x48] sm:$0xf]
  %v36 = vld [vmem:[%s0 + $0x4c] sm:$0xf]
  %v37 = vld [vmem:[%s0 + $0x50] sm:$0xf]
  %v38 = vld [vmem:[%s0 + $0x54] sm:$0xf]
  %v39 = vld [vmem:[%s0 + $0x58] sm:$0xf]
  %v40 = vld [vmem:[%s0 + $0x5c] sm:$0xf]
  %v41 = vld [vmem:[%s0 + $0x60] sm:$0xf]
  %v42 = vld [vmem:[%s0 + $0x64] sm:$0xf]
  %v43 = vld [vmem:[%s0 + $0x68] sm:$0xf]
  %v44 = vld [vmem:[%s0 + $0x6c] sm:$0xf]
  %v45 = vld [vmem:[%s0 + $0x70] sm:$0xf]
  %v46 = vld [vmem:[%s0 + $0x74] sm:$0xf]
  %v47 = vld [vmem:[%s0 + $0x78] sm:$0xf]
  %v48 = vld [vmem:[%s0 + $0x7c] sm:$0xf]
  %v49 = vld [vmem:[%s0 + $0x80] sm:$0xf]
  %v50 = vld [vmem:[%s0 + $0x84] sm:$0xf]
  %v51 = vld [vmem:[%s0 + $0x88] sm:$0xf]
  %v52 = vld [vmem:[%s0 + $0x8c] sm:$0xf]
  %v53 = vld [vmem:[%s0 + $0x90] sm:$0xf]
  %v54 = vld [vmem:[%s0 + $0x94] sm:$0xf]
  %v55 = vld [vmem:[%s0 + $0x98] sm:$0xf]
  %v56 = vld [vmem:[%s0 + $0x9c] sm:$0xf]
  %v57 = vld [vmem:[%s0 + $0xa0] sm:$0xf]
  %v58 = vld [vmem:[%s0 + $0xa4] sm:$0xf]
  %v59 = vld [vmem:[%s0 + $0xa8] sm:$0xf]
  %v60 = vld [vmem:[%s0 + $0xac] sm:$0xf]
  %v61 = vld [vmem:[%s0 + $0xb0] sm:$0xf]
  %v62 = vld [vmem:[%s0 + $0xb4] sm:$0xf]
  %v63 = vld [vmem:[%s0 + $0xb8] sm:$0xf]
  %v64 = vld [vmem:[%s0 + $0xbc] sm:$0xf]
  %v65 = vld [vmem:[%s0 + $0xc0] sm:$0xf]
  %v66 = vld [vmem:[%s0 + $0xc4] sm:$0xf]
  %v67 = vld [vmem:[%s0 + $0xc8] sm:$0xf]
  %v68 = vld [vmem:[%s0 + $0xcc] sm:$0xf]
  %v69 = vld [vmem:[%s0 + $0xd0] sm:$0xf]
  %v70 = vld [vmem:[%s0 + $0xd4] sm:$0xf]
  %v71 = vld [vmem:[%s0 + $0xd8] sm:$0xf]
  %v72 = vld [vmem:[%s0 + $0xdc] sm:$0xf]
  %v73 = vld [vmem:[%s0 + $0xe0] sm:$0xf]
  %v74 = vld [vmem:[%s0 + $0xe4] sm:$0xf]
  %v75 = vld [vmem:[%s0 + $0xe8] sm:$0xf]
  %v76 = vld [vmem:[%s0 + $0xec] sm:$0xf]
  %v77 = vld [vmem:[%s0 + $0xf0] sm:$0xf]
  %v78 = vld [vmem:[%s0 + $0xf4] sm:$0xf]
  %v79 = vld [vmem:[%s0 + $0xf8] sm:$0xf]
  %v80 = vld [vmem:[%s0 + $0xfc] sm:$0xf]
  %v81 = vunpack.c.l.bf16 %v17
  %v82 = vunpack.c.l.bf16 %v18
  %v83 = vunpack.c.l.bf16 %v19
  %v84 = vunpack.c.l.bf16 %v20
  %v85 = vunpack.c.l.bf16 %v21
  %v86 = vunpack.c.l.bf16 %v22
  %v87 = vunpack.c.l.bf16 %v23
  %v88 = vunpack.c.l.bf16 %v24
  %v89 = vunpack.c.l.bf16 %v25
  %v90 = vunpack.c.l.bf16 %v26
  %v91 = vunpack.c.l.bf16 %v27
  %v92 = vunpack.c.l.bf16 %v28
  %v93 = vunpack.c.l.bf16 %v29
  %v94 = vunpack.c.l.bf16 %v30
  %v95 = vunpack.c.l.bf16 %v31
  %v96 = vunpack.c.l.bf16 %v32
  %v97 = vunpack.c.l.bf16 %v33
  %v98 = vunpack.c.l.bf16 %v34
  %v99 = vunpack.c.l.bf16 %v35
  %v100 = vunpack.c.l.bf16 %v36
  %v101 = vunpack.c.l.bf16 %v37
  %v102 = vunpack.c.l.bf16 %v38
  %v103 = vunpack.c.l.bf16 %v39
  %v104 = vunpack.c.l.bf16 %v40
  %v105 = vunpack.c.l.bf16 %v41
  %v106 = vunpack.c.l.bf16 %v42
  %v107 = vunpack.c.l.bf16 %v43
  %v108 = vunpack.c.l.bf16 %v44
  %v109 = vunpack.c.l.bf16 %v45
  %v110 = vunpack.c.l.bf16 %v46
  %v111 = vunpack.c.l.bf16 %v47
  %v112 = vunpack.c.l.bf16 %v48
  %v113 = vunpack.c.l.bf16 %v49
  %v114 = vunpack.c.l.bf16 %v50
  %v115 = vunpack.c.l.bf16 %v51
  %v116 = vunpack.c.l.bf16 %v52
  %v117 = vunpack.c.l.bf16 %v53
  %v118 = vunpack.c.l.bf16 %v54
  %v119 = vunpack.c.l.bf16 %v55
  %v120 = vunpack.c.l.bf16 %v56
  %v121 = vunpack.c.l.bf16 %v57
  %v122 = vunpack.c.l.bf16 %v58
  %v123 = vunpack.c.l.bf16 %v59
  %v124 = vunpack.c.l.bf16 %v60
  %v125 = vunpack.c.l.bf16 %v61
  %v126 = vunpack.c.l.bf16 %v62
  %v127 = vunpack.c.l.bf16 %v63
  %v128 = vunpack.c.l.bf16 %v64
  %v129 = vunpack.c.l.bf16 %v65
  %v130 = vunpack.c.l.bf16 %v66
  %v131 = vunpack.c.l.bf16 %v67
  %v132 = vunpack.c.l.bf16 %v68
  %v133 = vunpack.c.l.bf16 %v69
  %v134 = vunpack.c.l.bf16 %v70
  %v135 = vunpack.c.l.bf16 %v71
  %v136 = vunpack.c.l.bf16 %v72
  %v137 = vunpack.c.l.bf16 %v73
  %v138 = vunpack.c.l.bf16 %v74
  %v139 = vunpack.c.l.bf16 %v75
  %v140 = vunpack.c.l.bf16 %v76
  %v141 = vunpack.c.l.bf16 %v77
  %v142 = vunpack.c.l.bf16 %v78
  %v143 = vunpack.c.l.bf16 %v79
  %v144 = vunpack.c.l.bf16 %v80
  %v145 = vld [vmem:[#allocation2] sm:$0x1]
  %vm146 = vcmask 64512
  %v147 = vsel %vm146, %v81, 0.0
  %v148 = vsel %vm146, %v82, 0.0
  %v149 = vadd.f32 %v147, %v148
  %v150 = vsel %vm146, %v83, 0.0
  %v151 = vadd.f32 %v149, %v150
  %v152 = vsel %vm146, %v84, 0.0
  %v153 = vadd.f32 %v151, %v152
  %v154 = vsel %vm146, %v85, 0.0
  %v155 = vadd.f32 %v153, %v154
  %v156 = vsel %vm146, %v86, 0.0
  %v157 = vadd.f32 %v155, %v156
  %v158 = vsel %vm146, %v87, 0.0
  %v159 = vadd.f32 %v157, %v158
  %v160 = vsel %vm146, %v88, 0.0
  %v161 = vadd.f32 %v159, %v160
  %v162 = vsel %vm146, %v89, 0.0
  %v163 = vadd.f32 %v161, %v162
  %v164 = vsel %vm146, %v90, 0.0
  %v165 = vadd.f32 %v163, %v164
  %v166 = vsel %vm146, %v91, 0.0
  %v167 = vadd.f32 %v165, %v166
  %v168 = vsel %vm146, %v92, 0.0
  %v169 = vadd.f32 %v167, %v168
  %v170 = vsel %vm146, %v93, 0.0
  %v171 = vadd.f32 %v169, %v170
  %v172 = vsel %vm146, %v94, 0.0
  %v173 = vadd.f32 %v171, %v172
  %v174 = vsel %vm146, %v95, 0.0
  %v175 = vadd.f32 %v173, %v174
  %v176 = vsel %vm146, %v96, 0.0
  %v177 = vadd.f32 %v175, %v176
  %v178 = vsel %vm146, %v97, 0.0
  %v179 = vadd.f32 %v177, %v178
  %v180 = vsel %vm146, %v98, 0.0
  %v181 = vadd.f32 %v179, %v180
  %v182 = vsel %vm146, %v99, 0.0
  %v183 = vadd.f32 %v181, %v182
  %v184 = vsel %vm146, %v100, 0.0
  %v185 = vadd.f32 %v183, %v184
  %v186 = vsel %vm146, %v101, 0.0
  %v187 = vadd.f32 %v185, %v186
  %v188 = vsel %vm146, %v102, 0.0
  %v189 = vadd.f32 %v187, %v188
  %v190 = vsel %vm146, %v103, 0.0
  %v191 = vadd.f32 %v189, %v190
  %v192 = vsel %vm146, %v104, 0.0
  %v193 = vadd.f32 %v191, %v192
  %v194 = vsel %vm146, %v105, 0.0
  %v195 = vadd.f32 %v193, %v194
  %v196 = vsel %vm146, %v106, 0.0
  %v197 = vadd.f32 %v195, %v196
  %v198 = vsel %vm146, %v107, 0.0
  %v199 = vadd.f32 %v197, %v198
  %v200 = vsel %vm146, %v108, 0.0
  %v201 = vadd.f32 %v199, %v200
  %v202 = vsel %vm146, %v109, 0.0
  %v203 = vadd.f32 %v201, %v202
  %v204 = vsel %vm146, %v110, 0.0
  %v205 = vadd.f32 %v203, %v204
  %v206 = vsel %vm146, %v111, 0.0
  %v207 = vadd.f32 %v205, %v206
  %v208 = vsel %vm146, %v112, 0.0
  %v209 = vadd.f32 %v207, %v208
  %v210 = vsel %vm146, %v113, 0.0
  %v211 = vadd.f32 %v209, %v210
  %v212 = vsel %vm146, %v114, 0.0
  %v213 = vadd.f32 %v211, %v212
  %v214 = vsel %vm146, %v115, 0.0
  %v215 = vadd.f32 %v213, %v214
  %v216 = vsel %vm146, %v116, 0.0
  %v217 = vadd.f32 %v215, %v216
  %v218 = vsel %vm146, %v117, 0.0
  %v219 = vadd.f32 %v217, %v218
  %v220 = vsel %vm146, %v118, 0.0
  %v221 = vadd.f32 %v219, %v220
  %v222 = vsel %vm146, %v119, 0.0
  %v223 = vadd.f32 %v221, %v222
  %v224 = vsel %vm146, %v120, 0.0
  %v225 = vadd.f32 %v223, %v224
  %v226 = vsel %vm146, %v121, 0.0
  %v227 = vadd.f32 %v225, %v226
  %v228 = vsel %vm146, %v122, 0.0
  %v229 = vadd.f32 %v227, %v228
  %v230 = vsel %vm146, %v123, 0.0
  %v231 = vadd.f32 %v229, %v230
  %v232 = vsel %vm146, %v124, 0.0
  %v233 = vadd.f32 %v231, %v232
  %v234 = vsel %vm146, %v125, 0.0
  %v235 = vadd.f32 %v233, %v234
  %v236 = vsel %vm146, %v126, 0.0
  %v237 = vadd.f32 %v235, %v236
  %v238 = vsel %vm146, %v127, 0.0
  %v239 = vadd.f32 %v237, %v238
  %v240 = vsel %vm146, %v128, 0.0
  %v241 = vadd.f32 %v239, %v240
  %v242 = vsel %vm146, %v129, 0.0
  %v243 = vadd.f32 %v241, %v242
  %v244 = vsel %vm146, %v130, 0.0
  %v245 = vadd.f32 %v243, %v244
  %v246 = vsel %vm146, %v131, 0.0
  %v247 = vadd.f32 %v245, %v246
  %v248 = vsel %vm146, %v132, 0.0
  %v249 = vadd.f32 %v247, %v248
  %v250 = vsel %vm146, %v133, 0.0
  %v251 = vadd.f32 %v249, %v250
  %v252 = vsel %vm146, %v134, 0.0
  %v253 = vadd.f32 %v251, %v252
  %v254 = vsel %vm146, %v135, 0.0
  %v255 = vadd.f32 %v253, %v254
  %v256 = vsel %vm146, %v136, 0.0
  %v257 = vadd.f32 %v255, %v256
  %v258 = vsel %vm146, %v137, 0.0
  %v259 = vadd.f32 %v257, %v258
  %v260 = vsel %vm146, %v138, 0.0
  %v261 = vadd.f32 %v259, %v260
  %v262 = vsel %vm146, %v139, 0.0
  %v263 = vadd.f32 %v261, %v262
  %v264 = vsel %vm146, %v140, 0.0
  %v265 = vadd.f32 %v263, %v264
  %v266 = vsel %vm146, %v141, 0.0
  %v267 = vadd.f32 %v265, %v266
  %v268 = vsel %vm146, %v142, 0.0
  %v269 = vadd.f32 %v267, %v268
  %v270 = vsel %vm146, %v143, 0.0
  %v271 = vadd.f32 %v269, %v270
  %v272 = vsel %vm146, %v144, 0.0
  %v273 = vadd.f32 %v271, %v272
  %v274 = vrot.slane %v273, 4
  %v275 = vadd.f32 %v273, %v274
  %v276 = vrot.slane %v275, 2
  %v277 = vadd.f32 %v275, %v276
  %v278 = vrot.slane %v277, 1
  %v279 = vadd.f32 %v277, %v278
  %v280 = vadd.f32 %v145, %v279
  %vm281 = vcmask 57344
  %282 = vst.msk [vmem:[#allocation2] sm:$0x1] %vm281, %v280
  %v283 = vld [vmem:[#allocation3] sm:$0x1]
  %v284 = vmul.f32 %v81, %v81
  %v285 = vmul.f32 %v82, %v82
  %v286 = vmul.f32 %v83, %v83
  %v287 = vmul.f32 %v84, %v84
  %v288 = vmul.f32 %v85, %v85
  %v289 = vmul.f32 %v86, %v86
  %v290 = vmul.f32 %v87, %v87
  %v291 = vmul.f32 %v88, %v88
  %v292 = vmul.f32 %v89, %v89
  %v293 = vmul.f32 %v90, %v90
  %v294 = vmul.f32 %v91, %v91
  %v295 = vmul.f32 %v92, %v92
  %v296 = vmul.f32 %v93, %v93
  %v297 = vmul.f32 %v94, %v94
  %v298 = vmul.f32 %v95, %v95
  %v299 = vmul.f32 %v96, %v96
  %v300 = vmul.f32 %v97, %v97
  %v301 = vmul.f32 %v98, %v98
  %v302 = vmul.f32 %v99, %v99
  %v303 = vmul.f32 %v100, %v100
  %v304 = vmul.f32 %v101, %v101
  %v305 = vmul.f32 %v102, %v102
  %v306 = vmul.f32 %v103, %v103
  %v307 = vmul.f32 %v104, %v104
  %v308 = vmul.f32 %v105, %v105
  %v309 = vmul.f32 %v106, %v106
  %v310 = vmul.f32 %v107, %v107
  %v311 = vmul.f32 %v108, %v108
  %v312 = vmul.f32 %v109, %v109
  %v313 = vmul.f32 %v110, %v110
  %v314 = vmul.f32 %v111, %v111
  %v315 = vmul.f32 %v112, %v112
  %v316 = vmul.f32 %v113, %v113
  %v317 = vmul.f32 %v114, %v114
  %v318 = vmul.f32 %v115, %v115
  %v319 = vmul.f32 %v116, %v116
  %v320 = vmul.f32 %v117, %v117
  %v321 = vmul.f32 %v118, %v118
  %v322 = vmul.f32 %v119, %v119
  %v323 = vmul.f32 %v120, %v120
  %v324 = vmul.f32 %v121, %v121
  %v325 = vmul.f32 %v122, %v122
  %v326 = vmul.f32 %v123, %v123
  %v327 = vmul.f32 %v124, %v124
  %v328 = vmul.f32 %v125, %v125
  %v329 = vmul.f32 %v126, %v126
  %v330 = vmul.f32 %v127, %v127
  %v331 = vmul.f32 %v128, %v128
  %v332 = vmul.f32 %v129, %v129
  %v333 = vmul.f32 %v130, %v130
  %v334 = vmul.f32 %v131, %v131
  %v335 = vmul.f32 %v132, %v132
  %v336 = vmul.f32 %v133, %v133
  %v337 = vmul.f32 %v134, %v134
  %v338 = vmul.f32 %v135, %v135
  %v339 = vmul.f32 %v136, %v136
  %v340 = vmul.f32 %v137, %v137
  %v341 = vmul.f32 %v138, %v138
  %v342 = vmul.f32 %v139, %v139
  %v343 = vmul.f32 %v140, %v140
  %v344 = vmul.f32 %v141, %v141
  %v345 = vmul.f32 %v142, %v142
  %v346 = vmul.f32 %v143, %v143
  %v347 = vmul.f32 %v144, %v144
  %v348 = vsel %vm146, %v284, 0.0
  %v349 = vsel %vm146, %v285, 0.0
  %v350 = vadd.f32 %v348, %v349
  %v351 = vsel %vm146, %v286, 0.0
  %v352 = vadd.f32 %v350, %v351
  %v353 = vsel %vm146, %v287, 0.0
  %v354 = vadd.f32 %v352, %v353
  %v355 = vsel %vm146, %v288, 0.0
  %v356 = vadd.f32 %v354, %v355
  %v357 = vsel %vm146, %v289, 0.0
  %v358 = vadd.f32 %v356, %v357
  %v359 = vsel %vm146, %v290, 0.0
  %v360 = vadd.f32 %v358, %v359
  %v361 = vsel %vm146, %v291, 0.0
  %v362 = vadd.f32 %v360, %v361
  %v363 = vsel %vm146, %v292, 0.0
  %v364 = vadd.f32 %v362, %v363
  %v365 = vsel %vm146, %v293, 0.0
  %v366 = vadd.f32 %v364, %v365
  %v367 = vsel %vm146, %v294, 0.0
  %v368 = vadd.f32 %v366, %v367
  %v369 = vsel %vm146, %v295, 0.0
  %v370 = vadd.f32 %v368, %v369
  %v371 = vsel %vm146, %v296, 0.0
  %v372 = vadd.f32 %v370, %v371
  %v373 = vsel %vm146, %v297, 0.0
  %v374 = vadd.f32 %v372, %v373
  %v375 = vsel %vm146, %v298, 0.0
  %v376 = vadd.f32 %v374, %v375
  %v377 = vsel %vm146, %v299, 0.0
  %v378 = vadd.f32 %v376, %v377
  %v379 = vsel %vm146, %v300, 0.0
  %v380 = vadd.f32 %v378, %v379
  %v381 = vsel %vm146, %v301, 0.0
  %v382 = vadd.f32 %v380, %v381
  %v383 = vsel %vm146, %v302, 0.0
  %v384 = vadd.f32 %v382, %v383
  %v385 = vsel %vm146, %v303, 0.0
  %v386 = vadd.f32 %v384, %v385
  %v387 = vsel %vm146, %v304, 0.0
  %v388 = vadd.f32 %v386, %v387
  %v389 = vsel %vm146, %v305, 0.0
  %v390 = vadd.f32 %v388, %v389
  %v391 = vsel %vm146, %v306, 0.0
  %v392 = vadd.f32 %v390, %v391
  %v393 = vsel %vm146, %v307, 0.0
  %v394 = vadd.f32 %v392, %v393
  %v395 = vsel %vm146, %v308, 0.0
  %v396 = vadd.f32 %v394, %v395
  %v397 = vsel %vm146, %v309, 0.0
  %v398 = vadd.f32 %v396, %v397
  %v399 = vsel %vm146, %v310, 0.0
  %v400 = vadd.f32 %v398, %v399
  %v401 = vsel %vm146, %v311, 0.0
  %v402 = vadd.f32 %v400, %v401
  %v403 = vsel %vm146, %v312, 0.0
  %v404 = vadd.f32 %v402, %v403
  %v405 = vsel %vm146, %v313, 0.0
  %v406 = vadd.f32 %v404, %v405
  %v407 = vsel %vm146, %v314, 0.0
  %v408 = vadd.f32 %v406, %v407
  %v409 = vsel %vm146, %v315, 0.0
  %v410 = vadd.f32 %v408, %v409
  %v411 = vsel %vm146, %v316, 0.0
  %v412 = vadd.f32 %v410, %v411
  %v413 = vsel %vm146, %v317, 0.0
  %v414 = vadd.f32 %v412, %v413
  %v415 = vsel %vm146, %v318, 0.0
  %v416 = vadd.f32 %v414, %v415
  %v417 = vsel %vm146, %v319, 0.0
  %v418 = vadd.f32 %v416, %v417
  %v419 = vsel %vm146, %v320, 0.0
  %v420 = vadd.f32 %v418, %v419
  %v421 = vsel %vm146, %v321, 0.0
  %v422 = vadd.f32 %v420, %v421
  %v423 = vsel %vm146, %v322, 0.0
  %v424 = vadd.f32 %v422, %v423
  %v425 = vsel %vm146, %v323, 0.0
  %v426 = vadd.f32 %v424, %v425
  %v427 = vsel %vm146, %v324, 0.0
  %v428 = vadd.f32 %v426, %v427
  %v429 = vsel %vm146, %v325, 0.0
  %v430 = vadd.f32 %v428, %v429
  %v431 = vsel %vm146, %v326, 0.0
  %v432 = vadd.f32 %v430, %v431
  %v433 = vsel %vm146, %v327, 0.0
  %v434 = vadd.f32 %v432, %v433
  %v435 = vsel %vm146, %v328, 0.0
  %v436 = vadd.f32 %v434, %v435
  %v437 = vsel %vm146, %v329, 0.0
  %v438 = vadd.f32 %v436, %v437
  %v439 = vsel %vm146, %v330, 0.0
  %v440 = vadd.f32 %v438, %v439
  %v441 = vsel %vm146, %v331, 0.0
  %v442 = vadd.f32 %v440, %v441
  %v443 = vsel %vm146, %v332, 0.0
  %v444 = vadd.f32 %v442, %v443
  %v445 = vsel %vm146, %v333, 0.0
  %v446 = vadd.f32 %v444, %v445
  %v447 = vsel %vm146, %v334, 0.0
  %v448 = vadd.f32 %v446, %v447
  %v449 = vsel %vm146, %v335, 0.0
  %v450 = vadd.f32 %v448, %v449
  %v451 = vsel %vm146, %v336, 0.0
  %v452 = vadd.f32 %v450, %v451
  %v453 = vsel %vm146, %v337, 0.0
  %v454 = vadd.f32 %v452, %v453
  %v455 = vsel %vm146, %v338, 0.0
  %v456 = vadd.f32 %v454, %v455
  %v457 = vsel %vm146, %v339, 0.0
  %v458 = vadd.f32 %v456, %v457
  %v459 = vsel %vm146, %v340, 0.0
  %v460 = vadd.f32 %v458, %v459
  %v461 = vsel %vm146, %v341, 0.0
  %v462 = vadd.f32 %v460, %v461
  %v463 = vsel %vm146, %v342, 0.0
  %v464 = vadd.f32 %v462, %v463
  %v465 = vsel %vm146, %v343, 0.0
  %v466 = vadd.f32 %v464, %v465
  %v467 = vsel %vm146, %v344, 0.0
  %v468 = vadd.f32 %v466, %v467
  %v469 = vsel %vm146, %v345, 0.0
  %v470 = vadd.f32 %v468, %v469
  %v471 = vsel %vm146, %v346, 0.0
  %v472 = vadd.f32 %v470, %v471
  %v473 = vsel %vm146, %v347, 0.0
  %v474 = vadd.f32 %v472, %v473
  %v475 = vrot.slane %v474, 4
  %v476 = vadd.f32 %v474, %v475
  %v477 = vrot.slane %v476, 2
  %v478 = vadd.f32 %v476, %v477
  %v479 = vrot.slane %v478, 1
  %v480 = vadd.f32 %v478, %v479
  %v481 = vadd.f32 %v283, %v480
  %482 = vst.msk [vmem:[#allocation3] sm:$0x1] %vm281, %v481
  // Predicated region
  $region10: #{g_sndcgan_forward.18} parent=0 // pred_check
    %p483 = pneg %p10
  $region11: #{g_sndcgan_forward.18} parent=0 // pred_check_branch
    %485 = sbr.rel (%p483) target = $region13
  $region12: #{g_sndcgan_forward.18} parent=0 // pred_region
    %v486 = vld [vmem:[#allocation2] sm:$0x1]
    %487 = vst.msk [vmem:[%s1] sm:$0x1] %vm281, %v486
    %v488 = vld [vmem:[#allocation3] sm:$0x1]
    %489 = vst.msk [vmem:[%s2] sm:$0x1] %vm281, %v488
  $region13: #{g_sndcgan_forward.18} parent=0 // pred_fallthru
    _
  // Predicated region
  $region14: #{g_sndcgan_forward.18} parent=0 // pred_check
    _
  $region15: #{g_sndcgan_forward.18} parent=0 // pred_check_branch
    %491 = sbr.rel (0) target = $region17
  $region16: #{g_sndcgan_forward.18} parent=0 // pred_region
    _
  $region17: #{g_sndcgan_forward.18} parent=0 // pred_fallthru
    _
  // Predicated region
  $region18: #{g_sndcgan_forward.18} parent=0 // pred_check
    _
  $region19: #{g_sndcgan_forward.18} parent=0 // pred_check_branch
    %493 = sbr.rel (0) target = $region21
  $region20: #{g_sndcgan_forward.18} parent=0 // pred_region
    _
  $region21: #{g_sndcgan_forward.18} parent=0 // pred_fallthru
    _
  // Predicated region
  $region22: #{g_sndcgan_forward.18} parent=0 // pred_check
    _
  $region23: #{g_sndcgan_forward.18} parent=0 // pred_check_branch
    %495 = sbr.rel (0) target = $region25
  $region24: #{g_sndcgan_forward.18} parent=0 // pred_region
    _
  $region25: #{g_sndcgan_forward.18} parent=0 // pred_fallthru
    _
  // Predicated region
  $region26: #{g_sndcgan_forward.18} parent=0 // pred_check
    _
  $region27: #{g_sndcgan_forward.18} parent=0 // pred_check_branch
    %497 = sbr.rel (0) target = $region29
  $region28: #{g_sndcgan_forward.18} parent=0 // pred_region
    _
  $region29: #{g_sndcgan_forward.18} parent=0 // pred_fallthru
    _

// kernel: tile.18
$region0: #{tile.18}
  #allocation0 [shape = 's32[1]{0}', space=sflag, size = 0x4, scoped, tag = 'scoped memory for tile.18']
  %s0 = inlined_call_operand.vmem [shape: f32[8], index: 0, kind: input, shape index: {}]
  %s1 = inlined_call_operand.vmem [shape: f32[9,8], index: 1, kind: output, shape index: {}]
  // Predicated region
  $region2: #{tile.18} parent=0 // pred_check
    _
  $region3: #{tile.18} parent=0 // pred_check_branch
    %3 = sbr.rel (0) target = $region5
  $region4: #{tile.18} parent=0 // pred_region
    _
  $region5: #{tile.18} parent=0 // pred_fallthru
    _
  %v4 = vld [vmem:[%s0] ss:$0 sm:$0xff]
  %5 = vst [vmem:[%s1] sm:$0xff] %v4
  %s6 = scalar_lea.vmem %s1, 8
  %7 = vst [vmem:[%s6] sm:$0xff] %v4

// kernel: tile.19
$region0: #{tile.19}
  %s0 = inlined_call_operand.vmem [shape: f32[9,8], index: 0, kind: input, shape index: {}]
  %s1 = inlined_call_operand.vmem [shape: f32[72], index: 1, kind: output, shape index: {}]
  $region1: #{tile.19} parent=0
    #allocation0 [shape = 'u8[4096]{0}', space=vmem, size = 0x1000, scoped, tag = 'scoped mem for output reshape']
    %v2 = vld [vmem:[%s0] sm:$0x1]
    %vm3 = vcmask 64512
    %4 = vst.msk [vmem:[#allocation0] sm:$0x1] %vm3, %v2
    %s5 = scalar_lea.vmem %s0, 8
    %v6 = vld [vmem:[%s5] sm:$0x1]
    %7 = vrot.lane.b32.xlu0 %v6, 64
    %v8 = vpop.permute.xlu0 %7
    %vm9 = vcmask 589312
    %10 = vst.msk [vmem:[#allocation0] sm:$0x1] %vm9, %v8
    %s11 = scalar_lea.vmem %s0, 7
    %v12 = vld [vmem:[%s11] sm:$0x1]
    %13 = vrot.lane.b32.xlu0 %v12, 56
    %v14 = vpop.permute.xlu0 %13
    %vm15 = vcmask 523712
    %16 = vst.msk [vmem:[#allocation0] sm:$0x1] %vm15, %v14
    %s17 = scalar_lea.vmem %s0, 6
    %v18 = vld [vmem:[%s17] sm:$0x1]
    %19 = vrot.lane.b32.xlu0 %v18, 48
    %v20 = vpop.permute.xlu0 %19
    %vm21 = vcmask 458112
    %22 = vst.msk [vmem:[#allocation0] sm:$0x1] %vm21, %v20
    %s23 = scalar_lea.vmem %s0, 5
    %v24 = vld [vmem:[%s23] sm:$0x1]
    %25 = vrot.lane.b32.xlu0 %v24, 40
    %v26 = vpop.permute.xlu0 %25
    %vm27 = vcmask 392512
    %28 = vst.msk [vmem:[#allocation0] sm:$0x1] %vm27, %v26
    %s29 = scalar_lea.vmem %s0, 4
    %v30 = vld [vmem:[%s29] sm:$0x1]
    %31 = vrot.lane.b32.xlu0 %v30, 32
    %v32 = vpop.permute.xlu0 %31
    %vm33 = vcmask 326912
    %34 = vst.msk [vmem:[#allocation0] sm:$0x1] %vm33, %v32
    %s35 = scalar_lea.vmem %s0, 3
    %v36 = vld [vmem:[%s35] sm:$0x1]
    %37 = vrot.lane.b32.xlu0 %v36, 24
    %v38 = vpop.permute.xlu0 %37
    %vm39 = vcmask 261312
    %40 = vst.msk [vmem:[#allocation0] sm:$0x1] %vm39, %v38
    %s41 = scalar_lea.vmem %s0, 2
    %v42 = vld [vmem:[%s41] sm:$0x1]
    %43 = vrot.lane.b32.xlu0 %v42, 16
    %v44 = vpop.permute.xlu0 %43
    %vm45 = vcmask 195712
    %46 = vst.msk [vmem:[#allocation0] sm:$0x1] %vm45, %v44
    %s47 = scalar_lea.vmem %s0, 1
    %v48 = vld [vmem:[%s47] sm:$0x1]
    %49 = vrot.lane.b32.xlu0 %v48, 8
    %v50 = vpop.permute.xlu0 %49
    %vm51 = vcmask 130112
    %52 = vst.msk [vmem:[#allocation0] sm:$0x1] %vm51, %v50
    %s54 = ssub.s32 2, 1
    %v55 = vld [vmem:[#allocation0] sm:%s54]
    %s57 = ssub.s32 2, 1
    %58 = vst [vmem:[%s1] sm:%s57] %v55

// kernel: g_sndcgan_forward.19
$region0: #{g_sndcgan_forward.19}
  #allocation0 [shape = 'u32[]', space=smem, size = 0x4, offset = 0x4, fixed_abs, tag = 'smem constant byte address 0x4 - core index']
  #allocation1 [shape = 'u32[72,128]{1,0:T(1,128)}', space=vmem, size = 0x9000, scoped, tag = 'internal scratch']
  #allocation2 [shape = 'f32[512,128]{1,0:T(8,128)}', space=vmem, size = 0x40000, scoped, tag = 'scratch operand']
  %s0 = inlined_call_operand.vmem [shape: f32[1,128], index: 0, kind: input, shape index: {}]
  %s1 = inlined_call_operand.vmem [shape: f32[1,128], index: 1, kind: input, shape index: {}]
  %s2 = inlined_call_operand.vmem [shape: bf16[512,128], index: 2, kind: input, shape index: {}]
  %s3 = inlined_call_operand.vmem [shape: bf16[128,128], index: 3, kind: input, shape index: {}]
  %s4 = inlined_call_operand.vmem [shape: f32[1,128], index: 4, kind: input, shape index: {}]
  %s5 = inlined_call_operand.vmem [shape: f32[512,128], index: 5, kind: output, shape index: {}]
  %s6 = sld [smem:[#allocation0]]
  $region38: #{g_sndcgan_forward.19} parent=0
    _
  %s8 = ssub.s32 1, %s6
  %s9 = scalar_select 0, %s8, %s6
  // Predicated region
  $region2: #{g_sndcgan_forward.19} parent=0 // pred_check
    _
  $region3: #{g_sndcgan_forward.19} parent=0 // pred_check_branch
    %11 = sbr.rel (0) target = $region5
  $region4: #{g_sndcgan_forward.19} parent=0 // pred_region
    _
  $region5: #{g_sndcgan_forward.19} parent=0 // pred_fallthru
    _
  // Predicated region
  $region6: #{g_sndcgan_forward.19} parent=0 // pred_check
    _
  $region7: #{g_sndcgan_forward.19} parent=0 // pred_check_branch
    %13 = sbr.rel (0) target = $region9
  $region8: #{g_sndcgan_forward.19} parent=0 // pred_region
    _
  $region9: #{g_sndcgan_forward.19} parent=0 // pred_fallthru
    _
  // Predicated region
  $region10: #{g_sndcgan_forward.19} parent=0 // pred_check
    _
  $region11: #{g_sndcgan_forward.19} parent=0 // pred_check_branch
    %15 = sbr.rel (0) target = $region13
  $region12: #{g_sndcgan_forward.19} parent=0 // pred_region
    _
  $region13: #{g_sndcgan_forward.19} parent=0 // pred_fallthru
    _
  // Predicated region
  $region14: #{g_sndcgan_forward.19} parent=0 // pred_check
    _
  $region15: #{g_sndcgan_forward.19} parent=0 // pred_check_branch
    %17 = sbr.rel (0) target = $region17
  $region16: #{g_sndcgan_forward.19} parent=0 // pred_region
    _
  $region17: #{g_sndcgan_forward.19} parent=0 // pred_fallthru
    _
  // Predicated region
  $region18: #{g_sndcgan_forward.19} parent=0 // pred_check
    _
  $region19: #{g_sndcgan_forward.19} parent=0 // pred_check_branch
    %19 = sbr.rel (0) target = $region21
  $region20: #{g_sndcgan_forward.19} parent=0 // pred_region
    _
  $region21: #{g_sndcgan_forward.19} parent=0 // pred_fallthru
    _
  %p20 = scmp.eq.s32.totalorder 0, 0
  // Predicated region
  $region22: #{g_sndcgan_forward.19} parent=0 // pred_check
    %p21 = pneg %p20
  $region23: #{g_sndcgan_forward.19} parent=0 // pred_check_branch
    %23 = sbr.rel (%p21) target = $region25
  $region24: #{g_sndcgan_forward.19} parent=0 // pred_region
    %24 = vst [vmem:[#allocation2] sm:$0xff] 0.0
    %25 = vst [vmem:[#allocation2 + $0x8] sm:$0xff] 0.0
    %26 = vst [vmem:[#allocation2 + $0x10] sm:$0xff] 0.0
    %27 = vst [vmem:[#allocation2 + $0x18] sm:$0xff] 0.0
    %28 = vst [vmem:[#allocation2 + $0x20] sm:$0xff] 0.0
    %29 = vst [vmem:[#allocation2 + $0x28] sm:$0xff] 0.0
    %30 = vst [vmem:[#allocation2 + $0x30] sm:$0xff] 0.0
    %31 = vst [vmem:[#allocation2 + $0x38] sm:$0xff] 0.0
    %32 = vst [vmem:[#allocation2 + $0x40] sm:$0xff] 0.0
    %33 = vst [vmem:[#allocation2 + $0x48] sm:$0xff] 0.0
    %34 = vst [vmem:[#allocation2 + $0x50] sm:$0xff] 0.0
    %35 = vst [vmem:[#allocation2 + $0x58] sm:$0xff] 0.0
    %36 = vst [vmem:[#allocation2 + $0x60] sm:$0xff] 0.0
    %37 = vst [vmem:[#allocation2 + $0x68] sm:$0xff] 0.0
    %38 = vst [vmem:[#allocation2 + $0x70] sm:$0xff] 0.0
    %39 = vst [vmem:[#allocation2 + $0x78] sm:$0xff] 0.0
    %40 = vst [vmem:[#allocation2 + $0x80] sm:$0xff] 0.0
    %41 = vst [vmem:[#allocation2 + $0x88] sm:$0xff] 0.0
    %42 = vst [vmem:[#allocation2 + $0x90] sm:$0xff] 0.0
    %43 = vst [vmem:[#allocation2 + $0x98] sm:$0xff] 0.0
    %44 = vst [vmem:[#allocation2 + $0xa0] sm:$0xff] 0.0
    %45 = vst [vmem:[#allocation2 + $0xa8] sm:$0xff] 0.0
    %46 = vst [vmem:[#allocation2 + $0xb0] sm:$0xff] 0.0
    %47 = vst [vmem:[#allocation2 + $0xb8] sm:$0xff] 0.0
    %48 = vst [vmem:[#allocation2 + $0xc0] sm:$0xff] 0.0
    %49 = vst [vmem:[#allocation2 + $0xc8] sm:$0xff] 0.0
    %50 = vst [vmem:[#allocation2 + $0xd0] sm:$0xff] 0.0
    %51 = vst [vmem:[#allocation2 + $0xd8] sm:$0xff] 0.0
    %52 = vst [vmem:[#allocation2 + $0xe0] sm:$0xff] 0.0
    %53 = vst [vmem:[#allocation2 + $0xe8] sm:$0xff] 0.0
    %54 = vst [vmem:[#allocation2 + $0xf0] sm:$0xff] 0.0
    %55 = vst [vmem:[#allocation2 + $0xf8] sm:$0xff] 0.0
    %56 = vst [vmem:[#allocation2 + $0x100] sm:$0xff] 0.0
    %57 = vst [vmem:[#allocation2 + $0x108] sm:$0xff] 0.0
    %58 = vst [vmem:[#allocation2 + $0x110] sm:$0xff] 0.0
    %59 = vst [vmem:[#allocation2 + $0x118] sm:$0xff] 0.0
    %60 = vst [vmem:[#allocation2 + $0x120] sm:$0xff] 0.0
    %61 = vst [vmem:[#allocation2 + $0x128] sm:$0xff] 0.0
    %62 = vst [vmem:[#allocation2 + $0x130] sm:$0xff] 0.0
    %63 = vst [vmem:[#allocation2 + $0x138] sm:$0xff] 0.0
    %64 = vst [vmem:[#allocation2 + $0x140] sm:$0xff] 0.0
    %65 = vst [vmem:[#allocation2 + $0x148] sm:$0xff] 0.0
    %66 = vst [vmem:[#allocation2 + $0x150] sm:$0xff] 0.0
    %67 = vst [vmem:[#allocation2 + $0x158] sm:$0xff] 0.0
    %68 = vst [vmem:[#allocation2 + $0x160] sm:$0xff] 0.0
    %69 = vst [vmem:[#allocation2 + $0x168] sm:$0xff] 0.0
    %70 = vst [vmem:[#allocation2 + $0x170] sm:$0xff] 0.0
    %71 = vst [vmem:[#allocation2 + $0x178] sm:$0xff] 0.0
    %72 = vst [vmem:[#allocation2 + $0x180] sm:$0xff] 0.0
    %73 = vst [vmem:[#allocation2 + $0x188] sm:$0xff] 0.0
    %74 = vst [vmem:[#allocation2 + $0x190] sm:$0xff] 0.0
    %75 = vst [vmem:[#allocation2 + $0x198] sm:$0xff] 0.0
    %76 = vst [vmem:[#allocation2 + $0x1a0] sm:$0xff] 0.0
    %77 = vst [vmem:[#allocation2 + $0x1a8] sm:$0xff] 0.0
    %78 = vst [vmem:[#allocation2 + $0x1b0] sm:$0xff] 0.0
    %79 = vst [vmem:[#allocation2 + $0x1b8] sm:$0xff] 0.0
    %80 = vst [vmem:[#allocation2 + $0x1c0] sm:$0xff] 0.0
    %81 = vst [vmem:[#allocation2 + $0x1c8] sm:$0xff] 0.0
    %82 = vst [vmem:[#allocation2 + $0x1d0] sm:$0xff] 0.0
    %83 = vst [vmem:[#allocation2 + $0x1d8] sm:$0xff] 0.0
    %84 = vst [vmem:[#allocation2 + $0x1e0] sm:$0xff] 0.0
    %85 = vst [vmem:[#allocation2 + $0x1e8] sm:$0xff] 0.0
    %86 = vst [vmem:[#allocation2 + $0x1f0] sm:$0xff] 0.0
    %87 = vst [vmem:[#allocation2 + $0x1f8] sm:$0xff] 0.0
  $region25: #{g_sndcgan_forward.19} parent=0 // pred_fallthru
    _
  %v88 = vld [vmem:[%s2] sm:$0xf]
  %v89 = vld [vmem:[%s2 + $0x4] sm:$0xf]
  %v90 = vld [vmem:[%s2 + $0x8] sm:$0xf]
  %v91 = vld [vmem:[%s2 + $0xc] sm:$0xf]
  %v92 = vld [vmem:[%s2 + $0x10] sm:$0xf]
  %v93 = vld [vmem:[%s2 + $0x14] sm:$0xf]
  %v94 = vld [vmem:[%s2 + $0x18] sm:$0xf]
  %v95 = vld [vmem:[%s2 + $0x1c] sm:$0xf]
  %v96 = vld [vmem:[%s2 + $0x20] sm:$0xf]
  %v97 = vld [vmem:[%s2 + $0x24] sm:$0xf]
  %v98 = vld [vmem:[%s2 + $0x28] sm:$0xf]
  %v99 = vld [vmem:[%s2 + $0x2c] sm:$0xf]
  %v100 = vld [vmem:[%s2 + $0x30] sm:$0xf]
  %v101 = vld [vmem:[%s2 + $0x34] sm:$0xf]
  %v102 = vld [vmem:[%s2 + $0x38] sm:$0xf]
  %v103 = vld [vmem:[%s2 + $0x3c] sm:$0xf]
  %v104 = vld [vmem:[%s2 + $0x40] sm:$0xf]
  %v105 = vld [vmem:[%s2 + $0x44] sm:$0xf]
  %v106 = vld [vmem:[%s2 + $0x48] sm:$0xf]
  %v107 = vld [vmem:[%s2 + $0x4c] sm:$0xf]
  %v108 = vld [vmem:[%s2 + $0x50] sm:$0xf]
  %v109 = vld [vmem:[%s2 + $0x54] sm:$0xf]
  %v110 = vld [vmem:[%s2 + $0x58] sm:$0xf]
  %v111 = vld [vmem:[%s2 + $0x5c] sm:$0xf]
  %v112 = vld [vmem:[%s2 + $0x60] sm:$0xf]
  %v113 = vld [vmem:[%s2 + $0x64] sm:$0xf]
  %v114 = vld [vmem:[%s2 + $0x68] sm:$0xf]
  %v115 = vld [vmem:[%s2 + $0x6c] sm:$0xf]
  %v116 = vld [vmem:[%s2 + $0x70] sm:$0xf]
  %v117 = vld [vmem:[%s2 + $0x74] sm:$0xf]
  %v118 = vld [vmem:[%s2 + $0x78] sm:$0xf]
  %v119 = vld [vmem:[%s2 + $0x7c] sm:$0xf]
  %v120 = vld [vmem:[%s2 + $0x80] sm:$0xf]
  %v121 = vld [vmem:[%s2 + $0x84] sm:$0xf]
  %v122 = vld [vmem:[%s2 + $0x88] sm:$0xf]
  %v123 = vld [vmem:[%s2 + $0x8c] sm:$0xf]
  %v124 = vld [vmem:[%s2 + $0x90] sm:$0xf]
  %v125 = vld [vmem:[%s2 + $0x94] sm:$0xf]
  %v126 = vld [vmem:[%s2 + $0x98] sm:$0xf]
  %v127 = vld [vmem:[%s2 + $0x9c] sm:$0xf]
  %v128 = vld [vmem:[%s2 + $0xa0] sm:$0xf]
  %v129 = vld [vmem:[%s2 + $0xa4] sm:$0xf]
  %v130 = vld [vmem:[%s2 + $0xa8] sm:$0xf]
  %v131 = vld [vmem:[%s2 + $0xac] sm:$0xf]
  %v132 = vld [vmem:[%s2 + $0xb0] sm:$0xf]
  %v133 = vld [vmem:[%s2 + $0xb4] sm:$0xf]
  %v134 = vld [vmem:[%s2 + $0xb8] sm:$0xf]
  %v135 = vld [vmem:[%s2 + $0xbc] sm:$0xf]
  %v136 = vld [vmem:[%s2 + $0xc0] sm:$0xf]
  %v137 = vld [vmem:[%s2 + $0xc4] sm:$0xf]
  %v138 = vld [vmem:[%s2 + $0xc8] sm:$0xf]
  %v139 = vld [vmem:[%s2 + $0xcc] sm:$0xf]
  %v140 = vld [vmem:[%s2 + $0xd0] sm:$0xf]
  %v141 = vld [vmem:[%s2 + $0xd4] sm:$0xf]
  %v142 = vld [vmem:[%s2 + $0xd8] sm:$0xf]
  %v143 = vld [vmem:[%s2 + $0xdc] sm:$0xf]
  %v144 = vld [vmem:[%s2 + $0xe0] sm:$0xf]
  %v145 = vld [vmem:[%s2 + $0xe4] sm:$0xf]
  %v146 = vld [vmem:[%s2 + $0xe8] sm:$0xf]
  %v147 = vld [vmem:[%s2 + $0xec] sm:$0xf]
  %v148 = vld [vmem:[%s2 + $0xf0] sm:$0xf]
  %v149 = vld [vmem:[%s2 + $0xf4] sm:$0xf]
  %v150 = vld [vmem:[%s2 + $0xf8] sm:$0xf]
  %v151 = vld [vmem:[%s2 + $0xfc] sm:$0xf]
  %v152 = vunpack.c.l.bf16 %v88
  %v153 = vunpack.c.l.bf16 %v89
  %v154 = vunpack.c.l.bf16 %v90
  %v155 = vunpack.c.l.bf16 %v91
  %v156 = vunpack.c.l.bf16 %v92
  %v157 = vunpack.c.l.bf16 %v93
  %v158 = vunpack.c.l.bf16 %v94
  %v159 = vunpack.c.l.bf16 %v95
  %v160 = vunpack.c.l.bf16 %v96
  %v161 = vunpack.c.l.bf16 %v97
  %v162 = vunpack.c.l.bf16 %v98
  %v163 = vunpack.c.l.bf16 %v99
  %v164 = vunpack.c.l.bf16 %v100
  %v165 = vunpack.c.l.bf16 %v101
  %v166 = vunpack.c.l.bf16 %v102
  %v167 = vunpack.c.l.bf16 %v103
  %v168 = vunpack.c.l.bf16 %v104
  %v169 = vunpack.c.l.bf16 %v105
  %v170 = vunpack.c.l.bf16 %v106
  %v171 = vunpack.c.l.bf16 %v107
  %v172 = vunpack.c.l.bf16 %v108
  %v173 = vunpack.c.l.bf16 %v109
  %v174 = vunpack.c.l.bf16 %v110
  %v175 = vunpack.c.l.bf16 %v111
  %v176 = vunpack.c.l.bf16 %v112
  %v177 = vunpack.c.l.bf16 %v113
  %v178 = vunpack.c.l.bf16 %v114
  %v179 = vunpack.c.l.bf16 %v115
  %v180 = vunpack.c.l.bf16 %v116
  %v181 = vunpack.c.l.bf16 %v117
  %v182 = vunpack.c.l.bf16 %v118
  %v183 = vunpack.c.l.bf16 %v119
  %v184 = vunpack.c.l.bf16 %v120
  %v185 = vunpack.c.l.bf16 %v121
  %v186 = vunpack.c.l.bf16 %v122
  %v187 = vunpack.c.l.bf16 %v123
  %v188 = vunpack.c.l.bf16 %v124
  %v189 = vunpack.c.l.bf16 %v125
  %v190 = vunpack.c.l.bf16 %v126
  %v191 = vunpack.c.l.bf16 %v127
  %v192 = vunpack.c.l.bf16 %v128
  %v193 = vunpack.c.l.bf16 %v129
  %v194 = vunpack.c.l.bf16 %v130
  %v195 = vunpack.c.l.bf16 %v131
  %v196 = vunpack.c.l.bf16 %v132
  %v197 = vunpack.c.l.bf16 %v133
  %v198 = vunpack.c.l.bf16 %v134
  %v199 = vunpack.c.l.bf16 %v135
  %v200 = vunpack.c.l.bf16 %v136
  %v201 = vunpack.c.l.bf16 %v137
  %v202 = vunpack.c.l.bf16 %v138
  %v203 = vunpack.c.l.bf16 %v139
  %v204 = vunpack.c.l.bf16 %v140
  %v205 = vunpack.c.l.bf16 %v141
  %v206 = vunpack.c.l.bf16 %v142
  %v207 = vunpack.c.l.bf16 %v143
  %v208 = vunpack.c.l.bf16 %v144
  %v209 = vunpack.c.l.bf16 %v145
  %v210 = vunpack.c.l.bf16 %v146
  %v211 = vunpack.c.l.bf16 %v147
  %v212 = vunpack.c.l.bf16 %v148
  %v213 = vunpack.c.l.bf16 %v149
  %v214 = vunpack.c.l.bf16 %v150
  %v215 = vunpack.c.l.bf16 %v151
  %v216 = vld [vmem:[%s0] sm:$0x1]
  %v218 = vperm.slane %v216, 0
  %v220 = vmul.f32 %v152, %v218
  %v221 = vmul.f32 %v153, %v218
  %v222 = vmul.f32 %v154, %v218
  %v223 = vmul.f32 %v155, %v218
  %v224 = vmul.f32 %v156, %v218
  %v225 = vmul.f32 %v157, %v218
  %v226 = vmul.f32 %v158, %v218
  %v227 = vmul.f32 %v159, %v218
  %v228 = vmul.f32 %v160, %v218
  %v229 = vmul.f32 %v161, %v218
  %v230 = vmul.f32 %v162, %v218
  %v231 = vmul.f32 %v163, %v218
  %v232 = vmul.f32 %v164, %v218
  %v233 = vmul.f32 %v165, %v218
  %v234 = vmul.f32 %v166, %v218
  %v235 = vmul.f32 %v167, %v218
  %v236 = vmul.f32 %v168, %v218
  %v237 = vmul.f32 %v169, %v218
  %v238 = vmul.f32 %v170, %v218
  %v239 = vmul.f32 %v171, %v218
  %v240 = vmul.f32 %v172, %v218
  %v241 = vmul.f32 %v173, %v218
  %v242 = vmul.f32 %v174, %v218
  %v243 = vmul.f32 %v175, %v218
  %v244 = vmul.f32 %v176, %v218
  %v245 = vmul.f32 %v177, %v218
  %v246 = vmul.f32 %v178, %v218
  %v247 = vmul.f32 %v179, %v218
  %v248 = vmul.f32 %v180, %v218
  %v249 = vmul.f32 %v181, %v218
  %v250 = vmul.f32 %v182, %v218
  %v251 = vmul.f32 %v183, %v218
  %v252 = vmul.f32 %v184, %v218
  %v253 = vmul.f32 %v185, %v218
  %v254 = vmul.f32 %v186, %v218
  %v255 = vmul.f32 %v187, %v218
  %v256 = vmul.f32 %v188, %v218
  %v257 = vmul.f32 %v189, %v218
  %v258 = vmul.f32 %v190, %v218
  %v259 = vmul.f32 %v191, %v218
  %v260 = vmul.f32 %v192, %v218
  %v261 = vmul.f32 %v193, %v218
  %v262 = vmul.f32 %v194, %v218
  %v263 = vmul.f32 %v195, %v218
  %v264 = vmul.f32 %v196, %v218
  %v265 = vmul.f32 %v197, %v218
  %v266 = vmul.f32 %v198, %v218
  %v267 = vmul.f32 %v199, %v218
  %v268 = vmul.f32 %v200, %v218
  %v269 = vmul.f32 %v201, %v218
  %v270 = vmul.f32 %v202, %v218
  %v271 = vmul.f32 %v203, %v218
  %v272 = vmul.f32 %v204, %v218
  %v273 = vmul.f32 %v205, %v218
  %v274 = vmul.f32 %v206, %v218
  %v275 = vmul.f32 %v207, %v218
  %v276 = vmul.f32 %v208, %v218
  %v277 = vmul.f32 %v209, %v218
  %v278 = vmul.f32 %v210, %v218
  %v279 = vmul.f32 %v211, %v218
  %v280 = vmul.f32 %v212, %v218
  %v281 = vmul.f32 %v213, %v218
  %v282 = vmul.f32 %v214, %v218
  %v283 = vmul.f32 %v215, %v218
  %v284 = vld [vmem:[%s1] sm:$0x1]
  %v286 = vperm.slane %v284, 0
  %v288 = vadd.f32 %v220, %v286
  %v289 = vadd.f32 %v221, %v286
  %v290 = vadd.f32 %v222, %v286
  %v291 = vadd.f32 %v223, %v286
  %v292 = vadd.f32 %v224, %v286
  %v293 = vadd.f32 %v225, %v286
  %v294 = vadd.f32 %v226, %v286
  %v295 = vadd.f32 %v227, %v286
  %v296 = vadd.f32 %v228, %v286
  %v297 = vadd.f32 %v229, %v286
  %v298 = vadd.f32 %v230, %v286
  %v299 = vadd.f32 %v231, %v286
  %v300 = vadd.f32 %v232, %v286
  %v301 = vadd.f32 %v233, %v286
  %v302 = vadd.f32 %v234, %v286
  %v303 = vadd.f32 %v235, %v286
  %v304 = vadd.f32 %v236, %v286
  %v305 = vadd.f32 %v237, %v286
  %v306 = vadd.f32 %v238, %v286
  %v307 = vadd.f32 %v239, %v286
  %v308 = vadd.f32 %v240, %v286
  %v309 = vadd.f32 %v241, %v286
  %v310 = vadd.f32 %v242, %v286
  %v311 = vadd.f32 %v243, %v286
  %v312 = vadd.f32 %v244, %v286
  %v313 = vadd.f32 %v245, %v286
  %v314 = vadd.f32 %v246, %v286
  %v315 = vadd.f32 %v247, %v286
  %v316 = vadd.f32 %v248, %v286
  %v317 = vadd.f32 %v249, %v286
  %v318 = vadd.f32 %v250, %v286
  %v319 = vadd.f32 %v251, %v286
  %v320 = vadd.f32 %v252, %v286
  %v321 = vadd.f32 %v253, %v286
  %v322 = vadd.f32 %v254, %v286
  %v323 = vadd.f32 %v255, %v286
  %v324 = vadd.f32 %v256, %v286
  %v325 = vadd.f32 %v257, %v286
  %v326 = vadd.f32 %v258, %v286
  %v327 = vadd.f32 %v259, %v286
  %v328 = vadd.f32 %v260, %v286
  %v329 = vadd.f32 %v261, %v286
  %v330 = vadd.f32 %v262, %v286
  %v331 = vadd.f32 %v263, %v286
  %v332 = vadd.f32 %v264, %v286
  %v333 = vadd.f32 %v265, %v286
  %v334 = vadd.f32 %v266, %v286
  %v335 = vadd.f32 %v267, %v286
  %v336 = vadd.f32 %v268, %v286
  %v337 = vadd.f32 %v269, %v286
  %v338 = vadd.f32 %v270, %v286
  %v339 = vadd.f32 %v271, %v286
  %v340 = vadd.f32 %v272, %v286
  %v341 = vadd.f32 %v273, %v286
  %v342 = vadd.f32 %v274, %v286
  %v343 = vadd.f32 %v275, %v286
  %v344 = vadd.f32 %v276, %v286
  %v345 = vadd.f32 %v277, %v286
  %v346 = vadd.f32 %v278, %v286
  %v347 = vadd.f32 %v279, %v286
  %v348 = vadd.f32 %v280, %v286
  %v349 = vadd.f32 %v281, %v286
  %v350 = vadd.f32 %v282, %v286
  %v351 = vadd.f32 %v283, %v286
  %v352 = vmax.f32 %v288, 0.0
  %v353 = vmax.f32 %v289, 0.0
  %v354 = vmax.f32 %v290, 0.0
  %v355 = vmax.f32 %v291, 0.0
  %v356 = vmax.f32 %v292, 0.0
  %v357 = vmax.f32 %v293, 0.0
  %v358 = vmax.f32 %v294, 0.0
  %v359 = vmax.f32 %v295, 0.0
  %v360 = vmax.f32 %v296, 0.0
  %v361 = vmax.f32 %v297, 0.0
  %v362 = vmax.f32 %v298, 0.0
  %v363 = vmax.f32 %v299, 0.0
  %v364 = vmax.f32 %v300, 0.0
  %v365 = vmax.f32 %v301, 0.0
  %v366 = vmax.f32 %v302, 0.0
  %v367 = vmax.f32 %v303, 0.0
  %v368 = vmax.f32 %v304, 0.0
  %v369 = vmax.f32 %v305, 0.0
  %v370 = vmax.f32 %v306, 0.0
  %v371 = vmax.f32 %v307, 0.0
  %v372 = vmax.f32 %v308, 0.0
  %v373 = vmax.f32 %v309, 0.0
  %v374 = vmax.f32 %v310, 0.0
  %v375 = vmax.f32 %v311, 0.0
  %v376 = vmax.f32 %v312, 0.0
  %v377 = vmax.f32 %v313, 0.0
  %v378 = vmax.f32 %v314, 0.0
  %v379 = vmax.f32 %v315, 0.0
  %v380 = vmax.f32 %v316, 0.0
  %v381 = vmax.f32 %v317, 0.0
  %v382 = vmax.f32 %v318, 0.0
  %v383 = vmax.f32 %v319, 0.0
  %v384 = vmax.f32 %v320, 0.0
  %v385 = vmax.f32 %v321, 0.0
  %v386 = vmax.f32 %v322, 0.0
  %v387 = vmax.f32 %v323, 0.0
  %v388 = vmax.f32 %v324, 0.0
  %v389 = vmax.f32 %v325, 0.0
  %v390 = vmax.f32 %v326, 0.0
  %v391 = vmax.f32 %v327, 0.0
  %v392 = vmax.f32 %v328, 0.0
  %v393 = vmax.f32 %v329, 0.0
  %v394 = vmax.f32 %v330, 0.0
  %v395 = vmax.f32 %v331, 0.0
  %v396 = vmax.f32 %v332, 0.0
  %v397 = vmax.f32 %v333, 0.0
  %v398 = vmax.f32 %v334, 0.0
  %v399 = vmax.f32 %v335, 0.0
  %v400 = vmax.f32 %v336, 0.0
  %v401 = vmax.f32 %v337, 0.0
  %v402 = vmax.f32 %v338, 0.0
  %v403 = vmax.f32 %v339, 0.0
  %v404 = vmax.f32 %v340, 0.0
  %v405 = vmax.f32 %v341, 0.0
  %v406 = vmax.f32 %v342, 0.0
  %v407 = vmax.f32 %v343, 0.0
  %v408 = vmax.f32 %v344, 0.0
  %v409 = vmax.f32 %v345, 0.0
  %v410 = vmax.f32 %v346, 0.0
  %v411 = vmax.f32 %v347, 0.0
  %v412 = vmax.f32 %v348, 0.0
  %v413 = vmax.f32 %v349, 0.0
  %v414 = vmax.f32 %v350, 0.0
  %v415 = vmax.f32 %v351, 0.0
  %v416 = vpack.c.bf16 %v353, %v352
  %v417 = vpack.c.bf16 %v355, %v354
  %v418 = vpack.c.bf16 %v357, %v356
  %v419 = vpack.c.bf16 %v359, %v358
  %v420 = vpack.c.bf16 %v361, %v360
  %v421 = vpack.c.bf16 %v363, %v362
  %v422 = vpack.c.bf16 %v365, %v364
  %v423 = vpack.c.bf16 %v367, %v366
  %v424 = vpack.c.bf16 %v369, %v368
  %v425 = vpack.c.bf16 %v371, %v370
  %v426 = vpack.c.bf16 %v373, %v372
  %v427 = vpack.c.bf16 %v375, %v374
  %v428 = vpack.c.bf16 %v377, %v376
  %v429 = vpack.c.bf16 %v379, %v378
  %v430 = vpack.c.bf16 %v381, %v380
  %v431 = vpack.c.bf16 %v383, %v382
  %v432 = vpack.c.bf16 %v385, %v384
  %v433 = vpack.c.bf16 %v387, %v386
  %v434 = vpack.c.bf16 %v389, %v388
  %v435 = vpack.c.bf16 %v391, %v390
  %v436 = vpack.c.bf16 %v393, %v392
  %v437 = vpack.c.bf16 %v395, %v394
  %v438 = vpack.c.bf16 %v397, %v396
  %v439 = vpack.c.bf16 %v399, %v398
  %v440 = vpack.c.bf16 %v401, %v400
  %v441 = vpack.c.bf16 %v403, %v402
  %v442 = vpack.c.bf16 %v405, %v404
  %v443 = vpack.c.bf16 %v407, %v406
  %v444 = vpack.c.bf16 %v409, %v408
  %v445 = vpack.c.bf16 %v411, %v410
  %v446 = vpack.c.bf16 %v413, %v412
  %v447 = vpack.c.bf16 %v415, %v414
  %v448 = vld [vmem:[#allocation2] sm:$0xff]
  %v449 = vld [vmem:[#allocation2 + $0x8] sm:$0xff]
  %v450 = vld [vmem:[#allocation2 + $0x10] sm:$0xff]
  %v451 = vld [vmem:[#allocation2 + $0x18] sm:$0xff]
  %v452 = vld [vmem:[#allocation2 + $0x20] sm:$0xff]
  %v453 = vld [vmem:[#allocation2 + $0x28] sm:$0xff]
  %v454 = vld [vmem:[#allocation2 + $0x30] sm:$0xff]
  %v455 = vld [vmem:[#allocation2 + $0x38] sm:$0xff]
  %v456 = vld [vmem:[#allocation2 + $0x40] sm:$0xff]
  %v457 = vld [vmem:[#allocation2 + $0x48] sm:$0xff]
  %v458 = vld [vmem:[#allocation2 + $0x50] sm:$0xff]
  %v459 = vld [vmem:[#allocation2 + $0x58] sm:$0xff]
  %v460 = vld [vmem:[#allocation2 + $0x60] sm:$0xff]
  %v461 = vld [vmem:[#allocation2 + $0x68] sm:$0xff]
  %v462 = vld [vmem:[#allocation2 + $0x70] sm:$0xff]
  %v463 = vld [vmem:[#allocation2 + $0x78] sm:$0xff]
  %v464 = vld [vmem:[#allocation2 + $0x80] sm:$0xff]
  %v465 = vld [vmem:[#allocation2 + $0x88] sm:$0xff]
  %v466 = vld [vmem:[#allocation2 + $0x90] sm:$0xff]
  %v467 = vld [vmem:[#allocation2 + $0x98] sm:$0xff]
  %v468 = vld [vmem:[#allocation2 + $0xa0] sm:$0xff]
  %v469 = vld [vmem:[#allocation2 + $0xa8] sm:$0xff]
  %v470 = vld [vmem:[#allocation2 + $0xb0] sm:$0xff]
  %v471 = vld [vmem:[#allocation2 + $0xb8] sm:$0xff]
  %v472 = vld [vmem:[#allocation2 + $0xc0] sm:$0xff]
  %v473 = vld [vmem:[#allocation2 + $0xc8] sm:$0xff]
  %v474 = vld [vmem:[#allocation2 + $0xd0] sm:$0xff]
  %v475 = vld [vmem:[#allocation2 + $0xd8] sm:$0xff]
  %v476 = vld [vmem:[#allocation2 + $0xe0] sm:$0xff]
  %v477 = vld [vmem:[#allocation2 + $0xe8] sm:$0xff]
  %v478 = vld [vmem:[#allocation2 + $0xf0] sm:$0xff]
  %v479 = vld [vmem:[#allocation2 + $0xf8] sm:$0xff]
  %v480 = vld [vmem:[#allocation2 + $0x100] sm:$0xff]
  %v481 = vld [vmem:[#allocation2 + $0x108] sm:$0xff]
  %v482 = vld [vmem:[#allocation2 + $0x110] sm:$0xff]
  %v483 = vld [vmem:[#allocation2 + $0x118] sm:$0xff]
  %v484 = vld [vmem:[#allocation2 + $0x120] sm:$0xff]
  %v485 = vld [vmem:[#allocation2 + $0x128] sm:$0xff]
  %v486 = vld [vmem:[#allocation2 + $0x130] sm:$0xff]
  %v487 = vld [vmem:[#allocation2 + $0x138] sm:$0xff]
  %v488 = vld [vmem:[#allocation2 + $0x140] sm:$0xff]
  %v489 = vld [vmem:[#allocation2 + $0x148] sm:$0xff]
  %v490 = vld [vmem:[#allocation2 + $0x150] sm:$0xff]
  %v491 = vld [vmem:[#allocation2 + $0x158] sm:$0xff]
  %v492 = vld [vmem:[#allocation2 + $0x160] sm:$0xff]
  %v493 = vld [vmem:[#allocation2 + $0x168] sm:$0xff]
  %v494 = vld [vmem:[#allocation2 + $0x170] sm:$0xff]
  %v495 = vld [vmem:[#allocation2 + $0x178] sm:$0xff]
  %v496 = vld [vmem:[#allocation2 + $0x180] sm:$0xff]
  %v497 = vld [vmem:[#allocation2 + $0x188] sm:$0xff]
  %v498 = vld [vmem:[#allocation2 + $0x190] sm:$0xff]
  %v499 = vld [vmem:[#allocation2 + $0x198] sm:$0xff]
  %v500 = vld [vmem:[#allocation2 + $0x1a0] sm:$0xff]
  %v501 = vld [vmem:[#allocation2 + $0x1a8] sm:$0xff]
  %v502 = vld [vmem:[#allocation2 + $0x1b0] sm:$0xff]
  %v503 = vld [vmem:[#allocation2 + $0x1b8] sm:$0xff]
  %v504 = vld [vmem:[#allocation2 + $0x1c0] sm:$0xff]
  %v505 = vld [vmem:[#allocation2 + $0x1c8] sm:$0xff]
  %v506 = vld [vmem:[#allocation2 + $0x1d0] sm:$0xff]
  %v507 = vld [vmem:[#allocation2 + $0x1d8] sm:$0xff]
  %v508 = vld [vmem:[#allocation2 + $0x1e0] sm:$0xff]
  %v509 = vld [vmem:[#allocation2 + $0x1e8] sm:$0xff]
  %v510 = vld [vmem:[#allocation2 + $0x1f0] sm:$0xff]
  %v511 = vld [vmem:[#allocation2 + $0x1f8] sm:$0xff]
  %v512 = vld [vmem:[%s3] sm:$0xf]
  %v513 = vld [vmem:[%s3 + $0x4] sm:$0xf]
  %v514 = vld [vmem:[%s3 + $0x8] sm:$0xf]
  %v515 = vld [vmem:[%s3 + $0xc] sm:$0xf]
  %v516 = vld [vmem:[%s3 + $0x10] sm:$0xf]
  %v517 = vld [vmem:[%s3 + $0x14] sm:$0xf]
  %v518 = vld [vmem:[%s3 + $0x18] sm:$0xf]
  %v519 = vld [vmem:[%s3 + $0x1c] sm:$0xf]
  %v520 = vld [vmem:[%s3 + $0x20] sm:$0xf]
  %v521 = vld [vmem:[%s3 + $0x24] sm:$0xf]
  %v522 = vld [vmem:[%s3 + $0x28] sm:$0xf]
  %v523 = vld [vmem:[%s3 + $0x2c] sm:$0xf]
  %v524 = vld [vmem:[%s3 + $0x30] sm:$0xf]
  %v525 = vld [vmem:[%s3 + $0x34] sm:$0xf]
  %v526 = vld [vmem:[%s3 + $0x38] sm:$0xf]
  %v527 = vld [vmem:[%s3 + $0x3c] sm:$0xf]
  %v544 = vunpack.c.l.b16 %v512
  %v545 = vunpack.c.l.b16 %v513
  %v546 = vunpack.c.l.b16 %v514
  %v547 = vunpack.c.l.b16 %v515
  %v548 = vunpack.c.l.b16 %v516
  %v549 = vunpack.c.l.b16 %v517
  %v550 = vunpack.c.l.b16 %v518
  %v551 = vunpack.c.l.b16 %v519
  %v552 = vunpack.c.l.b16 %v520
  %v553 = vunpack.c.l.b16 %v521
  %v554 = vunpack.c.l.b16 %v522
  %v555 = vunpack.c.l.b16 %v523
  %v556 = vunpack.c.l.b16 %v524
  %v557 = vunpack.c.l.b16 %v525
  %v558 = vunpack.c.l.b16 %v526
  %v559 = vunpack.c.l.b16 %v527
  %v560 = vpack.c.b16 %v545, %v544
  %v561 = vpack.c.b16 %v547, %v546
  %v562 = vpack.c.b16 %v549, %v548
  %v563 = vpack.c.b16 %v551, %v550
  %v564 = vpack.c.b16 %v553, %v552
  %v565 = vpack.c.b16 %v555, %v554
  %v566 = vpack.c.b16 %v557, %v556
  %v567 = vpack.c.b16 %v559, %v558
  %576 = vmatpush.bf16.msra.mxu0 %v567
  %577 = vmatpush.bf16.msra.mxu0 %v566
  %578 = vmatpush.bf16.msra.mxu0 %v565
  %579 = vmatpush.bf16.msra.mxu0 %v564
  %580 = vmatpush.bf16.msra.mxu0 %v563
  %581 = vmatpush.bf16.msra.mxu0 %v562
  %582 = vmatpush.bf16.msra.mxu0 %v561
  %583 = vmatpush.bf16.msra.mxu0 %v560
  %584 = vmatmul.bf16.gmra.mxu0 %v416
  %v585 = vpop.f32.mrf.mxu0
  %v586 = vadd.f32 0.0, %v585
  %v587 = vpop.f32.mrf.mxu0
  %v588 = vadd.f32 0.0, %v587
  %589 = vmatmul.bf16.gmra.mxu0 %v417
  %v590 = vpop.f32.mrf.mxu0
  %v591 = vadd.f32 0.0, %v590
  %v592 = vpop.f32.mrf.mxu0
  %v593 = vadd.f32 0.0, %v592
  %594 = vmatmul.bf16.gmra.mxu0 %v418
  %v595 = vpop.f32.mrf.mxu0
  %v596 = vadd.f32 0.0, %v595
  %v597 = vpop.f32.mrf.mxu0
  %v598 = vadd.f32 0.0, %v597
  %599 = vmatmul.bf16.gmra.mxu0 %v419
  %v600 = vpop.f32.mrf.mxu0
  %v601 = vadd.f32 0.0, %v600
  %v602 = vpop.f32.mrf.mxu0
  %v603 = vadd.f32 0.0, %v602
  %604 = vmatmul.bf16.gmra.mxu0 %v420
  %v605 = vpop.f32.mrf.mxu0
  %v606 = vadd.f32 0.0, %v605
  %v607 = vpop.f32.mrf.mxu0
  %v608 = vadd.f32 0.0, %v607
  %609 = vmatmul.bf16.gmra.mxu0 %v421
  %v610 = vpop.f32.mrf.mxu0
  %v611 = vadd.f32 0.0, %v610
  %v612 = vpop.f32.mrf.mxu0
  %v613 = vadd.f32 0.0, %v612
  %614 = vmatmul.bf16.gmra.mxu0 %v422
  %v615 = vpop.f32.mrf.mxu0
  %v616 = vadd.f32 0.0, %v615
  %v617 = vpop.f32.mrf.mxu0
  %v618 = vadd.f32 0.0, %v617
  %619 = vmatmul.bf16.gmra.mxu0 %v423
  %v620 = vpop.f32.mrf.mxu0
  %v621 = vadd.f32 0.0, %v620
  %v622 = vpop.f32.mrf.mxu0
  %v623 = vadd.f32 0.0, %v622
  %624 = vmatmul.bf16.gmra.mxu0 %v424
  %v625 = vpop.f32.mrf.mxu0
  %v626 = vadd.f32 0.0, %v625
  %v627 = vpop.f32.mrf.mxu0
  %v628 = vadd.f32 0.0, %v627
  %629 = vmatmul.bf16.gmra.mxu0 %v425
  %v630 = vpop.f32.mrf.mxu0
  %v631 = vadd.f32 0.0, %v630
  %v632 = vpop.f32.mrf.mxu0
  %v633 = vadd.f32 0.0, %v632
  %634 = vmatmul.bf16.gmra.mxu0 %v426
  %v635 = vpop.f32.mrf.mxu0
  %v636 = vadd.f32 0.0, %v635
  %v637 = vpop.f32.mrf.mxu0
  %v638 = vadd.f32 0.0, %v637
  %639 = vmatmul.bf16.gmra.mxu0 %v427
  %v640 = vpop.f32.mrf.mxu0
  %v641 = vadd.f32 0.0, %v640
  %v642 = vpop.f32.mrf.mxu0
  %v643 = vadd.f32 0.0, %v642
  %644 = vmatmul.bf16.gmra.mxu0 %v428
  %v645 = vpop.f32.mrf.mxu0
  %v646 = vadd.f32 0.0, %v645
  %v647 = vpop.f32.mrf.mxu0
  %v648 = vadd.f32 0.0, %v647
  %649 = vmatmul.bf16.gmra.mxu0 %v429
  %v650 = vpop.f32.mrf.mxu0
  %v651 = vadd.f32 0.0, %v650
  %v652 = vpop.f32.mrf.mxu0
  %v653 = vadd.f32 0.0, %v652
  %654 = vmatmul.bf16.gmra.mxu0 %v430
  %v655 = vpop.f32.mrf.mxu0
  %v656 = vadd.f32 0.0, %v655
  %v657 = vpop.f32.mrf.mxu0
  %v658 = vadd.f32 0.0, %v657
  %659 = vmatmul.bf16.gmra.mxu0 %v431
  %v660 = vpop.f32.mrf.mxu0
  %v661 = vadd.f32 0.0, %v660
  %v662 = vpop.f32.mrf.mxu0
  %v663 = vadd.f32 0.0, %v662
  %664 = vmatmul.bf16.gmra.mxu0 %v432
  %v665 = vpop.f32.mrf.mxu0
  %v666 = vadd.f32 0.0, %v665
  %v667 = vpop.f32.mrf.mxu0
  %v668 = vadd.f32 0.0, %v667
  %669 = vmatmul.bf16.gmra.mxu0 %v433
  %v670 = vpop.f32.mrf.mxu0
  %v671 = vadd.f32 0.0, %v670
  %v672 = vpop.f32.mrf.mxu0
  %v673 = vadd.f32 0.0, %v672
  %674 = vmatmul.bf16.gmra.mxu0 %v434
  %v675 = vpop.f32.mrf.mxu0
  %v676 = vadd.f32 0.0, %v675
  %v677 = vpop.f32.mrf.mxu0
  %v678 = vadd.f32 0.0, %v677
  %679 = vmatmul.bf16.gmra.mxu0 %v435
  %v680 = vpop.f32.mrf.mxu0
  %v681 = vadd.f32 0.0, %v680
  %v682 = vpop.f32.mrf.mxu0
  %v683 = vadd.f32 0.0, %v682
  %684 = vmatmul.bf16.gmra.mxu0 %v436
  %v685 = vpop.f32.mrf.mxu0
  %v686 = vadd.f32 0.0, %v685
  %v687 = vpop.f32.mrf.mxu0
  %v688 = vadd.f32 0.0, %v687
  %689 = vmatmul.bf16.gmra.mxu0 %v437
  %v690 = vpop.f32.mrf.mxu0
  %v691 = vadd.f32 0.0, %v690
  %v692 = vpop.f32.mrf.mxu0
  %v693 = vadd.f32 0.0, %v692
  %694 = vmatmul.bf16.gmra.mxu0 %v438
  %v695 = vpop.f32.mrf.mxu0
  %v696 = vadd.f32 0.0, %v695
  %v697 = vpop.f32.mrf.mxu0
  %v698 = vadd.f32 0.0, %v697
  %699 = vmatmul.bf16.gmra.mxu0 %v439
  %v700 = vpop.f32.mrf.mxu0
  %v701 = vadd.f32 0.0, %v700
  %v702 = vpop.f32.mrf.mxu0
  %v703 = vadd.f32 0.0, %v702
  %704 = vmatmul.bf16.gmra.mxu0 %v440
  %v705 = vpop.f32.mrf.mxu0
  %v706 = vadd.f32 0.0, %v705
  %v707 = vpop.f32.mrf.mxu0
  %v708 = vadd.f32 0.0, %v707
  %709 = vmatmul.bf16.gmra.mxu0 %v441
  %v710 = vpop.f32.mrf.mxu0
  %v711 = vadd.f32 0.0, %v710
  %v712 = vpop.f32.mrf.mxu0
  %v713 = vadd.f32 0.0, %v712
  %714 = vmatmul.bf16.gmra.mxu0 %v442
  %v715 = vpop.f32.mrf.mxu0
  %v716 = vadd.f32 0.0, %v715
  %v717 = vpop.f32.mrf.mxu0
  %v718 = vadd.f32 0.0, %v717
  %719 = vmatmul.bf16.gmra.mxu0 %v443
  %v720 = vpop.f32.mrf.mxu0
  %v721 = vadd.f32 0.0, %v720
  %v722 = vpop.f32.mrf.mxu0
  %v723 = vadd.f32 0.0, %v722
  %724 = vmatmul.bf16.gmra.mxu0 %v444
  %v725 = vpop.f32.mrf.mxu0
  %v726 = vadd.f32 0.0, %v725
  %v727 = vpop.f32.mrf.mxu0
  %v728 = vadd.f32 0.0, %v727
  %729 = vmatmul.bf16.gmra.mxu0 %v445
  %v730 = vpop.f32.mrf.mxu0
  %v731 = vadd.f32 0.0, %v730
  %v732 = vpop.f32.mrf.mxu0
  %v733 = vadd.f32 0.0, %v732
  %734 = vmatmul.bf16.gmra.mxu0 %v446
  %v735 = vpop.f32.mrf.mxu0
  %v736 = vadd.f32 0.0, %v735
  %v737 = vpop.f32.mrf.mxu0
  %v738 = vadd.f32 0.0, %v737
  %739 = vmatmul.bf16.gmra.mxu0 %v447
  %v740 = vpop.f32.mrf.mxu0
  %v741 = vadd.f32 0.0, %v740
  %v742 = vpop.f32.mrf.mxu0
  %v743 = vadd.f32 0.0, %v742
  %744 = vdwg.mxu0
  %v745 = vadd.f32 %v448, %v586
  %v746 = vadd.f32 %v449, %v588
  %v747 = vadd.f32 %v450, %v591
  %v748 = vadd.f32 %v451, %v593
  %v749 = vadd.f32 %v452, %v596
  %v750 = vadd.f32 %v453, %v598
  %v751 = vadd.f32 %v454, %v601
  %v752 = vadd.f32 %v455, %v603
  %v753 = vadd.f32 %v456, %v606
  %v754 = vadd.f32 %v457, %v608
  %v755 = vadd.f32 %v458, %v611
  %v756 = vadd.f32 %v459, %v613
  %v757 = vadd.f32 %v460, %v616
  %v758 = vadd.f32 %v461, %v618
  %v759 = vadd.f32 %v462, %v621
  %v760 = vadd.f32 %v463, %v623
  %v761 = vadd.f32 %v464, %v626
  %v762 = vadd.f32 %v465, %v628
  %v763 = vadd.f32 %v466, %v631
  %v764 = vadd.f32 %v467, %v633
  %v765 = vadd.f32 %v468, %v636
  %v766 = vadd.f32 %v469, %v638
  %v767 = vadd.f32 %v470, %v641
  %v768 = vadd.f32 %v471, %v643
  %v769 = vadd.f32 %v472, %v646
  %v770 = vadd.f32 %v473, %v648
  %v771 = vadd.f32 %v474, %v651
  %v772 = vadd.f32 %v475, %v653
  %v773 = vadd.f32 %v476, %v656
  %v774 = vadd.f32 %v477, %v658
  %v775 = vadd.f32 %v478, %v661
  %v776 = vadd.f32 %v479, %v663
  %v777 = vadd.f32 %v480, %v666
  %v778 = vadd.f32 %v481, %v668
  %v779 = vadd.f32 %v482, %v671
  %v780 = vadd.f32 %v483, %v673
  %v781 = vadd.f32 %v484, %v676
  %v782 = vadd.f32 %v485, %v678
  %v783 = vadd.f32 %v486, %v681
  %v784 = vadd.f32 %v487, %v683
  %v785 = vadd.f32 %v488, %v686
  %v786 = vadd.f32 %v489, %v688
  %v787 = vadd.f32 %v490, %v691
  %v788 = vadd.f32 %v491, %v693
  %v789 = vadd.f32 %v492, %v696
  %v790 = vadd.f32 %v493, %v698
  %v791 = vadd.f32 %v494, %v701
  %v792 = vadd.f32 %v495, %v703
  %v793 = vadd.f32 %v496, %v706
  %v794 = vadd.f32 %v497, %v708
  %v795 = vadd.f32 %v498, %v711
  %v796 = vadd.f32 %v499, %v713
  %v797 = vadd.f32 %v500, %v716
  %v798 = vadd.f32 %v501, %v718
  %v799 = vadd.f32 %v502, %v721
  %v800 = vadd.f32 %v503, %v723
  %v801 = vadd.f32 %v504, %v726
  %v802 = vadd.f32 %v505, %v728
  %v803 = vadd.f32 %v506, %v731
  %v804 = vadd.f32 %v507, %v733
  %v805 = vadd.f32 %v508, %v736
  %v806 = vadd.f32 %v509, %v738
  %v807 = vadd.f32 %v510, %v741
  %v808 = vadd.f32 %v511, %v743
  %809 = vst [vmem:[#allocation2] sm:$0xff] %v745
  %810 = vst [vmem:[#allocation2 + $0x8] sm:$0xff] %v746
  %811 = vst [vmem:[#allocation2 + $0x10] sm:$0xff] %v747
  %812 = vst [vmem:[#allocation2 + $0x18] sm:$0xff] %v748
  %813 = vst [vmem:[#allocation2 + $0x20] sm:$0xff] %v749
  %814 = vst [vmem:[#allocation2 + $0x28] sm:$0xff] %v750
  %815 = vst [vmem:[#allocation2 + $0x30] sm:$0xff] %v751
  %816 = vst [vmem:[#allocation2 + $0x38] sm:$0xff] %v752
  %817 = vst [vmem:[#allocation2 + $0x40] sm:$0xff] %v753
  %818 = vst [vmem:[#allocation2 + $0x48] sm:$0xff] %v754
  %819 = vst [vmem:[#allocation2 + $0x50] sm:$0xff] %v755
  %820 = vst [vmem:[#allocation2 + $0x58] sm:$0xff] %v756
  %821 = vst [vmem:[#allocation2 + $0x60] sm:$0xff] %v757
  %822 = vst [vmem:[#allocation2 + $0x68] sm:$0xff] %v758
  %823 = vst [vmem:[#allocation2 + $0x70] sm:$0xff] %v759
  %824 = vst [vmem:[#allocation2 + $0x78] sm:$0xff] %v760
  %825 = vst [vmem:[#allocation2 + $0x80] sm:$0xff] %v761
  %826 = vst [vmem:[#allocation2 + $0x88] sm:$0xff] %v762
  %827 = vst [vmem:[#allocation2 + $0x90] sm:$0xff] %v763
  %828 = vst [vmem:[#allocation2 + $0x98] sm:$0xff] %v764
  %829 = vst [vmem:[#allocation2 + $0xa0] sm:$0xff] %v765
  %830 = vst [vmem:[#allocation2 + $0xa8] sm:$0xff] %v766
  %831 = vst [vmem:[#allocation2 + $0xb0] sm:$0xff] %v767
  %832 = vst [vmem:[#allocation2 + $0xb8] sm:$0xff] %v768
  %833 = vst [vmem:[#allocation2 + $0xc0] sm:$0xff] %v769
  %834 = vst [vmem:[#allocation2 + $0xc8] sm:$0xff] %v770
  %835 = vst [vmem:[#allocation2 + $0xd0] sm:$0xff] %v771
  %836 = vst [vmem:[#allocation2 + $0xd8] sm:$0xff] %v772
  %837 = vst [vmem:[#allocation2 + $0xe0] sm:$0xff] %v773
  %838 = vst [vmem:[#allocation2 + $0xe8] sm:$0xff] %v774
  %839 = vst [vmem:[#allocation2 + $0xf0] sm:$0xff] %v775
  %840 = vst [vmem:[#allocation2 + $0xf8] sm:$0xff] %v776
  %841 = vst [vmem:[#allocation2 + $0x100] sm:$0xff] %v777
  %842 = vst [vmem:[#allocation2 + $0x108] sm:$0xff] %v778
  %843 = vst [vmem:[#allocation2 + $0x110] sm:$0xff] %v779
  %844 = vst [vmem:[#allocation2 + $0x118] sm:$0xff] %v780
  %845 = vst [vmem:[#allocation2 + $0x120] sm:$0xff] %v781
  %846 = vst [vmem:[#allocation2 + $0x128] sm:$0xff] %v782
  %847 = vst [vmem:[#allocation2 + $0x130] sm:$0xff] %v783
  %848 = vst [vmem:[#allocation2 + $0x138] sm:$0xff] %v784
  %849 = vst [vmem:[#allocation2 + $0x140] sm:$0xff] %v785
  %850 = vst [vmem:[#allocation2 + $0x148] sm:$0xff] %v786
  %851 = vst [vmem:[#allocation2 + $0x150] sm:$0xff] %v787
  %852 = vst [vmem:[#allocation2 + $0x158] sm:$0xff] %v788
  %853 = vst [vmem:[#allocation2 + $0x160] sm:$0xff] %v789
  %854 = vst [vmem:[#allocation2 + $0x168] sm:$0xff] %v790
  %855 = vst [vmem:[#allocation2 + $0x170] sm:$0xff] %v791
  %856 = vst [vmem:[#allocation2 + $0x178] sm:$0xff] %v792
  %857 = vst [vmem:[#allocation2 + $0x180] sm:$0xff] %v793
  %858 = vst [vmem:[#allocation2 + $0x188] sm:$0xff] %v794
  %859 = vst [vmem:[#allocation2 + $0x190] sm:$0xff] %v795
  %860 = vst [vmem:[#allocation2 + $0x198] sm:$0xff] %v796
  %861 = vst [vmem:[#allocation2 + $0x1a0] sm:$0xff] %v797
  %862 = vst [vmem:[#allocation2 + $0x1a8] sm:$0xff] %v798
  %863 = vst [vmem:[#allocation2 + $0x1b0] sm:$0xff] %v799
  %864 = vst [vmem:[#allocation2 + $0x1b8] sm:$0xff] %v800
  %865 = vst [vmem:[#allocation2 + $0x1c0] sm:$0xff] %v801
  %866 = vst [vmem:[#allocation2 + $0x1c8] sm:$0xff] %v802
  %867 = vst [vmem:[#allocation2 + $0x1d0] sm:$0xff] %v803
  %868 = vst [vmem:[#allocation2 + $0x1d8] sm:$0xff] %v804
  %869 = vst [vmem:[#allocation2 + $0x1e0] sm:$0xff] %v805
  %870 = vst [vmem:[#allocation2 + $0x1e8] sm:$0xff] %v806
  %871 = vst [vmem:[#allocation2 + $0x1f0] sm:$0xff] %v807
  %872 = vst [vmem:[#allocation2 + $0x1f8] sm:$0xff] %v808
  // Predicated region
  $region26: #{g_sndcgan_forward.19} parent=0 // pred_check
    %p873 = pneg %p20
  $region27: #{g_sndcgan_forward.19} parent=0 // pred_check_branch
    %875 = sbr.rel (%p873) target = $region29
  $region28: #{g_sndcgan_forward.19} parent=0 // pred_region
    %v876 = vld [vmem:[#allocation2] sm:$0xff]
    %v877 = vld [vmem:[#allocation2 + $0x8] sm:$0xff]
    %v878 = vld [vmem:[#allocation2 + $0x10] sm:$0xff]
    %v879 = vld [vmem:[#allocation2 + $0x18] sm:$0xff]
    %v880 = vld [vmem:[#allocation2 + $0x20] sm:$0xff]
    %v881 = vld [vmem:[#allocation2 + $0x28] sm:$0xff]
    %v882 = vld [vmem:[#allocation2 + $0x30] sm:$0xff]
    %v883 = vld [vmem:[#allocation2 + $0x38] sm:$0xff]
    %v884 = vld [vmem:[#allocation2 + $0x40] sm:$0xff]
    %v885 = vld [vmem:[#allocation2 + $0x48] sm:$0xff]
    %v886 = vld [vmem:[#allocation2 + $0x50] sm:$0xff]
    %v887 = vld [vmem:[#allocation2 + $0x58] sm:$0xff]
    %v888 = vld [vmem:[#allocation2 + $0x60] sm:$0xff]
    %v889 = vld [vmem:[#allocation2 + $0x68] sm:$0xff]
    %v890 = vld [vmem:[#allocation2 + $0x70] sm:$0xff]
    %v891 = vld [vmem:[#allocation2 + $0x78] sm:$0xff]
    %v892 = vld [vmem:[#allocation2 + $0x80] sm:$0xff]
    %v893 = vld [vmem:[#allocation2 + $0x88] sm:$0xff]
    %v894 = vld [vmem:[#allocation2 + $0x90] sm:$0xff]
    %v895 = vld [vmem:[#allocation2 + $0x98] sm:$0xff]
    %v896 = vld [vmem:[#allocation2 + $0xa0] sm:$0xff]
    %v897 = vld [vmem:[#allocation2 + $0xa8] sm:$0xff]
    %v898 = vld [vmem:[#allocation2 + $0xb0] sm:$0xff]
    %v899 = vld [vmem:[#allocation2 + $0xb8] sm:$0xff]
    %v900 = vld [vmem:[#allocation2 + $0xc0] sm:$0xff]
    %v901 = vld [vmem:[#allocation2 + $0xc8] sm:$0xff]
    %v902 = vld [vmem:[#allocation2 + $0xd0] sm:$0xff]
    %v903 = vld [vmem:[#allocation2 + $0xd8] sm:$0xff]
    %v904 = vld [vmem:[#allocation2 + $0xe0] sm:$0xff]
    %v905 = vld [vmem:[#allocation2 + $0xe8] sm:$0xff]
    %v906 = vld [vmem:[#allocation2 + $0xf0] sm:$0xff]
    %v907 = vld [vmem:[#allocation2 + $0xf8] sm:$0xff]
    %v908 = vld [vmem:[#allocation2 + $0x100] sm:$0xff]
    %v909 = vld [vmem:[#allocation2 + $0x108] sm:$0xff]
    %v910 = vld [vmem:[#allocation2 + $0x110] sm:$0xff]
    %v911 = vld [vmem:[#allocation2 + $0x118] sm:$0xff]
    %v912 = vld [vmem:[#allocation2 + $0x120] sm:$0xff]
    %v913 = vld [vmem:[#allocation2 + $0x128] sm:$0xff]
    %v914 = vld [vmem:[#allocation2 + $0x130] sm:$0xff]
    %v915 = vld [vmem:[#allocation2 + $0x138] sm:$0xff]
    %v916 = vld [vmem:[#allocation2 + $0x140] sm:$0xff]
    %v917 = vld [vmem:[#allocation2 + $0x148] sm:$0xff]
    %v918 = vld [vmem:[#allocation2 + $0x150] sm:$0xff]
    %v919 = vld [vmem:[#allocation2 + $0x158] sm:$0xff]
    %v920 = vld [vmem:[#allocation2 + $0x160] sm:$0xff]
    %v921 = vld [vmem:[#allocation2 + $0x168] sm:$0xff]
    %v922 = vld [vmem:[#allocation2 + $0x170] sm:$0xff]
    %v923 = vld [vmem:[#allocation2 + $0x178] sm:$0xff]
    %v924 = vld [vmem:[#allocation2 + $0x180] sm:$0xff]
    %v925 = vld [vmem:[#allocation2 + $0x188] sm:$0xff]
    %v926 = vld [vmem:[#allocation2 + $0x190] sm:$0xff]
    %v927 = vld [vmem:[#allocation2 + $0x198] sm:$0xff]
    %v928 = vld [vmem:[#allocation2 + $0x1a0] sm:$0xff]
    %v929 = vld [vmem:[#allocation2 + $0x1a8] sm:$0xff]
    %v930 = vld [vmem:[#allocation2 + $0x1b0] sm:$0xff]
    %v931 = vld [vmem:[#allocation2 + $0x1b8] sm:$0xff]
    %v932 = vld [vmem:[#allocation2 + $0x1c0] sm:$0xff]
    %v933 = vld [vmem:[#allocation2 + $0x1c8] sm:$0xff]
    %v934 = vld [vmem:[#allocation2 + $0x1d0] sm:$0xff]
    %v935 = vld [vmem:[#allocation2 + $0x1d8] sm:$0xff]
    %v936 = vld [vmem:[#allocation2 + $0x1e0] sm:$0xff]
    %v937 = vld [vmem:[#allocation2 + $0x1e8] sm:$0xff]
    %v938 = vld [vmem:[#allocation2 + $0x1f0] sm:$0xff]
    %v939 = vld [vmem:[#allocation2 + $0x1f8] sm:$0xff]
    %v940 = vld [vmem:[%s4] sm:$0x1]
    %v942 = vperm.slane %v940, 0
    %v944 = vadd.f32 %v876, %v942
    %v945 = vadd.f32 %v877, %v942
    %v946 = vadd.f32 %v878, %v942
    %v947 = vadd.f32 %v879, %v942
    %v948 = vadd.f32 %v880, %v942
    %v949 = vadd.f32 %v881, %v942
    %v950 = vadd.f32 %v882, %v942
    %v951 = vadd.f32 %v883, %v942
    %v952 = vadd.f32 %v884, %v942
    %v953 = vadd.f32 %v885, %v942
    %v954 = vadd.f32 %v886, %v942
    %v955 = vadd.f32 %v887, %v942
    %v956 = vadd.f32 %v888, %v942
    %v957 = vadd.f32 %v889, %v942
    %v958 = vadd.f32 %v890, %v942
    %v959 = vadd.f32 %v891, %v942
    %v960 = vadd.f32 %v892, %v942
    %v961 = vadd.f32 %v893, %v942
    %v962 = vadd.f32 %v894, %v942
    %v963 = vadd.f32 %v895, %v942
    %v964 = vadd.f32 %v896, %v942
    %v965 = vadd.f32 %v897, %v942
    %v966 = vadd.f32 %v898, %v942
    %v967 = vadd.f32 %v899, %v942
    %v968 = vadd.f32 %v900, %v942
    %v969 = vadd.f32 %v901, %v942
    %v970 = vadd.f32 %v902, %v942
    %v971 = vadd.f32 %v903, %v942
    %v972 = vadd.f32 %v904, %v942
    %v973 = vadd.f32 %v905, %v942
    %v974 = vadd.f32 %v906, %v942
    %v975 = vadd.f32 %v907, %v942
    %v976 = vadd.f32 %v908, %v942
    %v977 = vadd.f32 %v909, %v942
    %v978 = vadd.f32 %v910, %v942
    %v979 = vadd.f32 %v911, %v942
    %v980 = vadd.f32 %v912, %v942
    %v981 = vadd.f32 %v913, %v942
    %v982 = vadd.f32 %v914, %v942
    %v983 = vadd.f32 %v915, %v942
    %v984 = vadd.f32 %v916, %v942
    %v985 = vadd.f32 %v917, %v942
    %v986 = vadd.f32 %v918, %v942
    %v987 = vadd.f32 %v919, %v942
    %v988 = vadd.f32 %v920, %v942
    %v989 = vadd.f32 %v921, %v942
    %v990 = vadd.f32 %v922, %v942
    %v991 = vadd.f32 %v923, %v942
    %v992 = vadd.f32 %v924, %v942
    %v993 = vadd.f32 %v925, %v942
    %v994 = vadd.f32 %v926, %v942
    %v995 = vadd.f32 %v927, %v942
    %v996 = vadd.f32 %v928, %v942
    %v997 = vadd.f32 %v929, %v942
    %v998 = vadd.f32 %v930, %v942
    %v999 = vadd.f32 %v931, %v942
    %v1000 = vadd.f32 %v932, %v942
    %v1001 = vadd.f32 %v933, %v942
    %v1002 = vadd.f32 %v934, %v942
    %v1003 = vadd.f32 %v935, %v942
    %v1004 = vadd.f32 %v936, %v942
    %v1005 = vadd.f32 %v937, %v942
    %v1006 = vadd.f32 %v938, %v942
    %v1007 = vadd.f32 %v939, %v942
    %v1008 = vtanh.pop %v944
    %v1009 = vtanh.pop %v945
    %v1010 = vtanh.pop %v946
    %v1011 = vtanh.pop %v947
    %v1012 = vtanh.pop %v948
    %v1013 = vtanh.pop %v949
    %v1014 = vtanh.pop %v950
    %v1015 = vtanh.pop %v951
    %v1016 = vtanh.pop %v952
    %v1017 = vtanh.pop %v953
    %v1018 = vtanh.pop %v954
    %v1019 = vtanh.pop %v955
    %v1020 = vtanh.pop %v956
    %v1021 = vtanh.pop %v957
    %v1022 = vtanh.pop %v958
    %v1023 = vtanh.pop %v959
    %v1024 = vtanh.pop %v960
    %v1025 = vtanh.pop %v961
    %v1026 = vtanh.pop %v962
    %v1027 = vtanh.pop %v963
    %v1028 = vtanh.pop %v964
    %v1029 = vtanh.pop %v965
    %v1030 = vtanh.pop %v966
    %v1031 = vtanh.pop %v967
    %v1032 = vtanh.pop %v968
    %v1033 = vtanh.pop %v969
    %v1034 = vtanh.pop %v970
    %v1035 = vtanh.pop %v971
    %v1036 = vtanh.pop %v972
    %v1037 = vtanh.pop %v973
    %v1038 = vtanh.pop %v974
    %v1039 = vtanh.pop %v975
    %v1040 = vtanh.pop %v976
    %v1041 = vtanh.pop %v977
    %v1042 = vtanh.pop %v978
    %v1043 = vtanh.pop %v979
    %v1044 = vtanh.pop %v980
    %v1045 = vtanh.pop %v981
    %v1046 = vtanh.pop %v982
    %v1047 = vtanh.pop %v983
    %v1048 = vtanh.pop %v984
    %v1049 = vtanh.pop %v985
    %v1050 = vtanh.pop %v986
    %v1051 = vtanh.pop %v987
    %v1052 = vtanh.pop %v988
    %v1053 = vtanh.pop %v989
    %v1054 = vtanh.pop %v990
    %v1055 = vtanh.pop %v991
    %v1056 = vtanh.pop %v992
    %v1057 = vtanh.pop %v993
    %v1058 = vtanh.pop %v994
    %v1059 = vtanh.pop %v995
    %v1060 = vtanh.pop %v996
    %v1061 = vtanh.pop %v997
    %v1062 = vtanh.pop %v998
    %v1063 = vtanh.pop %v999
    %v1064 = vtanh.pop %v1000
    %v1065 = vtanh.pop %v1001
    %v1066 = vtanh.pop %v1002
    %v1067 = vtanh.pop %v1003
    %v1068 = vtanh.pop %v1004
    %v1069 = vtanh.pop %v1005
    %v1070 = vtanh.pop %v1006
    %v1071 = vtanh.pop %v1007
    %v1072 = vmul.f32 %v1008, 0.5
    %v1073 = vmul.f32 %v1009, 0.5
    %v1074 = vmul.f32 %v1010, 0.5
    %v1075 = vmul.f32 %v1011, 0.5
    %v1076 = vmul.f32 %v1012, 0.5
    %v1077 = vmul.f32 %v1013, 0.5
    %v1078 = vmul.f32 %v1014, 0.5
    %v1079 = vmul.f32 %v1015, 0.5
    %v1080 = vmul.f32 %v1016, 0.5
    %v1081 = vmul.f32 %v1017, 0.5
    %v1082 = vmul.f32 %v1018, 0.5
    %v1083 = vmul.f32 %v1019, 0.5
    %v1084 = vmul.f32 %v1020, 0.5
    %v1085 = vmul.f32 %v1021, 0.5
    %v1086 = vmul.f32 %v1022, 0.5
    %v1087 = vmul.f32 %v1023, 0.5
    %v1088 = vmul.f32 %v1024, 0.5
    %v1089 = vmul.f32 %v1025, 0.5
    %v1090 = vmul.f32 %v1026, 0.5
    %v1091 = vmul.f32 %v1027, 0.5
    %v1092 = vmul.f32 %v1028, 0.5
    %v1093 = vmul.f32 %v1029, 0.5
    %v1094 = vmul.f32 %v1030, 0.5
    %v1095 = vmul.f32 %v1031, 0.5
    %v1096 = vmul.f32 %v1032, 0.5
    %v1097 = vmul.f32 %v1033, 0.5
    %v1098 = vmul.f32 %v1034, 0.5
    %v1099 = vmul.f32 %v1035, 0.5
    %v1100 = vmul.f32 %v1036, 0.5
    %v1101 = vmul.f32 %v1037, 0.5
    %v1102 = vmul.f32 %v1038, 0.5
    %v1103 = vmul.f32 %v1039, 0.5
    %v1104 = vmul.f32 %v1040, 0.5
    %v1105 = vmul.f32 %v1041, 0.5
    %v1106 = vmul.f32 %v1042, 0.5
    %v1107 = vmul.f32 %v1043, 0.5
    %v1108 = vmul.f32 %v1044, 0.5
    %v1109 = vmul.f32 %v1045, 0.5
    %v1110 = vmul.f32 %v1046, 0.5
    %v1111 = vmul.f32 %v1047, 0.5
    %v1112 = vmul.f32 %v1048, 0.5
    %v1113 = vmul.f32 %v1049, 0.5
    %v1114 = vmul.f32 %v1050, 0.5
    %v1115 = vmul.f32 %v1051, 0.5
    %v1116 = vmul.f32 %v1052, 0.5
    %v1117 = vmul.f32 %v1053, 0.5
    %v1118 = vmul.f32 %v1054, 0.5
    %v1119 = vmul.f32 %v1055, 0.5
    %v1120 = vmul.f32 %v1056, 0.5
    %v1121 = vmul.f32 %v1057, 0.5
    %v1122 = vmul.f32 %v1058, 0.5
    %v1123 = vmul.f32 %v1059, 0.5
    %v1124 = vmul.f32 %v1060, 0.5
    %v1125 = vmul.f32 %v1061, 0.5
    %v1126 = vmul.f32 %v1062, 0.5
    %v1127 = vmul.f32 %v1063, 0.5
    %v1128 = vmul.f32 %v1064, 0.5
    %v1129 = vmul.f32 %v1065, 0.5
    %v1130 = vmul.f32 %v1066, 0.5
    %v1131 = vmul.f32 %v1067, 0.5
    %v1132 = vmul.f32 %v1068, 0.5
    %v1133 = vmul.f32 %v1069, 0.5
    %v1134 = vmul.f32 %v1070, 0.5
    %v1135 = vmul.f32 %v1071, 0.5
    %v1136 = vadd.f32 %v1072, 0.5
    %v1137 = vadd.f32 %v1073, 0.5
    %v1138 = vadd.f32 %v1074, 0.5
    %v1139 = vadd.f32 %v1075, 0.5
    %v1140 = vadd.f32 %v1076, 0.5
    %v1141 = vadd.f32 %v1077, 0.5
    %v1142 = vadd.f32 %v1078, 0.5
    %v1143 = vadd.f32 %v1079, 0.5
    %v1144 = vadd.f32 %v1080, 0.5
    %v1145 = vadd.f32 %v1081, 0.5
    %v1146 = vadd.f32 %v1082, 0.5
    %v1147 = vadd.f32 %v1083, 0.5
    %v1148 = vadd.f32 %v1084, 0.5
    %v1149 = vadd.f32 %v1085, 0.5
    %v1150 = vadd.f32 %v1086, 0.5
    %v1151 = vadd.f32 %v1087, 0.5
    %v1152 = vadd.f32 %v1088, 0.5
    %v1153 = vadd.f32 %v1089, 0.5
    %v1154 = vadd.f32 %v1090, 0.5
    %v1155 = vadd.f32 %v1091, 0.5
    %v1156 = vadd.f32 %v1092, 0.5
    %v1157 = vadd.f32 %v1093, 0.5
    %v1158 = vadd.f32 %v1094, 0.5
    %v1159 = vadd.f32 %v1095, 0.5
    %v1160 = vadd.f32 %v1096, 0.5
    %v1161 = vadd.f32 %v1097, 0.5
    %v1162 = vadd.f32 %v1098, 0.5
    %v1163 = vadd.f32 %v1099, 0.5
    %v1164 = vadd.f32 %v1100, 0.5
    %v1165 = vadd.f32 %v1101, 0.5
    %v1166 = vadd.f32 %v1102, 0.5
    %v1167 = vadd.f32 %v1103, 0.5
    %v1168 = vadd.f32 %v1104, 0.5
    %v1169 = vadd.f32 %v1105, 0.5
    %v1170 = vadd.f32 %v1106, 0.5
    %v1171 = vadd.f32 %v1107, 0.5
    %v1172 = vadd.f32 %v1108, 0.5
    %v1173 = vadd.f32 %v1109, 0.5
    %v1174 = vadd.f32 %v1110, 0.5
    %v1175 = vadd.f32 %v1111, 0.5
    %v1176 = vadd.f32 %v1112, 0.5
    %v1177 = vadd.f32 %v1113, 0.5
    %v1178 = vadd.f32 %v1114, 0.5
    %v1179 = vadd.f32 %v1115, 0.5
    %v1180 = vadd.f32 %v1116, 0.5
    %v1181 = vadd.f32 %v1117, 0.5
    %v1182 = vadd.f32 %v1118, 0.5
    %v1183 = vadd.f32 %v1119, 0.5
    %v1184 = vadd.f32 %v1120, 0.5
    %v1185 = vadd.f32 %v1121, 0.5
    %v1186 = vadd.f32 %v1122, 0.5
    %v1187 = vadd.f32 %v1123, 0.5
    %v1188 = vadd.f32 %v1124, 0.5
    %v1189 = vadd.f32 %v1125, 0.5
    %v1190 = vadd.f32 %v1126, 0.5
    %v1191 = vadd.f32 %v1127, 0.5
    %v1192 = vadd.f32 %v1128, 0.5
    %v1193 = vadd.f32 %v1129, 0.5
    %v1194 = vadd.f32 %v1130, 0.5
    %v1195 = vadd.f32 %v1131, 0.5
    %v1196 = vadd.f32 %v1132, 0.5
    %v1197 = vadd.f32 %v1133, 0.5
    %v1198 = vadd.f32 %v1134, 0.5
    %v1199 = vadd.f32 %v1135, 0.5
    %1200 = vst [vmem:[%s5] sm:$0xff] %v1136
    %1201 = vst [vmem:[%s5 + $0x8] sm:$0xff] %v1137
    %1202 = vst [vmem:[%s5 + $0x10] sm:$0xff] %v1138
    %1203 = vst [vmem:[%s5 + $0x18] sm:$0xff] %v1139
    %1204 = vst [vmem:[%s5 + $0x20] sm:$0xff] %v1140
    %1205 = vst [vmem:[%s5 + $0x28] sm:$0xff] %v1141
    %1206 = vst [vmem:[%s5 + $0x30] sm:$0xff] %v1142
    %1207 = vst [vmem:[%s5 + $0x38] sm:$0xff] %v1143
    %1208 = vst [vmem:[%s5 + $0x40] sm:$0xff] %v1144
    %1209 = vst [vmem:[%s5 + $0x48] sm:$0xff] %v1145
    %1210 = vst [vmem:[%s5 + $0x50] sm:$0xff] %v1146
    %1211 = vst [vmem:[%s5 + $0x58] sm:$0xff] %v1147
    %1212 = vst [vmem:[%s5 + $0x60] sm:$0xff] %v1148
    %1213 = vst [vmem:[%s5 + $0x68] sm:$0xff] %v1149
    %1214 = vst [vmem:[%s5 + $0x70] sm:$0xff] %v1150
    %1215 = vst [vmem:[%s5 + $0x78] sm:$0xff] %v1151
    %1216 = vst [vmem:[%s5 + $0x80] sm:$0xff] %v1152
    %1217 = vst [vmem:[%s5 + $0x88] sm:$0xff] %v1153
    %1218 = vst [vmem:[%s5 + $0x90] sm:$0xff] %v1154
    %1219 = vst [vmem:[%s5 + $0x98] sm:$0xff] %v1155
    %1220 = vst [vmem:[%s5 + $0xa0] sm:$0xff] %v1156
    %1221 = vst [vmem:[%s5 + $0xa8] sm:$0xff] %v1157
    %1222 = vst [vmem:[%s5 + $0xb0] sm:$0xff] %v1158
    %1223 = vst [vmem:[%s5 + $0xb8] sm:$0xff] %v1159
    %1224 = vst [vmem:[%s5 + $0xc0] sm:$0xff] %v1160
    %1225 = vst [vmem:[%s5 + $0xc8] sm:$0xff] %v1161
    %1226 = vst [vmem:[%s5 + $0xd0] sm:$0xff] %v1162
    %1227 = vst [vmem:[%s5 + $0xd8] sm:$0xff] %v1163
    %1228 = vst [vmem:[%s5 + $0xe0] sm:$0xff] %v1164
    %1229 = vst [vmem:[%s5 + $0xe8] sm:$0xff] %v1165
    %1230 = vst [vmem:[%s5 + $0xf0] sm:$0xff] %v1166
    %1231 = vst [vmem:[%s5 + $0xf8] sm:$0xff] %v1167
    %1232 = vst [vmem:[%s5 + $0x100] sm:$0xff] %v1168
    %1233 = vst [vmem:[%s5 + $0x108] sm:$0xff] %v1169
    %1234 = vst [vmem:[%s5 + $0x110] sm:$0xff] %v1170
    %1235 = vst [vmem:[%s5 + $0x118] sm:$0xff] %v1171
    %1236 = vst [vmem:[%s5 + $0x120] sm:$0xff] %v1172
    %1237 = vst [vmem:[%s5 + $0x128] sm:$0xff] %v1173
    %1238 = vst [vmem:[%s5 + $0x130] sm:$0xff] %v1174
    %1239 = vst [vmem:[%s5 + $0x138] sm:$0xff] %v1175
    %1240 = vst [vmem:[%s5 + $0x140] sm:$0xff] %v1176
    %1241 = vst [vmem:[%s5 + $0x148] sm:$0xff] %v1177
    %1242 = vst [vmem:[%s5 + $0x150] sm:$0xff] %v1178
    %1243 = vst [vmem:[%s5 + $0x158] sm:$0xff] %v1179
    %1244 = vst [vmem:[%s5 + $0x160] sm:$0xff] %v1180
    %1245 = vst [vmem:[%s5 + $0x168] sm:$0xff] %v1181
    %1246 = vst [vmem:[%s5 + $0x170] sm:$0xff] %v1182
    %1247 = vst [vmem:[%s5 + $0x178] sm:$0xff] %v1183
    %1248 = vst [vmem:[%s5 + $0x180] sm:$0xff] %v1184
    %1249 = vst [vmem:[%s5 + $0x188] sm:$0xff] %v1185
    %1250 = vst [vmem:[%s5 + $0x190] sm:$0xff] %v1186
    %1251 = vst [vmem:[%s5 + $0x198] sm:$0xff] %v1187
    %1252 = vst [vmem:[%s5 + $0x1a0] sm:$0xff] %v1188
    %1253 = vst [vmem:[%s5 + $0x1a8] sm:$0xff] %v1189
    %1254 = vst [vmem:[%s5 + $0x1b0] sm:$0xff] %v1190
    %1255 = vst [vmem:[%s5 + $0x1b8] sm:$0xff] %v1191
    %1256 = vst [vmem:[%s5 + $0x1c0] sm:$0xff] %v1192
    %1257 = vst [vmem:[%s5 + $0x1c8] sm:$0xff] %v1193
    %1258 = vst [vmem:[%s5 + $0x1d0] sm:$0xff] %v1194
    %1259 = vst [vmem:[%s5 + $0x1d8] sm:$0xff] %v1195
    %1260 = vst [vmem:[%s5 + $0x1e0] sm:$0xff] %v1196
    %1261 = vst [vmem:[%s5 + $0x1e8] sm:$0xff] %v1197
    %1262 = vst [vmem:[%s5 + $0x1f0] sm:$0xff] %v1198
    %1263 = vst [vmem:[%s5 + $0x1f8] sm:$0xff] %v1199
  $region29: #{g_sndcgan_forward.19} parent=0 // pred_fallthru
    _
  // Predicated region
  $region30: #{g_sndcgan_forward.19} parent=0 // pred_check
    _
  $region31: #{g_sndcgan_forward.19} parent=0 // pred_check_branch
    %1265 = sbr.rel (0) target = $region33
  $region32: #{g_sndcgan_forward.19} parent=0 // pred_region
    _
  $region33: #{g_sndcgan_forward.19} parent=0 // pred_fallthru
    _
  // Predicated region
  $region34: #{g_sndcgan_forward.19} parent=0 // pred_check
    _
  $region35: #{g_sndcgan_forward.19} parent=0 // pred_check_branch
    %1267 = sbr.rel (0) target = $region37
  $region36: #{g_sndcgan_forward.19} parent=0 // pred_region
    _
  $region37: #{g_sndcgan_forward.19} parent=0 // pred_fallthru
    _

</llo_original>
